<compile_context>
chip_gen: v7x
topology: tpu7x:2x2x1
jax: 0.10.0
libtpu: 0.0.40
codegen_flags: <defaults>
</compile_context>

<pallas_src>
import functools

import numpy as np
import jax
import jax.numpy as jnp
from jax import lax
from jax.experimental import pallas as pl
from jax.experimental.pallas import tpu as pltpu

EPS = 1e-5


def dgcnn_kernel(
    x_ref,                        # (K, 4, TG)   bf16  one point tile, all neighbors
    w1, b1,                       # (32, 4)    bf16, (32, 1)   f32
    w2, b2,                       # (64, 32)   bf16, (64, 1)   f32
    w3, b3,                       # (128, 64)  bf16, (128, 1)  f32
    w4, b4,                       # (64, 128)  bf16, (64, 1)   f32
    w5, b5,                       # (emb, 288) bf16, (emb, 1)  f32
    o_ref,                        # (emb, TG)  f32
    *, act_dtype,
):
    K = x_ref.shape[0]
    TG = x_ref.shape[2]
    c1, c2, c3, c4 = w1.shape[0], w2.shape[0], w3.shape[0], w4.shape[0]

    # Hoist bias reads out of the unrolled K loop (JAX does not CSE them).
    b1v, b2v, b3v, b4v = b1[...], b2[...], b3[...], b4[...]

    def conv_bn_relu(h, w_ref, b_val):
        # (c_out, c_in) @ (c_in, TG) -> (c_out, TG); bf16 operands, f32 acc.
        y = jnp.dot(w_ref[...], h.astype(jnp.bfloat16),
                    preferred_element_type=jnp.float32)
        # BN shift + ReLU from the f32 accumulator, then down to act_dtype
        # (bf16 on v6e/v7x, f32 on v5e).
        return jnp.maximum(y + b_val, 0.0).astype(act_dtype)

    def body(k, carry):
        m1, m2, m3, m4 = carry
        h1 = conv_bn_relu(x_ref[k], w1, b1v)     # (32, TG)
        h2 = conv_bn_relu(h1, w2, b2v)           # (64, TG)
        h3 = conv_bn_relu(h2, w3, b3v)           # (128, TG)
        h4 = conv_bn_relu(h3, w4, b4v)           # (64, TG)
        return (jnp.maximum(m1, h1), jnp.maximum(m2, h2),
                jnp.maximum(m3, h3), jnp.maximum(m4, h4))

    # Post-ReLU values are >= 0, so a 0-init gives the same max as -inf.
    zeros = lambda c: jnp.zeros((c, TG), act_dtype)
    m1, m2, m3, m4 = lax.fori_loop(
        0, K, body, (zeros(c1), zeros(c2), zeros(c3), zeros(c4)), unroll=True)

    # concat along the (sublane) channel axis -> single 288-deep contraction.
    feat = jnp.concatenate([m1, m2, m3, m4], axis=0)          # (288, TG)
    y = jnp.dot(w5[...], feat.astype(jnp.bfloat16),
                preferred_element_type=jnp.float32)
    o_ref[...] = jnp.maximum(y + b5[...], 0.0)


def _fold_bn(w_oc_ic, gamma, beta, mean, var, dtype=jnp.bfloat16):
    """Fold eval-mode BN into (W * scale, shift): y = Wf @ x + shift (f32 fold)."""
    scale = gamma / jnp.sqrt(var + EPS)
    shift = beta - mean * scale
    w_fold = (w_oc_ic * scale[:, None]).astype(dtype)          # (Cout, Cin)
    return w_fold, shift[:, None].astype(jnp.float32)          # (Cout, 1)


def _default_act_dtype():
    """bf16 activations on chips with a bf16 VPU (v6e/v7x); f32 on v5e and older."""
    try:
        kind = jax.devices()[0].device_kind.lower()
    except Exception:
        return jnp.float32
    for old in ("v2", "v3", "v4", "v5"):
        if old in kind:
            return jnp.float32
    return jnp.bfloat16


def _choose_tiling(npts, tile_pts):
    """Pick a lane-aligned point tile; pad npts to a whole number of tiles."""
    tile = max(128, (min(tile_pts, npts) // 128) * 128)
    padded = -(-npts // tile) * tile
    grid = padded // tile
    # v7x has two TensorCores per chip: prefer >= 2 grid steps so the
    # "parallel" axis splits across both cores (only when it adds no padding).
    if grid == 1 and tile > 128 and npts > 128:
        half = ((tile // 2 + 127) // 128) * 128
        if -(-npts // half) * half == padded:
            tile = half
            grid = padded // tile
    return tile, padded, grid


def dgcnn_forward(x, raw_params, *, tile_pts=2048, act_dtype=None):
    """x: (B, 4, N, K) float32 (PyTorch NCHW). Returns (B, emb_dims, N)."""
    B, C, N, K = x.shape
    npts = B * N
    if act_dtype is None:
        act_dtype = _default_act_dtype()

    # Points-on-lanes layout: (K, C, B*N); input cast to bf16 in the wrapper.
    xk = jnp.transpose(x, (3, 1, 0, 2)).reshape(K, C, npts).astype(jnp.bfloat16)

    tile, padded, grid = _choose_tiling(npts, tile_pts)
    if padded != npts:
        xk = jnp.pad(xk, ((0, 0), (0, 0), (0, padded - npts)))

    folded = [_fold_bn(*p) for p in raw_params]
    params = [t for pair in folded for t in pair]              # w1,b1,...,w5,b5
    emb = folded[4][0].shape[0]

    # Constant index_map -> each weight/bias is DMA'd once and stays resident.
    param_specs = [pl.BlockSpec(p.shape, lambda i: (0, 0)) for p in params]

    kernel = functools.partial(dgcnn_kernel, act_dtype=act_dtype)

    out = pl.pallas_call(
        kernel,
        out_shape=jax.ShapeDtypeStruct((emb, padded), jnp.float32),
        grid_spec=pltpu.PrefetchScalarGridSpec(
            num_scalar_prefetch=0,
            grid=(grid,),
            in_specs=[pl.BlockSpec((K, C, tile), lambda i: (0, 0, i))]
                     + param_specs,
            out_specs=pl.BlockSpec((emb, tile), lambda i: (0, i)),
        ),
        compiler_params=pltpu.CompilerParams(
            dimension_semantics=("parallel",),
            vmem_limit_bytes=32 * 1024 * 1024),
    )(xk, *params)

    out = out[:, :npts]                                        # drop pad tail
    # back to PyTorch output layout: (B, emb_dims, num_points)
    return out.reshape(emb, B, N).transpose(1, 0, 2)


def dgcnn_ref(x, raw_params):
    """Pure-JAX f32 NCHW reference (eval-mode BN) mirroring the torch forward."""
    def cbr(h, p):
        w, gamma, beta, mean, var = p
        y = jnp.einsum('oc,bcnk->bonk', w, h)
        sc = (gamma / jnp.sqrt(var + EPS))[None, :, None, None]
        sh = (beta - mean * gamma / jnp.sqrt(var + EPS))[None, :, None, None]
        return jnp.maximum(y * sc + sh, 0.0)

    h = cbr(x, raw_params[0]); x1 = h.max(axis=-1, keepdims=True)
    h = cbr(h, raw_params[1]); x2 = h.max(axis=-1, keepdims=True)
    h = cbr(h, raw_params[2]); x3 = h.max(axis=-1, keepdims=True)
    h = cbr(h, raw_params[3]); x4 = h.max(axis=-1, keepdims=True)
    feat = jnp.concatenate([x1, x2, x3, x4], axis=1)           # (B, 288, N, 1)
    out = cbr(feat, raw_params[4])                             # (B, emb, N, 1)
    return out.reshape(x.shape[0], -1, x.shape[2])


def init_params(key, emb_dims=512):
    """Deterministic synthetic parameters (conv weight (Cout,Cin) + BN stats)."""
    layer_dims = [(4, 32), (32, 64), (64, 128), (128, 64), (288, emb_dims)]
    params = []
    for cin, cout in layer_dims:
        key, kw, kg, kb, km, kv = jax.random.split(key, 6)
        w = jax.random.normal(kw, (cout, cin), jnp.float32) / jnp.sqrt(cin)
        gamma = 1.0 + 0.1 * jax.random.normal(kg, (cout,), jnp.float32)
        beta = 0.1 * jax.random.normal(kb, (cout,), jnp.float32)
        mean = 0.1 * jax.random.normal(km, (cout,), jnp.float32)
        var = jnp.abs(jax.random.normal(kv, (cout,), jnp.float32)) + 0.5
        params.append((w, gamma, beta, mean, var))
    return params


if __name__ == "__main__":
    key = jax.random.PRNGKey(0)
    kx, kp = jax.random.split(key)

    B, C, N, K = 2, 4, 128, 8          # batch, in-channels, points, neighbors
    x = jax.random.normal(kx, (B, C, N, K), jnp.float32)
    raw_params = init_params(kp, emb_dims=512)

    # tile_pts=128 -> 2 point tiles, exercises the tiled output mapping.
    out = dgcnn_forward(x, raw_params, tile_pts=128)
    out = jax.block_until_ready(out)

    ref = dgcnn_ref(x, raw_params)
    assert out.shape == (B, 512, N), out.shape
    # bf16 matmul operands / activations (f32 accumulation) => loosened tol.
    np.testing.assert_allclose(np.asarray(out), np.asarray(ref),
                               rtol=5e-2, atol=5e-2)
    print("KERNEL_OK")
</pallas_src>

<mosaic_0001>
module attributes {stable_mosaic.version = 11 : i64} {
  func.func @dgcnn_kernel(%arg0: i32, %arg1: memref<8x4x128xbf16, #tpu.memory_space<vmem>>, %arg2: memref<32x4xbf16, #tpu.memory_space<vmem>>, %arg3: memref<32x1xf32, #tpu.memory_space<vmem>>, %arg4: memref<64x32xbf16, #tpu.memory_space<vmem>>, %arg5: memref<64x1xf32, #tpu.memory_space<vmem>>, %arg6: memref<128x64xbf16, #tpu.memory_space<vmem>>, %arg7: memref<128x1xf32, #tpu.memory_space<vmem>>, %arg8: memref<64x128xbf16, #tpu.memory_space<vmem>>, %arg9: memref<64x1xf32, #tpu.memory_space<vmem>>, %arg10: memref<512x288xbf16, #tpu.memory_space<vmem>>, %arg11: memref<512x1xf32, #tpu.memory_space<vmem>>, %arg12: memref<512x128xf32, #tpu.memory_space<vmem>>) attributes {dimension_semantics = [#tpu.dimension_semantics<parallel>], iteration_bounds = array<i64: 2>, scalar_prefetch = 0 : i64, scratch_operands = 0 : i64, tpu.core_type = #tpu.core_type<tc>, window_params = [{transform_indices = @transform_0, window_bounds = array<i64: 8, 4, 128>}, {pipeline_mode = #tpu.pipeline_mode<synchronous>, transform_indices = @transform_1, window_bounds = array<i64: 32, 4>}, {pipeline_mode = #tpu.pipeline_mode<synchronous>, transform_indices = @transform_2, window_bounds = array<i64: 32, 1>}, {pipeline_mode = #tpu.pipeline_mode<synchronous>, transform_indices = @transform_3, window_bounds = array<i64: 64, 32>}, {pipeline_mode = #tpu.pipeline_mode<synchronous>, transform_indices = @transform_4, window_bounds = array<i64: 64, 1>}, {pipeline_mode = #tpu.pipeline_mode<synchronous>, transform_indices = @transform_5, window_bounds = array<i64: 128, 64>}, {pipeline_mode = #tpu.pipeline_mode<synchronous>, transform_indices = @transform_6, window_bounds = array<i64: 128, 1>}, {pipeline_mode = #tpu.pipeline_mode<synchronous>, transform_indices = @transform_7, window_bounds = array<i64: 64, 128>}, {pipeline_mode = #tpu.pipeline_mode<synchronous>, transform_indices = @transform_8, window_bounds = array<i64: 64, 1>}, {pipeline_mode = #tpu.pipeline_mode<synchronous>, transform_indices = @transform_9, window_bounds = array<i64: 512, 288>}, {pipeline_mode = #tpu.pipeline_mode<synchronous>, transform_indices = @transform_10, window_bounds = array<i64: 512, 1>}, {transform_indices = @transform_11, window_bounds = array<i64: 512, 128>}]} {
    %c0 = arith.constant 0 : index
    %c0_0 = arith.constant 0 : index
    %0 = vector.load %arg3[%c0, %c0_0] : memref<32x1xf32, #tpu.memory_space<vmem>>, vector<32x1xf32>
    %c0_1 = arith.constant 0 : index
    %c0_2 = arith.constant 0 : index
    %1 = vector.load %arg5[%c0_1, %c0_2] : memref<64x1xf32, #tpu.memory_space<vmem>>, vector<64x1xf32>
    %c0_3 = arith.constant 0 : index
    %c0_4 = arith.constant 0 : index
    %2 = vector.load %arg7[%c0_3, %c0_4] : memref<128x1xf32, #tpu.memory_space<vmem>>, vector<128x1xf32>
    %c0_5 = arith.constant 0 : index
    %c0_6 = arith.constant 0 : index
    %3 = vector.load %arg9[%c0_5, %c0_6] : memref<64x1xf32, #tpu.memory_space<vmem>>, vector<64x1xf32>
    %cst = arith.constant 0.000000e+00 : bf16
    %4 = vector.broadcast %cst : bf16 to vector<32x128xbf16>
    %cst_7 = arith.constant 0.000000e+00 : bf16
    %5 = vector.broadcast %cst_7 : bf16 to vector<64x128xbf16>
    %cst_8 = arith.constant 0.000000e+00 : bf16
    %6 = vector.broadcast %cst_8 : bf16 to vector<128x128xbf16>
    %cst_9 = arith.constant 0.000000e+00 : bf16
    %7 = vector.broadcast %cst_9 : bf16 to vector<64x128xbf16>
    %c0_i32 = arith.constant 0 : i32
    %8 = arith.index_cast %c0_i32 : i32 to index
    %c0_10 = arith.constant 0 : index
    %c0_11 = arith.constant 0 : index
    %9 = vector.load %arg1[%8, %c0_10, %c0_11] : memref<8x4x128xbf16, #tpu.memory_space<vmem>>, vector<1x4x128xbf16>
    %10 = vector.shape_cast %9 : vector<1x4x128xbf16> to vector<4x128xbf16>
    %c0_12 = arith.constant 0 : index
    %c0_13 = arith.constant 0 : index
    %11 = vector.load %arg2[%c0_12, %c0_13] : memref<32x4xbf16, #tpu.memory_space<vmem>>, vector<32x4xbf16>
    %cst_14 = arith.constant dense<0.000000e+00> : vector<32x128xf32>
    %12 = tpu.matmul %11, %10, %cst_14 {dimension_numbers = #tpu.dot_dimension_numbers<[1], [0], [0], [1], [0, 0, 1, 1], [], []>} : vector<32x4xbf16>, vector<4x128xbf16>, vector<32x128xf32> -> vector<32x128xf32>
    %13 = vector.broadcast %0 : vector<32x1xf32> to vector<32x128xf32>
    %14 = arith.addf %12, %13 : vector<32x128xf32>
    %cst_15 = arith.constant 0.000000e+00 : f32
    %15 = vector.broadcast %cst_15 : f32 to vector<32x128xf32>
    %16 = arith.maximumf %14, %15 : vector<32x128xf32>
    %17 = arith.truncf %16 : vector<32x128xf32> to vector<32x128xbf16>
    %c0_16 = arith.constant 0 : index
    %c0_17 = arith.constant 0 : index
    %18 = vector.load %arg4[%c0_16, %c0_17] : memref<64x32xbf16, #tpu.memory_space<vmem>>, vector<64x32xbf16>
    %cst_18 = arith.constant dense<0.000000e+00> : vector<64x128xf32>
    %19 = tpu.matmul %18, %17, %cst_18 {dimension_numbers = #tpu.dot_dimension_numbers<[1], [0], [0], [1], [0, 0, 1, 1], [], []>} : vector<64x32xbf16>, vector<32x128xbf16>, vector<64x128xf32> -> vector<64x128xf32>
    %20 = vector.broadcast %1 : vector<64x1xf32> to vector<64x128xf32>
    %21 = arith.addf %19, %20 : vector<64x128xf32>
    %cst_19 = arith.constant 0.000000e+00 : f32
    %22 = vector.broadcast %cst_19 : f32 to vector<64x128xf32>
    %23 = arith.maximumf %21, %22 : vector<64x128xf32>
    %24 = arith.truncf %23 : vector<64x128xf32> to vector<64x128xbf16>
    %c0_20 = arith.constant 0 : index
    %c0_21 = arith.constant 0 : index
    %25 = vector.load %arg6[%c0_20, %c0_21] : memref<128x64xbf16, #tpu.memory_space<vmem>>, vector<128x64xbf16>
    %cst_22 = arith.constant dense<0.000000e+00> : vector<128x128xf32>
    %26 = tpu.matmul %25, %24, %cst_22 {dimension_numbers = #tpu.dot_dimension_numbers<[1], [0], [0], [1], [0, 0, 1, 1], [], []>} : vector<128x64xbf16>, vector<64x128xbf16>, vector<128x128xf32> -> vector<128x128xf32>
    %27 = vector.broadcast %2 : vector<128x1xf32> to vector<128x128xf32>
    %28 = arith.addf %26, %27 : vector<128x128xf32>
    %cst_23 = arith.constant 0.000000e+00 : f32
    %29 = vector.broadcast %cst_23 : f32 to vector<128x128xf32>
    %30 = arith.maximumf %28, %29 : vector<128x128xf32>
    %31 = arith.truncf %30 : vector<128x128xf32> to vector<128x128xbf16>
    %c0_24 = arith.constant 0 : index
    %c0_25 = arith.constant 0 : index
    %32 = vector.load %arg8[%c0_24, %c0_25] : memref<64x128xbf16, #tpu.memory_space<vmem>>, vector<64x128xbf16>
    %cst_26 = arith.constant dense<0.000000e+00> : vector<64x128xf32>
    %33 = tpu.matmul %32, %31, %cst_26 {dimension_numbers = #tpu.dot_dimension_numbers<[1], [0], [0], [1], [0, 0, 1, 1], [], []>} : vector<64x128xbf16>, vector<128x128xbf16>, vector<64x128xf32> -> vector<64x128xf32>
    %34 = vector.broadcast %3 : vector<64x1xf32> to vector<64x128xf32>
    %35 = arith.addf %33, %34 : vector<64x128xf32>
    %cst_27 = arith.constant 0.000000e+00 : f32
    %36 = vector.broadcast %cst_27 : f32 to vector<64x128xf32>
    %37 = arith.maximumf %35, %36 : vector<64x128xf32>
    %38 = arith.truncf %37 : vector<64x128xf32> to vector<64x128xbf16>
    %39 = arith.maximumf %4, %17 : vector<32x128xbf16>
    %40 = arith.maximumf %5, %24 : vector<64x128xbf16>
    %41 = arith.maximumf %6, %31 : vector<128x128xbf16>
    %42 = arith.maximumf %7, %38 : vector<64x128xbf16>
    %c1_i32 = arith.constant 1 : i32
    %43 = arith.index_cast %c1_i32 : i32 to index
    %c0_28 = arith.constant 0 : index
    %c0_29 = arith.constant 0 : index
    %44 = vector.load %arg1[%43, %c0_28, %c0_29] : memref<8x4x128xbf16, #tpu.memory_space<vmem>>, vector<1x4x128xbf16>
    %45 = vector.shape_cast %44 : vector<1x4x128xbf16> to vector<4x128xbf16>
    %c0_30 = arith.constant 0 : index
    %c0_31 = arith.constant 0 : index
    %46 = vector.load %arg2[%c0_30, %c0_31] : memref<32x4xbf16, #tpu.memory_space<vmem>>, vector<32x4xbf16>
    %cst_32 = arith.constant dense<0.000000e+00> : vector<32x128xf32>
    %47 = tpu.matmul %46, %45, %cst_32 {dimension_numbers = #tpu.dot_dimension_numbers<[1], [0], [0], [1], [0, 0, 1, 1], [], []>} : vector<32x4xbf16>, vector<4x128xbf16>, vector<32x128xf32> -> vector<32x128xf32>
    %48 = vector.broadcast %0 : vector<32x1xf32> to vector<32x128xf32>
    %49 = arith.addf %47, %48 : vector<32x128xf32>
    %cst_33 = arith.constant 0.000000e+00 : f32
    %50 = vector.broadcast %cst_33 : f32 to vector<32x128xf32>
    %51 = arith.maximumf %49, %50 : vector<32x128xf32>
    %52 = arith.truncf %51 : vector<32x128xf32> to vector<32x128xbf16>
    %c0_34 = arith.constant 0 : index
    %c0_35 = arith.constant 0 : index
    %53 = vector.load %arg4[%c0_34, %c0_35] : memref<64x32xbf16, #tpu.memory_space<vmem>>, vector<64x32xbf16>
    %cst_36 = arith.constant dense<0.000000e+00> : vector<64x128xf32>
    %54 = tpu.matmul %53, %52, %cst_36 {dimension_numbers = #tpu.dot_dimension_numbers<[1], [0], [0], [1], [0, 0, 1, 1], [], []>} : vector<64x32xbf16>, vector<32x128xbf16>, vector<64x128xf32> -> vector<64x128xf32>
    %55 = vector.broadcast %1 : vector<64x1xf32> to vector<64x128xf32>
    %56 = arith.addf %54, %55 : vector<64x128xf32>
    %cst_37 = arith.constant 0.000000e+00 : f32
    %57 = vector.broadcast %cst_37 : f32 to vector<64x128xf32>
    %58 = arith.maximumf %56, %57 : vector<64x128xf32>
    %59 = arith.truncf %58 : vector<64x128xf32> to vector<64x128xbf16>
    %c0_38 = arith.constant 0 : index
    %c0_39 = arith.constant 0 : index
    %60 = vector.load %arg6[%c0_38, %c0_39] : memref<128x64xbf16, #tpu.memory_space<vmem>>, vector<128x64xbf16>
    %cst_40 = arith.constant dense<0.000000e+00> : vector<128x128xf32>
    %61 = tpu.matmul %60, %59, %cst_40 {dimension_numbers = #tpu.dot_dimension_numbers<[1], [0], [0], [1], [0, 0, 1, 1], [], []>} : vector<128x64xbf16>, vector<64x128xbf16>, vector<128x128xf32> -> vector<128x128xf32>
    %62 = vector.broadcast %2 : vector<128x1xf32> to vector<128x128xf32>
    %63 = arith.addf %61, %62 : vector<128x128xf32>
    %cst_41 = arith.constant 0.000000e+00 : f32
    %64 = vector.broadcast %cst_41 : f32 to vector<128x128xf32>
    %65 = arith.maximumf %63, %64 : vector<128x128xf32>
    %66 = arith.truncf %65 : vector<128x128xf32> to vector<128x128xbf16>
    %c0_42 = arith.constant 0 : index
    %c0_43 = arith.constant 0 : index
    %67 = vector.load %arg8[%c0_42, %c0_43] : memref<64x128xbf16, #tpu.memory_space<vmem>>, vector<64x128xbf16>
    %cst_44 = arith.constant dense<0.000000e+00> : vector<64x128xf32>
    %68 = tpu.matmul %67, %66, %cst_44 {dimension_numbers = #tpu.dot_dimension_numbers<[1], [0], [0], [1], [0, 0, 1, 1], [], []>} : vector<64x128xbf16>, vector<128x128xbf16>, vector<64x128xf32> -> vector<64x128xf32>
    %69 = vector.broadcast %3 : vector<64x1xf32> to vector<64x128xf32>
    %70 = arith.addf %68, %69 : vector<64x128xf32>
    %cst_45 = arith.constant 0.000000e+00 : f32
    %71 = vector.broadcast %cst_45 : f32 to vector<64x128xf32>
    %72 = arith.maximumf %70, %71 : vector<64x128xf32>
    %73 = arith.truncf %72 : vector<64x128xf32> to vector<64x128xbf16>
    %74 = arith.maximumf %39, %52 : vector<32x128xbf16>
    %75 = arith.maximumf %40, %59 : vector<64x128xbf16>
    %76 = arith.maximumf %41, %66 : vector<128x128xbf16>
    %77 = arith.maximumf %42, %73 : vector<64x128xbf16>
    %c2_i32 = arith.constant 2 : i32
    %78 = arith.index_cast %c2_i32 : i32 to index
    %c0_46 = arith.constant 0 : index
    %c0_47 = arith.constant 0 : index
    %79 = vector.load %arg1[%78, %c0_46, %c0_47] : memref<8x4x128xbf16, #tpu.memory_space<vmem>>, vector<1x4x128xbf16>
    %80 = vector.shape_cast %79 : vector<1x4x128xbf16> to vector<4x128xbf16>
    %c0_48 = arith.constant 0 : index
    %c0_49 = arith.constant 0 : index
    %81 = vector.load %arg2[%c0_48, %c0_49] : memref<32x4xbf16, #tpu.memory_space<vmem>>, vector<32x4xbf16>
    %cst_50 = arith.constant dense<0.000000e+00> : vector<32x128xf32>
    %82 = tpu.matmul %81, %80, %cst_50 {dimension_numbers = #tpu.dot_dimension_numbers<[1], [0], [0], [1], [0, 0, 1, 1], [], []>} : vector<32x4xbf16>, vector<4x128xbf16>, vector<32x128xf32> -> vector<32x128xf32>
    %83 = vector.broadcast %0 : vector<32x1xf32> to vector<32x128xf32>
    %84 = arith.addf %82, %83 : vector<32x128xf32>
    %cst_51 = arith.constant 0.000000e+00 : f32
    %85 = vector.broadcast %cst_51 : f32 to vector<32x128xf32>
    %86 = arith.maximumf %84, %85 : vector<32x128xf32>
    %87 = arith.truncf %86 : vector<32x128xf32> to vector<32x128xbf16>
    %c0_52 = arith.constant 0 : index
    %c0_53 = arith.constant 0 : index
    %88 = vector.load %arg4[%c0_52, %c0_53] : memref<64x32xbf16, #tpu.memory_space<vmem>>, vector<64x32xbf16>
    %cst_54 = arith.constant dense<0.000000e+00> : vector<64x128xf32>
    %89 = tpu.matmul %88, %87, %cst_54 {dimension_numbers = #tpu.dot_dimension_numbers<[1], [0], [0], [1], [0, 0, 1, 1], [], []>} : vector<64x32xbf16>, vector<32x128xbf16>, vector<64x128xf32> -> vector<64x128xf32>
    %90 = vector.broadcast %1 : vector<64x1xf32> to vector<64x128xf32>
    %91 = arith.addf %89, %90 : vector<64x128xf32>
    %cst_55 = arith.constant 0.000000e+00 : f32
    %92 = vector.broadcast %cst_55 : f32 to vector<64x128xf32>
    %93 = arith.maximumf %91, %92 : vector<64x128xf32>
    %94 = arith.truncf %93 : vector<64x128xf32> to vector<64x128xbf16>
    %c0_56 = arith.constant 0 : index
    %c0_57 = arith.constant 0 : index
    %95 = vector.load %arg6[%c0_56, %c0_57] : memref<128x64xbf16, #tpu.memory_space<vmem>>, vector<128x64xbf16>
    %cst_58 = arith.constant dense<0.000000e+00> : vector<128x128xf32>
    %96 = tpu.matmul %95, %94, %cst_58 {dimension_numbers = #tpu.dot_dimension_numbers<[1], [0], [0], [1], [0, 0, 1, 1], [], []>} : vector<128x64xbf16>, vector<64x128xbf16>, vector<128x128xf32> -> vector<128x128xf32>
    %97 = vector.broadcast %2 : vector<128x1xf32> to vector<128x128xf32>
    %98 = arith.addf %96, %97 : vector<128x128xf32>
    %cst_59 = arith.constant 0.000000e+00 : f32
    %99 = vector.broadcast %cst_59 : f32 to vector<128x128xf32>
    %100 = arith.maximumf %98, %99 : vector<128x128xf32>
    %101 = arith.truncf %100 : vector<128x128xf32> to vector<128x128xbf16>
    %c0_60 = arith.constant 0 : index
    %c0_61 = arith.constant 0 : index
    %102 = vector.load %arg8[%c0_60, %c0_61] : memref<64x128xbf16, #tpu.memory_space<vmem>>, vector<64x128xbf16>
    %cst_62 = arith.constant dense<0.000000e+00> : vector<64x128xf32>
    %103 = tpu.matmul %102, %101, %cst_62 {dimension_numbers = #tpu.dot_dimension_numbers<[1], [0], [0], [1], [0, 0, 1, 1], [], []>} : vector<64x128xbf16>, vector<128x128xbf16>, vector<64x128xf32> -> vector<64x128xf32>
    %104 = vector.broadcast %3 : vector<64x1xf32> to vector<64x128xf32>
    %105 = arith.addf %103, %104 : vector<64x128xf32>
    %cst_63 = arith.constant 0.000000e+00 : f32
    %106 = vector.broadcast %cst_63 : f32 to vector<64x128xf32>
    %107 = arith.maximumf %105, %106 : vector<64x128xf32>
    %108 = arith.truncf %107 : vector<64x128xf32> to vector<64x128xbf16>
    %109 = arith.maximumf %74, %87 : vector<32x128xbf16>
    %110 = arith.maximumf %75, %94 : vector<64x128xbf16>
    %111 = arith.maximumf %76, %101 : vector<128x128xbf16>
    %112 = arith.maximumf %77, %108 : vector<64x128xbf16>
    %c3_i32 = arith.constant 3 : i32
    %113 = arith.index_cast %c3_i32 : i32 to index
    %c0_64 = arith.constant 0 : index
    %c0_65 = arith.constant 0 : index
    %114 = vector.load %arg1[%113, %c0_64, %c0_65] : memref<8x4x128xbf16, #tpu.memory_space<vmem>>, vector<1x4x128xbf16>
    %115 = vector.shape_cast %114 : vector<1x4x128xbf16> to vector<4x128xbf16>
    %c0_66 = arith.constant 0 : index
    %c0_67 = arith.constant 0 : index
    %116 = vector.load %arg2[%c0_66, %c0_67] : memref<32x4xbf16, #tpu.memory_space<vmem>>, vector<32x4xbf16>
    %cst_68 = arith.constant dense<0.000000e+00> : vector<32x128xf32>
    %117 = tpu.matmul %116, %115, %cst_68 {dimension_numbers = #tpu.dot_dimension_numbers<[1], [0], [0], [1], [0, 0, 1, 1], [], []>} : vector<32x4xbf16>, vector<4x128xbf16>, vector<32x128xf32> -> vector<32x128xf32>
    %118 = vector.broadcast %0 : vector<32x1xf32> to vector<32x128xf32>
    %119 = arith.addf %117, %118 : vector<32x128xf32>
    %cst_69 = arith.constant 0.000000e+00 : f32
    %120 = vector.broadcast %cst_69 : f32 to vector<32x128xf32>
    %121 = arith.maximumf %119, %120 : vector<32x128xf32>
    %122 = arith.truncf %121 : vector<32x128xf32> to vector<32x128xbf16>
    %c0_70 = arith.constant 0 : index
    %c0_71 = arith.constant 0 : index
    %123 = vector.load %arg4[%c0_70, %c0_71] : memref<64x32xbf16, #tpu.memory_space<vmem>>, vector<64x32xbf16>
    %cst_72 = arith.constant dense<0.000000e+00> : vector<64x128xf32>
    %124 = tpu.matmul %123, %122, %cst_72 {dimension_numbers = #tpu.dot_dimension_numbers<[1], [0], [0], [1], [0, 0, 1, 1], [], []>} : vector<64x32xbf16>, vector<32x128xbf16>, vector<64x128xf32> -> vector<64x128xf32>
    %125 = vector.broadcast %1 : vector<64x1xf32> to vector<64x128xf32>
    %126 = arith.addf %124, %125 : vector<64x128xf32>
    %cst_73 = arith.constant 0.000000e+00 : f32
    %127 = vector.broadcast %cst_73 : f32 to vector<64x128xf32>
    %128 = arith.maximumf %126, %127 : vector<64x128xf32>
    %129 = arith.truncf %128 : vector<64x128xf32> to vector<64x128xbf16>
    %c0_74 = arith.constant 0 : index
    %c0_75 = arith.constant 0 : index
    %130 = vector.load %arg6[%c0_74, %c0_75] : memref<128x64xbf16, #tpu.memory_space<vmem>>, vector<128x64xbf16>
    %cst_76 = arith.constant dense<0.000000e+00> : vector<128x128xf32>
    %131 = tpu.matmul %130, %129, %cst_76 {dimension_numbers = #tpu.dot_dimension_numbers<[1], [0], [0], [1], [0, 0, 1, 1], [], []>} : vector<128x64xbf16>, vector<64x128xbf16>, vector<128x128xf32> -> vector<128x128xf32>
    %132 = vector.broadcast %2 : vector<128x1xf32> to vector<128x128xf32>
    %133 = arith.addf %131, %132 : vector<128x128xf32>
    %cst_77 = arith.constant 0.000000e+00 : f32
    %134 = vector.broadcast %cst_77 : f32 to vector<128x128xf32>
    %135 = arith.maximumf %133, %134 : vector<128x128xf32>
    %136 = arith.truncf %135 : vector<128x128xf32> to vector<128x128xbf16>
    %c0_78 = arith.constant 0 : index
    %c0_79 = arith.constant 0 : index
    %137 = vector.load %arg8[%c0_78, %c0_79] : memref<64x128xbf16, #tpu.memory_space<vmem>>, vector<64x128xbf16>
    %cst_80 = arith.constant dense<0.000000e+00> : vector<64x128xf32>
    %138 = tpu.matmul %137, %136, %cst_80 {dimension_numbers = #tpu.dot_dimension_numbers<[1], [0], [0], [1], [0, 0, 1, 1], [], []>} : vector<64x128xbf16>, vector<128x128xbf16>, vector<64x128xf32> -> vector<64x128xf32>
    %139 = vector.broadcast %3 : vector<64x1xf32> to vector<64x128xf32>
    %140 = arith.addf %138, %139 : vector<64x128xf32>
    %cst_81 = arith.constant 0.000000e+00 : f32
    %141 = vector.broadcast %cst_81 : f32 to vector<64x128xf32>
    %142 = arith.maximumf %140, %141 : vector<64x128xf32>
    %143 = arith.truncf %142 : vector<64x128xf32> to vector<64x128xbf16>
    %144 = arith.maximumf %109, %122 : vector<32x128xbf16>
    %145 = arith.maximumf %110, %129 : vector<64x128xbf16>
    %146 = arith.maximumf %111, %136 : vector<128x128xbf16>
    %147 = arith.maximumf %112, %143 : vector<64x128xbf16>
    %c4_i32 = arith.constant 4 : i32
    %148 = arith.index_cast %c4_i32 : i32 to index
    %c0_82 = arith.constant 0 : index
    %c0_83 = arith.constant 0 : index
    %149 = vector.load %arg1[%148, %c0_82, %c0_83] : memref<8x4x128xbf16, #tpu.memory_space<vmem>>, vector<1x4x128xbf16>
    %150 = vector.shape_cast %149 : vector<1x4x128xbf16> to vector<4x128xbf16>
    %c0_84 = arith.constant 0 : index
    %c0_85 = arith.constant 0 : index
    %151 = vector.load %arg2[%c0_84, %c0_85] : memref<32x4xbf16, #tpu.memory_space<vmem>>, vector<32x4xbf16>
    %cst_86 = arith.constant dense<0.000000e+00> : vector<32x128xf32>
    %152 = tpu.matmul %151, %150, %cst_86 {dimension_numbers = #tpu.dot_dimension_numbers<[1], [0], [0], [1], [0, 0, 1, 1], [], []>} : vector<32x4xbf16>, vector<4x128xbf16>, vector<32x128xf32> -> vector<32x128xf32>
    %153 = vector.broadcast %0 : vector<32x1xf32> to vector<32x128xf32>
    %154 = arith.addf %152, %153 : vector<32x128xf32>
    %cst_87 = arith.constant 0.000000e+00 : f32
    %155 = vector.broadcast %cst_87 : f32 to vector<32x128xf32>
    %156 = arith.maximumf %154, %155 : vector<32x128xf32>
    %157 = arith.truncf %156 : vector<32x128xf32> to vector<32x128xbf16>
    %c0_88 = arith.constant 0 : index
    %c0_89 = arith.constant 0 : index
    %158 = vector.load %arg4[%c0_88, %c0_89] : memref<64x32xbf16, #tpu.memory_space<vmem>>, vector<64x32xbf16>
    %cst_90 = arith.constant dense<0.000000e+00> : vector<64x128xf32>
    %159 = tpu.matmul %158, %157, %cst_90 {dimension_numbers = #tpu.dot_dimension_numbers<[1], [0], [0], [1], [0, 0, 1, 1], [], []>} : vector<64x32xbf16>, vector<32x128xbf16>, vector<64x128xf32> -> vector<64x128xf32>
    %160 = vector.broadcast %1 : vector<64x1xf32> to vector<64x128xf32>
    %161 = arith.addf %159, %160 : vector<64x128xf32>
    %cst_91 = arith.constant 0.000000e+00 : f32
    %162 = vector.broadcast %cst_91 : f32 to vector<64x128xf32>
    %163 = arith.maximumf %161, %162 : vector<64x128xf32>
    %164 = arith.truncf %163 : vector<64x128xf32> to vector<64x128xbf16>
    %c0_92 = arith.constant 0 : index
    %c0_93 = arith.constant 0 : index
    %165 = vector.load %arg6[%c0_92, %c0_93] : memref<128x64xbf16, #tpu.memory_space<vmem>>, vector<128x64xbf16>
    %cst_94 = arith.constant dense<0.000000e+00> : vector<128x128xf32>
    %166 = tpu.matmul %165, %164, %cst_94 {dimension_numbers = #tpu.dot_dimension_numbers<[1], [0], [0], [1], [0, 0, 1, 1], [], []>} : vector<128x64xbf16>, vector<64x128xbf16>, vector<128x128xf32> -> vector<128x128xf32>
    %167 = vector.broadcast %2 : vector<128x1xf32> to vector<128x128xf32>
    %168 = arith.addf %166, %167 : vector<128x128xf32>
    %cst_95 = arith.constant 0.000000e+00 : f32
    %169 = vector.broadcast %cst_95 : f32 to vector<128x128xf32>
    %170 = arith.maximumf %168, %169 : vector<128x128xf32>
    %171 = arith.truncf %170 : vector<128x128xf32> to vector<128x128xbf16>
    %c0_96 = arith.constant 0 : index
    %c0_97 = arith.constant 0 : index
    %172 = vector.load %arg8[%c0_96, %c0_97] : memref<64x128xbf16, #tpu.memory_space<vmem>>, vector<64x128xbf16>
    %cst_98 = arith.constant dense<0.000000e+00> : vector<64x128xf32>
    %173 = tpu.matmul %172, %171, %cst_98 {dimension_numbers = #tpu.dot_dimension_numbers<[1], [0], [0], [1], [0, 0, 1, 1], [], []>} : vector<64x128xbf16>, vector<128x128xbf16>, vector<64x128xf32> -> vector<64x128xf32>
    %174 = vector.broadcast %3 : vector<64x1xf32> to vector<64x128xf32>
    %175 = arith.addf %173, %174 : vector<64x128xf32>
    %cst_99 = arith.constant 0.000000e+00 : f32
    %176 = vector.broadcast %cst_99 : f32 to vector<64x128xf32>
    %177 = arith.maximumf %175, %176 : vector<64x128xf32>
    %178 = arith.truncf %177 : vector<64x128xf32> to vector<64x128xbf16>
    %179 = arith.maximumf %144, %157 : vector<32x128xbf16>
    %180 = arith.maximumf %145, %164 : vector<64x128xbf16>
    %181 = arith.maximumf %146, %171 : vector<128x128xbf16>
    %182 = arith.maximumf %147, %178 : vector<64x128xbf16>
    %c5_i32 = arith.constant 5 : i32
    %183 = arith.index_cast %c5_i32 : i32 to index
    %c0_100 = arith.constant 0 : index
    %c0_101 = arith.constant 0 : index
    %184 = vector.load %arg1[%183, %c0_100, %c0_101] : memref<8x4x128xbf16, #tpu.memory_space<vmem>>, vector<1x4x128xbf16>
    %185 = vector.shape_cast %184 : vector<1x4x128xbf16> to vector<4x128xbf16>
    %c0_102 = arith.constant 0 : index
    %c0_103 = arith.constant 0 : index
    %186 = vector.load %arg2[%c0_102, %c0_103] : memref<32x4xbf16, #tpu.memory_space<vmem>>, vector<32x4xbf16>
    %cst_104 = arith.constant dense<0.000000e+00> : vector<32x128xf32>
    %187 = tpu.matmul %186, %185, %cst_104 {dimension_numbers = #tpu.dot_dimension_numbers<[1], [0], [0], [1], [0, 0, 1, 1], [], []>} : vector<32x4xbf16>, vector<4x128xbf16>, vector<32x128xf32> -> vector<32x128xf32>
    %188 = vector.broadcast %0 : vector<32x1xf32> to vector<32x128xf32>
    %189 = arith.addf %187, %188 : vector<32x128xf32>
    %cst_105 = arith.constant 0.000000e+00 : f32
    %190 = vector.broadcast %cst_105 : f32 to vector<32x128xf32>
    %191 = arith.maximumf %189, %190 : vector<32x128xf32>
    %192 = arith.truncf %191 : vector<32x128xf32> to vector<32x128xbf16>
    %c0_106 = arith.constant 0 : index
    %c0_107 = arith.constant 0 : index
    %193 = vector.load %arg4[%c0_106, %c0_107] : memref<64x32xbf16, #tpu.memory_space<vmem>>, vector<64x32xbf16>
    %cst_108 = arith.constant dense<0.000000e+00> : vector<64x128xf32>
    %194 = tpu.matmul %193, %192, %cst_108 {dimension_numbers = #tpu.dot_dimension_numbers<[1], [0], [0], [1], [0, 0, 1, 1], [], []>} : vector<64x32xbf16>, vector<32x128xbf16>, vector<64x128xf32> -> vector<64x128xf32>
    %195 = vector.broadcast %1 : vector<64x1xf32> to vector<64x128xf32>
    %196 = arith.addf %194, %195 : vector<64x128xf32>
    %cst_109 = arith.constant 0.000000e+00 : f32
    %197 = vector.broadcast %cst_109 : f32 to vector<64x128xf32>
    %198 = arith.maximumf %196, %197 : vector<64x128xf32>
    %199 = arith.truncf %198 : vector<64x128xf32> to vector<64x128xbf16>
    %c0_110 = arith.constant 0 : index
    %c0_111 = arith.constant 0 : index
    %200 = vector.load %arg6[%c0_110, %c0_111] : memref<128x64xbf16, #tpu.memory_space<vmem>>, vector<128x64xbf16>
    %cst_112 = arith.constant dense<0.000000e+00> : vector<128x128xf32>
    %201 = tpu.matmul %200, %199, %cst_112 {dimension_numbers = #tpu.dot_dimension_numbers<[1], [0], [0], [1], [0, 0, 1, 1], [], []>} : vector<128x64xbf16>, vector<64x128xbf16>, vector<128x128xf32> -> vector<128x128xf32>
    %202 = vector.broadcast %2 : vector<128x1xf32> to vector<128x128xf32>
    %203 = arith.addf %201, %202 : vector<128x128xf32>
    %cst_113 = arith.constant 0.000000e+00 : f32
    %204 = vector.broadcast %cst_113 : f32 to vector<128x128xf32>
    %205 = arith.maximumf %203, %204 : vector<128x128xf32>
    %206 = arith.truncf %205 : vector<128x128xf32> to vector<128x128xbf16>
    %c0_114 = arith.constant 0 : index
    %c0_115 = arith.constant 0 : index
    %207 = vector.load %arg8[%c0_114, %c0_115] : memref<64x128xbf16, #tpu.memory_space<vmem>>, vector<64x128xbf16>
    %cst_116 = arith.constant dense<0.000000e+00> : vector<64x128xf32>
    %208 = tpu.matmul %207, %206, %cst_116 {dimension_numbers = #tpu.dot_dimension_numbers<[1], [0], [0], [1], [0, 0, 1, 1], [], []>} : vector<64x128xbf16>, vector<128x128xbf16>, vector<64x128xf32> -> vector<64x128xf32>
    %209 = vector.broadcast %3 : vector<64x1xf32> to vector<64x128xf32>
    %210 = arith.addf %208, %209 : vector<64x128xf32>
    %cst_117 = arith.constant 0.000000e+00 : f32
    %211 = vector.broadcast %cst_117 : f32 to vector<64x128xf32>
    %212 = arith.maximumf %210, %211 : vector<64x128xf32>
    %213 = arith.truncf %212 : vector<64x128xf32> to vector<64x128xbf16>
    %214 = arith.maximumf %179, %192 : vector<32x128xbf16>
    %215 = arith.maximumf %180, %199 : vector<64x128xbf16>
    %216 = arith.maximumf %181, %206 : vector<128x128xbf16>
    %217 = arith.maximumf %182, %213 : vector<64x128xbf16>
    %c6_i32 = arith.constant 6 : i32
    %218 = arith.index_cast %c6_i32 : i32 to index
    %c0_118 = arith.constant 0 : index
    %c0_119 = arith.constant 0 : index
    %219 = vector.load %arg1[%218, %c0_118, %c0_119] : memref<8x4x128xbf16, #tpu.memory_space<vmem>>, vector<1x4x128xbf16>
    %220 = vector.shape_cast %219 : vector<1x4x128xbf16> to vector<4x128xbf16>
    %c0_120 = arith.constant 0 : index
    %c0_121 = arith.constant 0 : index
    %221 = vector.load %arg2[%c0_120, %c0_121] : memref<32x4xbf16, #tpu.memory_space<vmem>>, vector<32x4xbf16>
    %cst_122 = arith.constant dense<0.000000e+00> : vector<32x128xf32>
    %222 = tpu.matmul %221, %220, %cst_122 {dimension_numbers = #tpu.dot_dimension_numbers<[1], [0], [0], [1], [0, 0, 1, 1], [], []>} : vector<32x4xbf16>, vector<4x128xbf16>, vector<32x128xf32> -> vector<32x128xf32>
    %223 = vector.broadcast %0 : vector<32x1xf32> to vector<32x128xf32>
    %224 = arith.addf %222, %223 : vector<32x128xf32>
    %cst_123 = arith.constant 0.000000e+00 : f32
    %225 = vector.broadcast %cst_123 : f32 to vector<32x128xf32>
    %226 = arith.maximumf %224, %225 : vector<32x128xf32>
    %227 = arith.truncf %226 : vector<32x128xf32> to vector<32x128xbf16>
    %c0_124 = arith.constant 0 : index
    %c0_125 = arith.constant 0 : index
    %228 = vector.load %arg4[%c0_124, %c0_125] : memref<64x32xbf16, #tpu.memory_space<vmem>>, vector<64x32xbf16>
    %cst_126 = arith.constant dense<0.000000e+00> : vector<64x128xf32>
    %229 = tpu.matmul %228, %227, %cst_126 {dimension_numbers = #tpu.dot_dimension_numbers<[1], [0], [0], [1], [0, 0, 1, 1], [], []>} : vector<64x32xbf16>, vector<32x128xbf16>, vector<64x128xf32> -> vector<64x128xf32>
    %230 = vector.broadcast %1 : vector<64x1xf32> to vector<64x128xf32>
    %231 = arith.addf %229, %230 : vector<64x128xf32>
    %cst_127 = arith.constant 0.000000e+00 : f32
    %232 = vector.broadcast %cst_127 : f32 to vector<64x128xf32>
    %233 = arith.maximumf %231, %232 : vector<64x128xf32>
    %234 = arith.truncf %233 : vector<64x128xf32> to vector<64x128xbf16>
    %c0_128 = arith.constant 0 : index
    %c0_129 = arith.constant 0 : index
    %235 = vector.load %arg6[%c0_128, %c0_129] : memref<128x64xbf16, #tpu.memory_space<vmem>>, vector<128x64xbf16>
    %cst_130 = arith.constant dense<0.000000e+00> : vector<128x128xf32>
    %236 = tpu.matmul %235, %234, %cst_130 {dimension_numbers = #tpu.dot_dimension_numbers<[1], [0], [0], [1], [0, 0, 1, 1], [], []>} : vector<128x64xbf16>, vector<64x128xbf16>, vector<128x128xf32> -> vector<128x128xf32>
    %237 = vector.broadcast %2 : vector<128x1xf32> to vector<128x128xf32>
    %238 = arith.addf %236, %237 : vector<128x128xf32>
    %cst_131 = arith.constant 0.000000e+00 : f32
    %239 = vector.broadcast %cst_131 : f32 to vector<128x128xf32>
    %240 = arith.maximumf %238, %239 : vector<128x128xf32>
    %241 = arith.truncf %240 : vector<128x128xf32> to vector<128x128xbf16>
    %c0_132 = arith.constant 0 : index
    %c0_133 = arith.constant 0 : index
    %242 = vector.load %arg8[%c0_132, %c0_133] : memref<64x128xbf16, #tpu.memory_space<vmem>>, vector<64x128xbf16>
    %cst_134 = arith.constant dense<0.000000e+00> : vector<64x128xf32>
    %243 = tpu.matmul %242, %241, %cst_134 {dimension_numbers = #tpu.dot_dimension_numbers<[1], [0], [0], [1], [0, 0, 1, 1], [], []>} : vector<64x128xbf16>, vector<128x128xbf16>, vector<64x128xf32> -> vector<64x128xf32>
    %244 = vector.broadcast %3 : vector<64x1xf32> to vector<64x128xf32>
    %245 = arith.addf %243, %244 : vector<64x128xf32>
    %cst_135 = arith.constant 0.000000e+00 : f32
    %246 = vector.broadcast %cst_135 : f32 to vector<64x128xf32>
    %247 = arith.maximumf %245, %246 : vector<64x128xf32>
    %248 = arith.truncf %247 : vector<64x128xf32> to vector<64x128xbf16>
    %249 = arith.maximumf %214, %227 : vector<32x128xbf16>
    %250 = arith.maximumf %215, %234 : vector<64x128xbf16>
    %251 = arith.maximumf %216, %241 : vector<128x128xbf16>
    %252 = arith.maximumf %217, %248 : vector<64x128xbf16>
    %c7_i32 = arith.constant 7 : i32
    %253 = arith.index_cast %c7_i32 : i32 to index
    %c0_136 = arith.constant 0 : index
    %c0_137 = arith.constant 0 : index
    %254 = vector.load %arg1[%253, %c0_136, %c0_137] : memref<8x4x128xbf16, #tpu.memory_space<vmem>>, vector<1x4x128xbf16>
    %255 = vector.shape_cast %254 : vector<1x4x128xbf16> to vector<4x128xbf16>
    %c0_138 = arith.constant 0 : index
    %c0_139 = arith.constant 0 : index
    %256 = vector.load %arg2[%c0_138, %c0_139] : memref<32x4xbf16, #tpu.memory_space<vmem>>, vector<32x4xbf16>
    %cst_140 = arith.constant dense<0.000000e+00> : vector<32x128xf32>
    %257 = tpu.matmul %256, %255, %cst_140 {dimension_numbers = #tpu.dot_dimension_numbers<[1], [0], [0], [1], [0, 0, 1, 1], [], []>} : vector<32x4xbf16>, vector<4x128xbf16>, vector<32x128xf32> -> vector<32x128xf32>
    %258 = vector.broadcast %0 : vector<32x1xf32> to vector<32x128xf32>
    %259 = arith.addf %257, %258 : vector<32x128xf32>
    %cst_141 = arith.constant 0.000000e+00 : f32
    %260 = vector.broadcast %cst_141 : f32 to vector<32x128xf32>
    %261 = arith.maximumf %259, %260 : vector<32x128xf32>
    %262 = arith.truncf %261 : vector<32x128xf32> to vector<32x128xbf16>
    %c0_142 = arith.constant 0 : index
    %c0_143 = arith.constant 0 : index
    %263 = vector.load %arg4[%c0_142, %c0_143] : memref<64x32xbf16, #tpu.memory_space<vmem>>, vector<64x32xbf16>
    %cst_144 = arith.constant dense<0.000000e+00> : vector<64x128xf32>
    %264 = tpu.matmul %263, %262, %cst_144 {dimension_numbers = #tpu.dot_dimension_numbers<[1], [0], [0], [1], [0, 0, 1, 1], [], []>} : vector<64x32xbf16>, vector<32x128xbf16>, vector<64x128xf32> -> vector<64x128xf32>
    %265 = vector.broadcast %1 : vector<64x1xf32> to vector<64x128xf32>
    %266 = arith.addf %264, %265 : vector<64x128xf32>
    %cst_145 = arith.constant 0.000000e+00 : f32
    %267 = vector.broadcast %cst_145 : f32 to vector<64x128xf32>
    %268 = arith.maximumf %266, %267 : vector<64x128xf32>
    %269 = arith.truncf %268 : vector<64x128xf32> to vector<64x128xbf16>
    %c0_146 = arith.constant 0 : index
    %c0_147 = arith.constant 0 : index
    %270 = vector.load %arg6[%c0_146, %c0_147] : memref<128x64xbf16, #tpu.memory_space<vmem>>, vector<128x64xbf16>
    %cst_148 = arith.constant dense<0.000000e+00> : vector<128x128xf32>
    %271 = tpu.matmul %270, %269, %cst_148 {dimension_numbers = #tpu.dot_dimension_numbers<[1], [0], [0], [1], [0, 0, 1, 1], [], []>} : vector<128x64xbf16>, vector<64x128xbf16>, vector<128x128xf32> -> vector<128x128xf32>
    %272 = vector.broadcast %2 : vector<128x1xf32> to vector<128x128xf32>
    %273 = arith.addf %271, %272 : vector<128x128xf32>
    %cst_149 = arith.constant 0.000000e+00 : f32
    %274 = vector.broadcast %cst_149 : f32 to vector<128x128xf32>
    %275 = arith.maximumf %273, %274 : vector<128x128xf32>
    %276 = arith.truncf %275 : vector<128x128xf32> to vector<128x128xbf16>
    %c0_150 = arith.constant 0 : index
    %c0_151 = arith.constant 0 : index
    %277 = vector.load %arg8[%c0_150, %c0_151] : memref<64x128xbf16, #tpu.memory_space<vmem>>, vector<64x128xbf16>
    %cst_152 = arith.constant dense<0.000000e+00> : vector<64x128xf32>
    %278 = tpu.matmul %277, %276, %cst_152 {dimension_numbers = #tpu.dot_dimension_numbers<[1], [0], [0], [1], [0, 0, 1, 1], [], []>} : vector<64x128xbf16>, vector<128x128xbf16>, vector<64x128xf32> -> vector<64x128xf32>
    %279 = vector.broadcast %3 : vector<64x1xf32> to vector<64x128xf32>
    %280 = arith.addf %278, %279 : vector<64x128xf32>
    %cst_153 = arith.constant 0.000000e+00 : f32
    %281 = vector.broadcast %cst_153 : f32 to vector<64x128xf32>
    %282 = arith.maximumf %280, %281 : vector<64x128xf32>
    %283 = arith.truncf %282 : vector<64x128xf32> to vector<64x128xbf16>
    %284 = arith.maximumf %249, %262 : vector<32x128xbf16>
    %285 = arith.maximumf %250, %269 : vector<64x128xbf16>
    %286 = arith.maximumf %251, %276 : vector<128x128xbf16>
    %287 = arith.maximumf %252, %283 : vector<64x128xbf16>
    %c8_i32 = arith.constant 8 : i32
    %288 = tpu.concatenate %284, %285, %286, %287 in 0 : vector<32x128xbf16>, vector<64x128xbf16>, vector<128x128xbf16>, vector<64x128xbf16> -> vector<288x128xbf16>
    %c0_154 = arith.constant 0 : index
    %c0_155 = arith.constant 0 : index
    %289 = vector.load %arg10[%c0_154, %c0_155] : memref<512x288xbf16, #tpu.memory_space<vmem>>, vector<512x288xbf16>
    %cst_156 = arith.constant dense<0.000000e+00> : vector<512x128xf32>
    %290 = tpu.matmul %289, %288, %cst_156 {dimension_numbers = #tpu.dot_dimension_numbers<[1], [0], [0], [1], [0, 0, 1, 1], [], []>} : vector<512x288xbf16>, vector<288x128xbf16>, vector<512x128xf32> -> vector<512x128xf32>
    %c0_157 = arith.constant 0 : index
    %c0_158 = arith.constant 0 : index
    %291 = vector.load %arg11[%c0_157, %c0_158] : memref<512x1xf32, #tpu.memory_space<vmem>>, vector<512x1xf32>
    %292 = vector.broadcast %291 : vector<512x1xf32> to vector<512x128xf32>
    %293 = arith.addf %290, %292 : vector<512x128xf32>
    %cst_159 = arith.constant 0.000000e+00 : f32
    %294 = vector.broadcast %cst_159 : f32 to vector<512x128xf32>
    %295 = arith.maximumf %293, %294 : vector<512x128xf32>
    %c0_160 = arith.constant 0 : index
    %c0_161 = arith.constant 0 : index
    %296 = vector.load %arg12[%c0_160, %c0_161] : memref<512x128xf32, #tpu.memory_space<vmem>>, vector<512x128xf32>
    tpu.vector_store %arg12[%c0_160, %c0_161], %295 {strides = array<i32>} : memref<512x128xf32, #tpu.memory_space<vmem>>, vector<512x128xf32>,
    return
  }
  func.func @transform_0(%arg0: i32) -> (i32, i32, i32) {
    %c0_i32 = arith.constant 0 : i32
    %c0_i32_0 = arith.constant 0 : i32
    %c0_i32_1 = arith.constant 0 : i32
    return %c0_i32, %c0_i32_0, %arg0 : i32, i32, i32
  }
  func.func @transform_1(%arg0: i32) -> (i32, i32) {
    %c0_i32 = arith.constant 0 : i32
    %c0_i32_0 = arith.constant 0 : i32
    %c0_i32_1 = arith.constant 0 : i32
    return %c0_i32, %c0_i32_0 : i32, i32
  }
  func.func @transform_2(%arg0: i32) -> (i32, i32) {
    %c0_i32 = arith.constant 0 : i32
    %c0_i32_0 = arith.constant 0 : i32
    %c0_i32_1 = arith.constant 0 : i32
    return %c0_i32, %c0_i32_0 : i32, i32
  }
  func.func @transform_3(%arg0: i32) -> (i32, i32) {
    %c0_i32 = arith.constant 0 : i32
    %c0_i32_0 = arith.constant 0 : i32
    %c0_i32_1 = arith.constant 0 : i32
    return %c0_i32, %c0_i32_0 : i32, i32
  }
  func.func @transform_4(%arg0: i32) -> (i32, i32) {
    %c0_i32 = arith.constant 0 : i32
    %c0_i32_0 = arith.constant 0 : i32
    %c0_i32_1 = arith.constant 0 : i32
    return %c0_i32, %c0_i32_0 : i32, i32
  }
  func.func @transform_5(%arg0: i32) -> (i32, i32) {
    %c0_i32 = arith.constant 0 : i32
    %c0_i32_0 = arith.constant 0 : i32
    %c0_i32_1 = arith.constant 0 : i32
    return %c0_i32, %c0_i32_0 : i32, i32
  }
  func.func @transform_6(%arg0: i32) -> (i32, i32) {
    %c0_i32 = arith.constant 0 : i32
    %c0_i32_0 = arith.constant 0 : i32
    %c0_i32_1 = arith.constant 0 : i32
    return %c0_i32, %c0_i32_0 : i32, i32
  }
  func.func @transform_7(%arg0: i32) -> (i32, i32) {
    %c0_i32 = arith.constant 0 : i32
    %c0_i32_0 = arith.constant 0 : i32
    %c0_i32_1 = arith.constant 0 : i32
    return %c0_i32, %c0_i32_0 : i32, i32
  }
  func.func @transform_8(%arg0: i32) -> (i32, i32) {
    %c0_i32 = arith.constant 0 : i32
    %c0_i32_0 = arith.constant 0 : i32
    %c0_i32_1 = arith.constant 0 : i32
    return %c0_i32, %c0_i32_0 : i32, i32
  }
  func.func @transform_9(%arg0: i32) -> (i32, i32) {
    %c0_i32 = arith.constant 0 : i32
    %c0_i32_0 = arith.constant 0 : i32
    %c0_i32_1 = arith.constant 0 : i32
    return %c0_i32, %c0_i32_0 : i32, i32
  }
  func.func @transform_10(%arg0: i32) -> (i32, i32) {
    %c0_i32 = arith.constant 0 : i32
    %c0_i32_0 = arith.constant 0 : i32
    %c0_i32_1 = arith.constant 0 : i32
    return %c0_i32, %c0_i32_0 : i32, i32
  }
  func.func @transform_11(%arg0: i32) -> (i32, i32) {
    %c0_i32 = arith.constant 0 : i32
    %c0_i32_0 = arith.constant 0 : i32
    return %c0_i32, %arg0 : i32, i32
  }
}

</mosaic_0001>

<llo_original>
// kernel: tpu_custom_call.1
$region0: #{tpu_custom_call.1}
  #allocation0 [shape = 'u32[]', space=smem, size = 0x4, offset = 0x4, fixed_abs, tag = 'smem constant byte address 0x4 - core index']
  #allocation1 [shape = 'u32[144,128]{1,0:T(1,128)}', space=vmem, size = 0x12000, scoped, tag = 'internal scratch']
  %s0 = inlined_call_operand.vmem [shape: bf16[8,4,256], index: 0, kind: input, shape index: {}]
  %s1 = inlined_call_operand.vmem [shape: bf16[32,4], index: 1, kind: input, shape index: {}]
  %s2 = inlined_call_operand.vmem [shape: f32[32,1], index: 2, kind: input, shape index: {}]
  %s3 = inlined_call_operand.vmem [shape: bf16[64,32], index: 3, kind: input, shape index: {}]
  %s4 = inlined_call_operand.vmem [shape: f32[64,1], index: 4, kind: input, shape index: {}]
  %s5 = inlined_call_operand.vmem [shape: bf16[128,64], index: 5, kind: input, shape index: {}]
  %s6 = inlined_call_operand.vmem [shape: f32[128,1], index: 6, kind: input, shape index: {}]
  %s7 = inlined_call_operand.vmem [shape: bf16[64,128], index: 7, kind: input, shape index: {}]
  %s8 = inlined_call_operand.vmem [shape: f32[64,1], index: 8, kind: input, shape index: {}]
  %s9 = inlined_call_operand.vmem [shape: bf16[512,288], index: 9, kind: input, shape index: {}]
  %s10 = inlined_call_operand.vmem [shape: f32[512,1], index: 10, kind: input, shape index: {}]
  %s11 = inlined_call_operand.hbm [shape: f32[512,256], index: 11, kind: output, shape index: {}]
  %s12 = sld [smem:[#allocation0]]
  $region118: #{tpu_custom_call.1} parent=0
    _
  %s14 = ssub.s32 1, %s12
  %s15 = scalar_select 0, %s14, %s12
  $region1: #{tpu_custom_call.1} parent=0
    #allocation2 [shape = 'u8[16384]{0}', space=vmem, size = 0x4000, scoped, tag = 'input window, operand 0']
    #allocation3 [shape = 'u8[524288]{0}', space=vmem, size = 0x80000, scoped, tag = 'output window, operand 0']
    #allocation4 [shape = 's32[2]{0}', space=sflag, size = 0x8, scoped, tag = 'scoped memory for tpu_custom_call.1']
    %16 = vsyncpa [#allocation4], 0
    %s17 = scalar_lea.sflag [#allocation4], 1
    %18 = vsyncpa %s17, 0
    loop: start=0, step=1, limit=4
    $region2: #{tpu_custom_call.1} parent=1 // loop_pre_header
      _
    $region3: #{tpu_custom_call.1} parent=1 // loop_header
      %s20 = sphi 0, %s24
      %p21 = scmp.ge.s32.totalorder %s20, 4
      %s30 = sphi 0, %s32
      %s33 = sphi 0, %s30
      %s34 = sphi 0, %s33
      %s50 = sphi 0, %s34
      %s54 = sphi 0, %s54
      %s56 = sphi 0, %s54
      %s57 = sphi 0, %s56
      %s71 = sphi 0, %s57
      %s75 = sphi 0, %s75
      %s77 = sphi 0, %s75
      %s78 = sphi 0, %s77
      %s92 = sphi 0, %s78
      %s96 = sphi 0, %s96
      %s98 = sphi 0, %s96
      %s99 = sphi 0, %s98
      %s113 = sphi 0, %s99
      %s117 = sphi 0, %s117
      %s119 = sphi 0, %s117
      %s120 = sphi 0, %s119
      %s134 = sphi 0, %s120
      %s138 = sphi 0, %s138
      %s140 = sphi 0, %s138
      %s141 = sphi 0, %s140
      %s155 = sphi 0, %s141
      %s159 = sphi 0, %s159
      %s161 = sphi 0, %s159
      %s162 = sphi 0, %s161
      %s176 = sphi 0, %s162
      %s180 = sphi 0, %s180
      %s182 = sphi 0, %s180
      %s183 = sphi 0, %s182
      %s197 = sphi 0, %s183
      %s201 = sphi 0, %s201
      %s203 = sphi 0, %s201
      %s204 = sphi 0, %s203
      %s218 = sphi 0, %s204
      %s222 = sphi 0, %s222
      %s224 = sphi 0, %s222
      %s225 = sphi 0, %s224
      %s239 = sphi 0, %s225
      %s243 = sphi 0, %s243
      %s245 = sphi 0, %s243
      %s246 = sphi 0, %s245
      %s260 = sphi 0, %s246
      %s266 = sphi 0, %s268
      %s269 = sphi 0, %s266
      %s270 = sphi 0, %s269
      %s286 = sphi 0, %s270
    $region4: #{tpu_custom_call.1} parent=1 // loop_header_branch
      %23 = sbr.rel (%p21) target = $region8
    $region5: #{tpu_custom_call.1} parent=1 // loop_body
      %s25 = ssub.s32 %s20, 1
      %s26 = ssub.s32 %s20, 2
      %s27 = sadd.s32 %s20, 1
      %s28 = ssub.s32 %s20, %s27
      %p29 = scmp.eq.s32.totalorder %s28, 0
      %s31 = sadd.s32 %s30, 1
      %s32 = scalar_select %p29, %s30, %s31
      %p35 = pneg %p29
      %p36 = scmp.eq.s32.totalorder %s20, 1
      %p37 = por %p35, %p36
      %p38 = scmp.ne.s32.totalorder %s30, %s33
      %p39 = scmp.eq.s32.totalorder %s20, 0
      %p40 = por %p38, %p39
      %p41 = scmp.ne.s32.totalorder %s30, %s33
      %p42 = scmp.eq.s32.totalorder %s25, 1
      %p43 = por %p41, %p42
      %p44 = scmp.ne.s32.totalorder %s33, %s34
      %p45 = scmp.eq.s32.totalorder %s25, 0
      %p46 = por %p44, %p45
      %p47 = scmp.ne.s32.totalorder %s33, %s34
      %p48 = scmp.eq.s32.totalorder %s26, 1
      %p49 = por %p47, %p48
      %p51 = scmp.ne.s32.totalorder %s34, %s50
      %p52 = scmp.eq.s32.totalorder %s26, 0
      %p53 = por %p51, %p52
      %s55 = sadd.s32 %s54, 1
      %p58 = scmp.eq.s32.totalorder %s20, 1
      %p59 = scmp.ne.s32.totalorder %s54, %s56
      %p60 = scmp.eq.s32.totalorder %s20, 0
      %p61 = por %p59, %p60
      %p62 = scmp.ne.s32.totalorder %s54, %s56
      %p63 = scmp.eq.s32.totalorder %s25, 1
      %p64 = por %p62, %p63
      %p65 = scmp.ne.s32.totalorder %s56, %s57
      %p66 = scmp.eq.s32.totalorder %s25, 0
      %p67 = por %p65, %p66
      %p68 = scmp.ne.s32.totalorder %s56, %s57
      %p69 = scmp.eq.s32.totalorder %s26, 1
      %p70 = por %p68, %p69
      %p72 = scmp.ne.s32.totalorder %s57, %s71
      %p73 = scmp.eq.s32.totalorder %s26, 0
      %p74 = por %p72, %p73
      %s76 = sadd.s32 %s75, 1
      %p79 = scmp.eq.s32.totalorder %s20, 1
      %p80 = scmp.ne.s32.totalorder %s75, %s77
      %p81 = scmp.eq.s32.totalorder %s20, 0
      %p82 = por %p80, %p81
      %p83 = scmp.ne.s32.totalorder %s75, %s77
      %p84 = scmp.eq.s32.totalorder %s25, 1
      %p85 = por %p83, %p84
      %p86 = scmp.ne.s32.totalorder %s77, %s78
      %p87 = scmp.eq.s32.totalorder %s25, 0
      %p88 = por %p86, %p87
      %p89 = scmp.ne.s32.totalorder %s77, %s78
      %p90 = scmp.eq.s32.totalorder %s26, 1
      %p91 = por %p89, %p90
      %p93 = scmp.ne.s32.totalorder %s78, %s92
      %p94 = scmp.eq.s32.totalorder %s26, 0
      %p95 = por %p93, %p94
      %s97 = sadd.s32 %s96, 1
      %p100 = scmp.eq.s32.totalorder %s20, 1
      %p101 = scmp.ne.s32.totalorder %s96, %s98
      %p102 = scmp.eq.s32.totalorder %s20, 0
      %p103 = por %p101, %p102
      %p104 = scmp.ne.s32.totalorder %s96, %s98
      %p105 = scmp.eq.s32.totalorder %s25, 1
      %p106 = por %p104, %p105
      %p107 = scmp.ne.s32.totalorder %s98, %s99
      %p108 = scmp.eq.s32.totalorder %s25, 0
      %p109 = por %p107, %p108
      %p110 = scmp.ne.s32.totalorder %s98, %s99
      %p111 = scmp.eq.s32.totalorder %s26, 1
      %p112 = por %p110, %p111
      %p114 = scmp.ne.s32.totalorder %s99, %s113
      %p115 = scmp.eq.s32.totalorder %s26, 0
      %p116 = por %p114, %p115
      %s118 = sadd.s32 %s117, 1
      %p121 = scmp.eq.s32.totalorder %s20, 1
      %p122 = scmp.ne.s32.totalorder %s117, %s119
      %p123 = scmp.eq.s32.totalorder %s20, 0
      %p124 = por %p122, %p123
      %p125 = scmp.ne.s32.totalorder %s117, %s119
      %p126 = scmp.eq.s32.totalorder %s25, 1
      %p127 = por %p125, %p126
      %p128 = scmp.ne.s32.totalorder %s119, %s120
      %p129 = scmp.eq.s32.totalorder %s25, 0
      %p130 = por %p128, %p129
      %p131 = scmp.ne.s32.totalorder %s119, %s120
      %p132 = scmp.eq.s32.totalorder %s26, 1
      %p133 = por %p131, %p132
      %p135 = scmp.ne.s32.totalorder %s120, %s134
      %p136 = scmp.eq.s32.totalorder %s26, 0
      %p137 = por %p135, %p136
      %s139 = sadd.s32 %s138, 1
      %p142 = scmp.eq.s32.totalorder %s20, 1
      %p143 = scmp.ne.s32.totalorder %s138, %s140
      %p144 = scmp.eq.s32.totalorder %s20, 0
      %p145 = por %p143, %p144
      %p146 = scmp.ne.s32.totalorder %s138, %s140
      %p147 = scmp.eq.s32.totalorder %s25, 1
      %p148 = por %p146, %p147
      %p149 = scmp.ne.s32.totalorder %s140, %s141
      %p150 = scmp.eq.s32.totalorder %s25, 0
      %p151 = por %p149, %p150
      %p152 = scmp.ne.s32.totalorder %s140, %s141
      %p153 = scmp.eq.s32.totalorder %s26, 1
      %p154 = por %p152, %p153
      %p156 = scmp.ne.s32.totalorder %s141, %s155
      %p157 = scmp.eq.s32.totalorder %s26, 0
      %p158 = por %p156, %p157
      %s160 = sadd.s32 %s159, 1
      %p163 = scmp.eq.s32.totalorder %s20, 1
      %p164 = scmp.ne.s32.totalorder %s159, %s161
      %p165 = scmp.eq.s32.totalorder %s20, 0
      %p166 = por %p164, %p165
      %p167 = scmp.ne.s32.totalorder %s159, %s161
      %p168 = scmp.eq.s32.totalorder %s25, 1
      %p169 = por %p167, %p168
      %p170 = scmp.ne.s32.totalorder %s161, %s162
      %p171 = scmp.eq.s32.totalorder %s25, 0
      %p172 = por %p170, %p171
      %p173 = scmp.ne.s32.totalorder %s161, %s162
      %p174 = scmp.eq.s32.totalorder %s26, 1
      %p175 = por %p173, %p174
      %p177 = scmp.ne.s32.totalorder %s162, %s176
      %p178 = scmp.eq.s32.totalorder %s26, 0
      %p179 = por %p177, %p178
      %s181 = sadd.s32 %s180, 1
      %p184 = scmp.eq.s32.totalorder %s20, 1
      %p185 = scmp.ne.s32.totalorder %s180, %s182
      %p186 = scmp.eq.s32.totalorder %s20, 0
      %p187 = por %p185, %p186
      %p188 = scmp.ne.s32.totalorder %s180, %s182
      %p189 = scmp.eq.s32.totalorder %s25, 1
      %p190 = por %p188, %p189
      %p191 = scmp.ne.s32.totalorder %s182, %s183
      %p192 = scmp.eq.s32.totalorder %s25, 0
      %p193 = por %p191, %p192
      %p194 = scmp.ne.s32.totalorder %s182, %s183
      %p195 = scmp.eq.s32.totalorder %s26, 1
      %p196 = por %p194, %p195
      %p198 = scmp.ne.s32.totalorder %s183, %s197
      %p199 = scmp.eq.s32.totalorder %s26, 0
      %p200 = por %p198, %p199
      %s202 = sadd.s32 %s201, 1
      %p205 = scmp.eq.s32.totalorder %s20, 1
      %p206 = scmp.ne.s32.totalorder %s201, %s203
      %p207 = scmp.eq.s32.totalorder %s20, 0
      %p208 = por %p206, %p207
      %p209 = scmp.ne.s32.totalorder %s201, %s203
      %p210 = scmp.eq.s32.totalorder %s25, 1
      %p211 = por %p209, %p210
      %p212 = scmp.ne.s32.totalorder %s203, %s204
      %p213 = scmp.eq.s32.totalorder %s25, 0
      %p214 = por %p212, %p213
      %p215 = scmp.ne.s32.totalorder %s203, %s204
      %p216 = scmp.eq.s32.totalorder %s26, 1
      %p217 = por %p215, %p216
      %p219 = scmp.ne.s32.totalorder %s204, %s218
      %p220 = scmp.eq.s32.totalorder %s26, 0
      %p221 = por %p219, %p220
      %s223 = sadd.s32 %s222, 1
      %p226 = scmp.eq.s32.totalorder %s20, 1
      %p227 = scmp.ne.s32.totalorder %s222, %s224
      %p228 = scmp.eq.s32.totalorder %s20, 0
      %p229 = por %p227, %p228
      %p230 = scmp.ne.s32.totalorder %s222, %s224
      %p231 = scmp.eq.s32.totalorder %s25, 1
      %p232 = por %p230, %p231
      %p233 = scmp.ne.s32.totalorder %s224, %s225
      %p234 = scmp.eq.s32.totalorder %s25, 0
      %p235 = por %p233, %p234
      %p236 = scmp.ne.s32.totalorder %s224, %s225
      %p237 = scmp.eq.s32.totalorder %s26, 1
      %p238 = por %p236, %p237
      %p240 = scmp.ne.s32.totalorder %s225, %s239
      %p241 = scmp.eq.s32.totalorder %s26, 0
      %p242 = por %p240, %p241
      %s244 = sadd.s32 %s243, 1
      %p247 = scmp.eq.s32.totalorder %s20, 1
      %p248 = scmp.ne.s32.totalorder %s243, %s245
      %p249 = scmp.eq.s32.totalorder %s20, 0
      %p250 = por %p248, %p249
      %p251 = scmp.ne.s32.totalorder %s243, %s245
      %p252 = scmp.eq.s32.totalorder %s25, 1
      %p253 = por %p251, %p252
      %p254 = scmp.ne.s32.totalorder %s245, %s246
      %p255 = scmp.eq.s32.totalorder %s25, 0
      %p256 = por %p254, %p255
      %p257 = scmp.ne.s32.totalorder %s245, %s246
      %p258 = scmp.eq.s32.totalorder %s26, 1
      %p259 = por %p257, %p258
      %p261 = scmp.ne.s32.totalorder %s246, %s260
      %p262 = scmp.eq.s32.totalorder %s26, 0
      %p263 = por %p261, %p262
      %s264 = ssub.s32 %s20, %s27
      %p265 = scmp.eq.s32.totalorder %s264, 0
      %s267 = sadd.s32 %s266, 1
      %s268 = scalar_select %p265, %s266, %s267
      %p271 = pneg %p265
      %p272 = scmp.eq.s32.totalorder %s20, 1
      %p273 = por %p271, %p272
      %p274 = scmp.ne.s32.totalorder %s266, %s269
      %p275 = scmp.eq.s32.totalorder %s20, 0
      %p276 = por %p274, %p275
      %p277 = scmp.ne.s32.totalorder %s266, %s269
      %p278 = scmp.eq.s32.totalorder %s25, 1
      %p279 = por %p277, %p278
      %p280 = scmp.ne.s32.totalorder %s269, %s270
      %p281 = scmp.eq.s32.totalorder %s25, 0
      %p282 = por %p280, %p281
      %p283 = scmp.ne.s32.totalorder %s269, %s270
      %p284 = scmp.eq.s32.totalorder %s26, 1
      %p285 = por %p283, %p284
      %p287 = scmp.ne.s32.totalorder %s270, %s286
      %p288 = scmp.eq.s32.totalorder %s26, 0
      %p289 = por %p287, %p288
      %p290 = scmp.le.s32.totalorder 1, %s20
      %p291 = scmp.lt.s32.totalorder %s20, 3
      %p292 = pnand %p290, %p291
      %p293 = pneg %p292
      // Predicated region
      $region9: #{tpu_custom_call.1} parent=5 // pred_check
        _
      $region10: #{tpu_custom_call.1} parent=5 // pred_check_branch
        %295 = sbr.rel (%p292) target = $region12
      $region11: #{tpu_custom_call.1} parent=5 // pred_region
        %s296 = ssub.s32 %s20, 1
        // Predicated region
        $region13: #{tpu_custom_call.1} parent=11 // pred_check
          %p297 = pneg %p67
        $region14: #{tpu_custom_call.1} parent=11 // pred_check_branch
          %299 = sbr.rel (%p297) target = $region16
        $region15: #{tpu_custom_call.1} parent=11 // pred_region
          _
        $region16: #{tpu_custom_call.1} parent=11 // pred_fallthru
          _
        // Predicated region
        $region17: #{tpu_custom_call.1} parent=11 // pred_check
          %p300 = pneg %p88
        $region18: #{tpu_custom_call.1} parent=11 // pred_check_branch
          %302 = sbr.rel (%p300) target = $region20
        $region19: #{tpu_custom_call.1} parent=11 // pred_region
          _
        $region20: #{tpu_custom_call.1} parent=11 // pred_fallthru
          _
        // Predicated region
        $region21: #{tpu_custom_call.1} parent=11 // pred_check
          %p303 = pneg %p109
        $region22: #{tpu_custom_call.1} parent=11 // pred_check_branch
          %305 = sbr.rel (%p303) target = $region24
        $region23: #{tpu_custom_call.1} parent=11 // pred_region
          _
        $region24: #{tpu_custom_call.1} parent=11 // pred_fallthru
          _
        // Predicated region
        $region25: #{tpu_custom_call.1} parent=11 // pred_check
          %p306 = pneg %p130
        $region26: #{tpu_custom_call.1} parent=11 // pred_check_branch
          %308 = sbr.rel (%p306) target = $region28
        $region27: #{tpu_custom_call.1} parent=11 // pred_region
          _
        $region28: #{tpu_custom_call.1} parent=11 // pred_fallthru
          _
        // Predicated region
        $region29: #{tpu_custom_call.1} parent=11 // pred_check
          %p309 = pneg %p151
        $region30: #{tpu_custom_call.1} parent=11 // pred_check_branch
          %311 = sbr.rel (%p309) target = $region32
        $region31: #{tpu_custom_call.1} parent=11 // pred_region
          _
        $region32: #{tpu_custom_call.1} parent=11 // pred_fallthru
          _
        // Predicated region
        $region33: #{tpu_custom_call.1} parent=11 // pred_check
          %p312 = pneg %p172
        $region34: #{tpu_custom_call.1} parent=11 // pred_check_branch
          %314 = sbr.rel (%p312) target = $region36
        $region35: #{tpu_custom_call.1} parent=11 // pred_region
          _
        $region36: #{tpu_custom_call.1} parent=11 // pred_fallthru
          _
        // Predicated region
        $region37: #{tpu_custom_call.1} parent=11 // pred_check
          %p315 = pneg %p193
        $region38: #{tpu_custom_call.1} parent=11 // pred_check_branch
          %317 = sbr.rel (%p315) target = $region40
        $region39: #{tpu_custom_call.1} parent=11 // pred_region
          _
        $region40: #{tpu_custom_call.1} parent=11 // pred_fallthru
          _
        // Predicated region
        $region41: #{tpu_custom_call.1} parent=11 // pred_check
          %p318 = pneg %p214
        $region42: #{tpu_custom_call.1} parent=11 // pred_check_branch
          %320 = sbr.rel (%p318) target = $region44
        $region43: #{tpu_custom_call.1} parent=11 // pred_region
          _
        $region44: #{tpu_custom_call.1} parent=11 // pred_fallthru
          _
        // Predicated region
        $region45: #{tpu_custom_call.1} parent=11 // pred_check
          %p321 = pneg %p235
        $region46: #{tpu_custom_call.1} parent=11 // pred_check_branch
          %323 = sbr.rel (%p321) target = $region48
        $region47: #{tpu_custom_call.1} parent=11 // pred_region
          _
        $region48: #{tpu_custom_call.1} parent=11 // pred_fallthru
          _
        // Predicated region
        $region49: #{tpu_custom_call.1} parent=11 // pred_check
          %p324 = pneg %p256
        $region50: #{tpu_custom_call.1} parent=11 // pred_check_branch
          %326 = sbr.rel (%p324) target = $region52
        $region51: #{tpu_custom_call.1} parent=11 // pred_region
          _
        $region52: #{tpu_custom_call.1} parent=11 // pred_fallthru
          _
      $region12: #{tpu_custom_call.1} parent=5 // pred_fallthru
        _
      %p327 = scmp.lt.s32.totalorder %s20, 2
      // Predicated region
      $region53: #{tpu_custom_call.1} parent=5 // pred_check
        %p328 = pneg %p327
      $region54: #{tpu_custom_call.1} parent=5 // pred_check_branch
        %330 = sbr.rel (%p328) target = $region56
      $region55: #{tpu_custom_call.1} parent=5 // pred_region
        // Predicated region
        $region57: #{tpu_custom_call.1} parent=55 // pred_check
          %p331 = pneg %p40
        $region58: #{tpu_custom_call.1} parent=55 // pred_check_branch
          %333 = sbr.rel (%p331) target = $region60
        $region59: #{tpu_custom_call.1} parent=55 // pred_region
          %s334 = sand.u32 %s30, 1
          %s335 = sand.u32 %s30, 1
          %s336 = smul.addr %s335, 16
          %s337 = scalar_lea.vmem [#allocation2], %s336
          %s338 = smul.addr %s20, 2
          %s339 = scalar_lea.vmem %s0, %s338
          // Predicated region
          $region61: #{tpu_custom_call.1} parent=59 // pred_check
            _
          $region62: #{tpu_custom_call.1} parent=59 // pred_check_branch
            %341 = sbr.rel (0) target = $region64
          $region63: #{tpu_custom_call.1} parent=59 // pred_region
            // Predicated region
            $region65: #{tpu_custom_call.1} parent=63 // pred_check
              _
            $region66: #{tpu_custom_call.1} parent=63 // pred_check_branch
              %343 = sbr.rel target = $region68
            $region67: #{tpu_custom_call.1} parent=63 // pred_region
              // Predicated region
              $region80: #{tpu_custom_call.1} parent=67 // pred_check
                _
              $region81: #{tpu_custom_call.1} parent=67 // pred_check_branch
                %372 = sbr.rel (0) target = $region83
              $region82: #{tpu_custom_call.1} parent=67 // pred_region
                loop: start=0, step=1, limit=1
                $region84: #{tpu_custom_call.1} parent=82 // loop_pre_header
                  _
                $region85: #{tpu_custom_call.1} parent=82 // loop_header
                  %s374 = sphi 0, %s378
                  %p375 = scmp.ge.s32.totalorder %s374, 1
                  %s379 = sphi %s339, %s339
                  %s380 = sphi %s337, %s337
                $region86: #{tpu_custom_call.1} parent=82 // loop_header_branch
                  %377 = sbr.rel (%p375) target = $region90
                $region87: #{tpu_custom_call.1} parent=82 // loop_body
                  _
                $region88: #{tpu_custom_call.1} parent=82 // loop_footer
                  %s378 = sadd.s32 1, %s374
                $region89: #{tpu_custom_call.1} parent=82 // loop_footer_branch
                  %373 = sbr.rel target = $region85
                $region90: #{tpu_custom_call.1} parent=82 // loop_exit
                  _
                loop: start=0, step=1, limit=1
                $region91: #{tpu_custom_call.1} parent=82 // loop_pre_header
                  _
                $region92: #{tpu_custom_call.1} parent=82 // loop_header
                  %s383 = sphi 0, %s387
                  %p384 = scmp.ge.s32.totalorder %s383, 1
                  %s388 = sphi %s339, %s339
                  %s389 = sphi %s337, %s337
                $region93: #{tpu_custom_call.1} parent=82 // loop_header_branch
                  %386 = sbr.rel (%p384) target = $region97
                $region94: #{tpu_custom_call.1} parent=82 // loop_body
                  %v390 = vld [vmem:[%s388] sm:$0x3]
                  %391 = vst [vmem:[%s389] sm:$0x3] %v390
                  %v392 = vld [vmem:[%s388 + $0x4] sm:$0x3]
                  %393 = vst [vmem:[%s389 + $0x2] sm:$0x3] %v392
                  %v394 = vld [vmem:[%s388 + $0x8] sm:$0x3]
                  %395 = vst [vmem:[%s389 + $0x4] sm:$0x3] %v394
                  %v396 = vld [vmem:[%s388 + $0xc] sm:$0x3]
                  %397 = vst [vmem:[%s389 + $0x6] sm:$0x3] %v396
                  %v398 = vld [vmem:[%s388 + $0x10] sm:$0x3]
                  %399 = vst [vmem:[%s389 + $0x8] sm:$0x3] %v398
                  %v400 = vld [vmem:[%s388 + $0x14] sm:$0x3]
                  %401 = vst [vmem:[%s389 + $0xa] sm:$0x3] %v400
                  %v402 = vld [vmem:[%s388 + $0x18] sm:$0x3]
                  %403 = vst [vmem:[%s389 + $0xc] sm:$0x3] %v402
                  %v404 = vld [vmem:[%s388 + $0x1c] sm:$0x3]
                  %405 = vst [vmem:[%s389 + $0xe] sm:$0x3] %v404
                $region95: #{tpu_custom_call.1} parent=82 // loop_footer
                  %s387 = sadd.s32 1, %s383
                $region96: #{tpu_custom_call.1} parent=82 // loop_footer_branch
                  %382 = sbr.rel target = $region92
                $region97: #{tpu_custom_call.1} parent=82 // loop_exit
                  _
              $region83: #{tpu_custom_call.1} parent=67 // pred_fallthru
                _
            $region68: #{tpu_custom_call.1} parent=63 // pred_fallthru
              _
            // Predicated region
            $region69: #{tpu_custom_call.1} parent=63 // pred_check
              _
            $region70: #{tpu_custom_call.1} parent=63 // pred_check_branch
              %345 = sbr.rel (0) target = $region72
            $region71: #{tpu_custom_call.1} parent=63 // pred_region
              loop: start=0, step=1, limit=1
              $region73: #{tpu_custom_call.1} parent=71 // loop_pre_header
                _
              $region74: #{tpu_custom_call.1} parent=71 // loop_header
                %s348 = sphi 0, %s352
                %p349 = scmp.ge.s32.totalorder %s348, 1
                %s353 = sphi %s339, %s339
                %s354 = sphi %s337, %s337
              $region75: #{tpu_custom_call.1} parent=71 // loop_header_branch
                %351 = sbr.rel (%p349) target = $region79
              $region76: #{tpu_custom_call.1} parent=71 // loop_body
                %v355 = vld [vmem:[%s353] sm:$0x3]
                %356 = vst [vmem:[%s354] sm:$0x3] %v355
                %v357 = vld [vmem:[%s353 + $0x4] sm:$0x3]
                %358 = vst [vmem:[%s354 + $0x2] sm:$0x3] %v357
                %v359 = vld [vmem:[%s353 + $0x8] sm:$0x3]
                %360 = vst [vmem:[%s354 + $0x4] sm:$0x3] %v359
                %v361 = vld [vmem:[%s353 + $0xc] sm:$0x3]
                %362 = vst [vmem:[%s354 + $0x6] sm:$0x3] %v361
                %v363 = vld [vmem:[%s353 + $0x10] sm:$0x3]
                %364 = vst [vmem:[%s354 + $0x8] sm:$0x3] %v363
                %v365 = vld [vmem:[%s353 + $0x14] sm:$0x3]
                %366 = vst [vmem:[%s354 + $0xa] sm:$0x3] %v365
                %v367 = vld [vmem:[%s353 + $0x18] sm:$0x3]
                %368 = vst [vmem:[%s354 + $0xc] sm:$0x3] %v367
                %v369 = vld [vmem:[%s353 + $0x1c] sm:$0x3]
                %370 = vst [vmem:[%s354 + $0xe] sm:$0x3] %v369
              $region77: #{tpu_custom_call.1} parent=71 // loop_footer
                %s352 = sadd.s32 1, %s348
              $region78: #{tpu_custom_call.1} parent=71 // loop_footer_branch
                %347 = sbr.rel target = $region74
              $region79: #{tpu_custom_call.1} parent=71 // loop_exit
                _
            $region72: #{tpu_custom_call.1} parent=63 // pred_fallthru
              _
          $region64: #{tpu_custom_call.1} parent=59 // pred_fallthru
            _
          %406 = vnop
        $region60: #{tpu_custom_call.1} parent=55 // pred_fallthru
          _
      $region56: #{tpu_custom_call.1} parent=5 // pred_fallthru
        _
      %p407 = scmp.le.s32.totalorder 1, %s20
      %p408 = scmp.lt.s32.totalorder %s20, 3
      %p409 = pnand %p407, %p408
      %p410 = pneg %p409
      // Predicated region
      $region98: #{tpu_custom_call.1} parent=5 // pred_check
        _
      $region99: #{tpu_custom_call.1} parent=5 // pred_check_branch
        %412 = sbr.rel (%p409) target = $region101
      $region100: #{tpu_custom_call.1} parent=5 // pred_region
        %s413 = ssub.s32 %s20, 1
        %s414 = sand.u32 %s33, 1
        %s415 = sand.u32 %s33, 1
        %s416 = smul.addr %s415, 16
        %s417 = scalar_lea.vmem [#allocation2], %s416
        // Predicated region
        $region102: #{tpu_custom_call.1} parent=100 // pred_check
          %p418 = pneg %p46
        $region103: #{tpu_custom_call.1} parent=100 // pred_check_branch
          %420 = sbr.rel (%p418) target = $region105
        $region104: #{tpu_custom_call.1} parent=100 // pred_region
          _
        $region105: #{tpu_custom_call.1} parent=100 // pred_fallthru
          _
        %s421 = sand.u32 %s33, 1
        %s422 = sand.u32 %s33, 1
        %s423 = smul.addr %s422, 16
        %s424 = scalar_lea.vmem [#allocation2], %s423
        %p425 = pneg %p46
        %p426 = pneg %p43
        %p427 = pneg %p67
        %p428 = pneg %p64
        %p429 = pneg %p88
        %p430 = pneg %p85
        %p431 = pneg %p109
        %p432 = pneg %p106
        %p433 = pneg %p130
        %p434 = pneg %p127
        %p435 = pneg %p151
        %p436 = pneg %p148
        %p437 = pneg %p172
        %p438 = pneg %p169
        %p439 = pneg %p193
        %p440 = pneg %p190
        %p441 = pneg %p214
        %p442 = pneg %p211
        %p443 = pneg %p235
        %p444 = pneg %p232
        %p445 = pneg %p256
        %p446 = pneg %p253
        %p447 = pneg %p282
        %p448 = pneg %p279
        %s449 = sand.u32 %s269, 1
        %s450 = scalar_lea.sflag [#allocation4], %s449
        %s451 = sand.u32 %s269, 1
        %s452 = smul.addr %s451, 512
        %s453 = scalar_lea.vmem [#allocation3], %s452
        %v455 = vld [vmem:[%s2] sm:$0xff]
        %v456 = vld [vmem:[%s2 + $0x8] sm:$0xff]
        %v457 = vld [vmem:[%s2 + $0x10] sm:$0xff]
        %v458 = vld [vmem:[%s2 + $0x18] sm:$0xff]
        %v459 = vld [vmem:[%s4] sm:$0xff]
        %v460 = vld [vmem:[%s4 + $0x8] sm:$0xff]
        %v461 = vld [vmem:[%s4 + $0x10] sm:$0xff]
        %v462 = vld [vmem:[%s4 + $0x18] sm:$0xff]
        %v463 = vld [vmem:[%s4 + $0x20] sm:$0xff]
        %v464 = vld [vmem:[%s4 + $0x28] sm:$0xff]
        %v465 = vld [vmem:[%s4 + $0x30] sm:$0xff]
        %v466 = vld [vmem:[%s4 + $0x38] sm:$0xff]
        %v467 = vld [vmem:[%s6] sm:$0xff]
        %v468 = vld [vmem:[%s6 + $0x8] sm:$0xff]
        %v469 = vld [vmem:[%s6 + $0x10] sm:$0xff]
        %v470 = vld [vmem:[%s6 + $0x18] sm:$0xff]
        %v471 = vld [vmem:[%s6 + $0x20] sm:$0xff]
        %v472 = vld [vmem:[%s6 + $0x28] sm:$0xff]
        %v473 = vld [vmem:[%s6 + $0x30] sm:$0xff]
        %v474 = vld [vmem:[%s6 + $0x38] sm:$0xff]
        %v475 = vld [vmem:[%s6 + $0x40] sm:$0xff]
        %v476 = vld [vmem:[%s6 + $0x48] sm:$0xff]
        %v477 = vld [vmem:[%s6 + $0x50] sm:$0xff]
        %v478 = vld [vmem:[%s6 + $0x58] sm:$0xff]
        %v479 = vld [vmem:[%s6 + $0x60] sm:$0xff]
        %v480 = vld [vmem:[%s6 + $0x68] sm:$0xff]
        %v481 = vld [vmem:[%s6 + $0x70] sm:$0xff]
        %v482 = vld [vmem:[%s6 + $0x78] sm:$0xff]
        %v483 = vld [vmem:[%s8] sm:$0xff]
        %v484 = vld [vmem:[%s8 + $0x8] sm:$0xff]
        %v485 = vld [vmem:[%s8 + $0x10] sm:$0xff]
        %v486 = vld [vmem:[%s8 + $0x18] sm:$0xff]
        %v487 = vld [vmem:[%s8 + $0x20] sm:$0xff]
        %v488 = vld [vmem:[%s8 + $0x28] sm:$0xff]
        %v489 = vld [vmem:[%s8 + $0x30] sm:$0xff]
        %v490 = vld [vmem:[%s8 + $0x38] sm:$0xff]
        %v491 = vld [vmem:[%s417] sm:$0x3]
        %v492 = vld [vmem:[%s1] sm:$0xf]
        %v493 = vld [vmem:[%s1 + $0x4] sm:$0xf]
        %v494 = vld [vmem:[%s1 + $0x8] sm:$0xf]
        %v495 = vld [vmem:[%s1 + $0xc] sm:$0xf]
        %497 = vset.pattern.permute.xlu0 0
        %498 = vperm.xlu0 %497, %v455
        %v499 = vpop.permute.xlu0 %498
        %502 = vset.pattern.permute.xlu0 0
        %503 = vperm.xlu0 %502, %v456
        %v504 = vpop.permute.xlu0 %503
        %507 = vset.pattern.permute.xlu0 0
        %508 = vperm.xlu0 %507, %v457
        %v509 = vpop.permute.xlu0 %508
        %512 = vset.pattern.permute.xlu0 0
        %513 = vperm.xlu0 %512, %v458
        %v514 = vpop.permute.xlu0 %513
        %v520 = vunpack.c.l.b16 %v492
        %v521 = vunpack.c.l.b16 %v493
        %v522 = vunpack.c.l.b16 %v494
        %v523 = vunpack.c.l.b16 %v495
        %v524 = vpack.c.b16 %v521, %v520
        %v525 = vpack.c.b16 %v523, %v522
        %vm526 = vcmask 31744
        %v528 = vsel %vm526, %v524, 0
        %v531 = vsel %vm526, %v525, 0
        %vm533 = vcmask 1041408
        %v535 = vsel %vm533, %v491, 0
        %537 = vmatprep.subr.bf16.mxu0 0
        %538 = vmatpush1.bf16.msra.mxu0 %v535
        %539 = vmatprep.subr.bf16.mxu0 0
        %540 = vmatpush1.bf16.msra.mxu0 0
        %541 = vmatprep.subr.bf16.mxu0 0
        %542 = vmatpush1.bf16.msra.mxu0 0
        %543 = vmatprep.subr.bf16.mxu0 0
        %544 = vmatpush1.bf16.msra.mxu0 0
        %545 = vmatprep.subr.bf16.mxu0 0
        %546 = vmatpush1.bf16.msra.mxu0 0
        %547 = vmatprep.subr.bf16.mxu0 0
        %548 = vmatpush1.bf16.msra.mxu0 0
        %549 = vmatprep.subr.bf16.mxu0 0
        %550 = vmatpush1.bf16.msra.mxu0 0
        %551 = vmatprep.subr.bf16.mxu0 0
        %552 = vmatpush1.bf16.msra.mxu0 0
        %553 = vmatprep.subr.bf16.mxu0 0
        %554 = vmatpush1.bf16.msra.mxu0 0
        %555 = vmatprep.subr.bf16.mxu0 0
        %556 = vmatpush1.bf16.msra.mxu0 0
        %557 = vmatprep.subr.bf16.mxu0 0
        %558 = vmatpush1.bf16.msra.mxu0 0
        %559 = vmatprep.subr.bf16.mxu0 0
        %560 = vmatpush1.bf16.msra.mxu0 0
        %561 = vmatprep.subr.bf16.mxu0 0
        %562 = vmatpush1.bf16.msra.mxu0 0
        %563 = vmatprep.subr.bf16.mxu0 0
        %564 = vmatpush1.bf16.msra.mxu0 0
        %565 = vmatprep.subr.bf16.mxu0 0
        %566 = vmatpush1.bf16.msra.mxu0 0
        %567 = vmatprep.subr.bf16.mxu0 0
        %568 = vmatpush1.bf16.msra.mxu0 0
        %569 = vmatprep.mubr.bf16.mxu0 0
        %570 = vmatmul.mubr.bf16.gmra.mrb[0].mxu0 %v528
        %v571 = vpop.f32.mrb[0].mxu0
        %v572 = vadd.f32 %v499, %v571
        %v573 = vpop.f32.mrb[0].mxu0
        %v574 = vpop.f32.mrb[0].mxu0
        %v575 = vadd.f32 %v504, %v574
        %v576 = vpop.f32.mrb[0].mxu0
        %577 = vmatprep.mubr.bf16.mxu0 0
        %578 = vmatmul.mubr.bf16.gmra.mrb[0].mxu0 %v531
        %v579 = vpop.f32.mrb[0].mxu0
        %v580 = vadd.f32 %v509, %v579
        %v581 = vpop.f32.mrb[0].mxu0
        %v582 = vpop.f32.mrb[0].mxu0
        %v583 = vadd.f32 %v514, %v582
        %v584 = vpop.f32.mrb[0].mxu0
        %585 = vdwg.mxu0
        %v586 = vmax.f32 %v572, 0.0
        %v587 = vmax.f32 %v575, 0.0
        %v588 = vmax.f32 %v580, 0.0
        %v589 = vmax.f32 %v583, 0.0
        %v590 = vpack.c.bf16 %v587, %v586
        %v591 = vpack.c.bf16 %v589, %v588
        %v592 = vld [vmem:[%s3] sm:$0xf]
        %v593 = vld [vmem:[%s3 + $0x4] sm:$0xf]
        %v594 = vld [vmem:[%s3 + $0x8] sm:$0xf]
        %v595 = vld [vmem:[%s3 + $0xc] sm:$0xf]
        %v596 = vld [vmem:[%s3 + $0x10] sm:$0xf]
        %v597 = vld [vmem:[%s3 + $0x14] sm:$0xf]
        %v598 = vld [vmem:[%s3 + $0x18] sm:$0xf]
        %v599 = vld [vmem:[%s3 + $0x1c] sm:$0xf]
        %601 = vset.pattern.permute.xlu0 0
        %602 = vperm.xlu0 %601, %v459
        %v603 = vpop.permute.xlu0 %602
        %606 = vset.pattern.permute.xlu0 0
        %607 = vperm.xlu0 %606, %v460
        %v608 = vpop.permute.xlu0 %607
        %611 = vset.pattern.permute.xlu0 0
        %612 = vperm.xlu0 %611, %v461
        %v613 = vpop.permute.xlu0 %612
        %616 = vset.pattern.permute.xlu0 0
        %617 = vperm.xlu0 %616, %v462
        %v618 = vpop.permute.xlu0 %617
        %621 = vset.pattern.permute.xlu0 0
        %622 = vperm.xlu0 %621, %v463
        %v623 = vpop.permute.xlu0 %622
        %626 = vset.pattern.permute.xlu0 0
        %627 = vperm.xlu0 %626, %v464
        %v628 = vpop.permute.xlu0 %627
        %631 = vset.pattern.permute.xlu0 0
        %632 = vperm.xlu0 %631, %v465
        %v633 = vpop.permute.xlu0 %632
        %636 = vset.pattern.permute.xlu0 0
        %637 = vperm.xlu0 %636, %v466
        %v638 = vpop.permute.xlu0 %637
        %v648 = vunpack.c.l.b16 %v592
        %v649 = vunpack.c.l.b16 %v593
        %v650 = vunpack.c.l.b16 %v594
        %v651 = vunpack.c.l.b16 %v595
        %v652 = vunpack.c.l.b16 %v596
        %v653 = vunpack.c.l.b16 %v597
        %v654 = vunpack.c.l.b16 %v598
        %v655 = vunpack.c.l.b16 %v599
        %v656 = vpack.c.b16 %v649, %v648
        %v657 = vpack.c.b16 %v651, %v650
        %v658 = vpack.c.b16 %v653, %v652
        %v659 = vpack.c.b16 %v655, %v654
        %vm660 = vcmask 261120
        %v662 = vsel %vm660, %v656, 0
        %v665 = vsel %vm660, %v657, 0
        %v668 = vsel %vm660, %v658, 0
        %v671 = vsel %vm660, %v659, 0
        %673 = vmatprep.subr.bf16.mxu0 0
        %674 = vmatpush1.bf16.msra.mxu0 %v590
        %675 = vmatprep.subr.bf16.mxu0 0
        %676 = vmatpush1.bf16.msra.mxu0 %v591
        %677 = vmatprep.subr.bf16.mxu0 0
        %678 = vmatpush1.bf16.msra.mxu0 0
        %679 = vmatprep.subr.bf16.mxu0 0
        %680 = vmatpush1.bf16.msra.mxu0 0
        %681 = vmatprep.subr.bf16.mxu0 0
        %682 = vmatpush1.bf16.msra.mxu0 0
        %683 = vmatprep.subr.bf16.mxu0 0
        %684 = vmatpush1.bf16.msra.mxu0 0
        %685 = vmatprep.subr.bf16.mxu0 0
        %686 = vmatpush1.bf16.msra.mxu0 0
        %687 = vmatprep.subr.bf16.mxu0 0
        %688 = vmatpush1.bf16.msra.mxu0 0
        %689 = vmatprep.subr.bf16.mxu0 0
        %690 = vmatpush1.bf16.msra.mxu0 0
        %691 = vmatprep.subr.bf16.mxu0 0
        %692 = vmatpush1.bf16.msra.mxu0 0
        %693 = vmatprep.subr.bf16.mxu0 0
        %694 = vmatpush1.bf16.msra.mxu0 0
        %695 = vmatprep.subr.bf16.mxu0 0
        %696 = vmatpush1.bf16.msra.mxu0 0
        %697 = vmatprep.subr.bf16.mxu0 0
        %698 = vmatpush1.bf16.msra.mxu0 0
        %699 = vmatprep.subr.bf16.mxu0 0
        %700 = vmatpush1.bf16.msra.mxu0 0
        %701 = vmatprep.subr.bf16.mxu0 0
        %702 = vmatpush1.bf16.msra.mxu0 0
        %703 = vmatprep.subr.bf16.mxu0 0
        %704 = vmatpush1.bf16.msra.mxu0 0
        %705 = vmatprep.mubr.bf16.mxu0 0
        %706 = vmatmul.mubr.bf16.gmra.mrb[0].mxu0 %v662
        %v707 = vpop.f32.mrb[0].mxu0
        %v708 = vadd.f32 %v603, %v707
        %v709 = vpop.f32.mrb[0].mxu0
        %v710 = vpop.f32.mrb[0].mxu0
        %v711 = vadd.f32 %v608, %v710
        %v712 = vpop.f32.mrb[0].mxu0
        %713 = vmatprep.mubr.bf16.mxu0 0
        %714 = vmatmul.mubr.bf16.gmra.mrb[0].mxu0 %v665
        %v715 = vpop.f32.mrb[0].mxu0
        %v716 = vadd.f32 %v613, %v715
        %v717 = vpop.f32.mrb[0].mxu0
        %v718 = vpop.f32.mrb[0].mxu0
        %v719 = vadd.f32 %v618, %v718
        %v720 = vpop.f32.mrb[0].mxu0
        %721 = vmatprep.mubr.bf16.mxu0 0
        %722 = vmatmul.mubr.bf16.gmra.mrb[0].mxu0 %v668
        %v723 = vpop.f32.mrb[0].mxu0
        %v724 = vadd.f32 %v623, %v723
        %v725 = vpop.f32.mrb[0].mxu0
        %v726 = vpop.f32.mrb[0].mxu0
        %v727 = vadd.f32 %v628, %v726
        %v728 = vpop.f32.mrb[0].mxu0
        %729 = vmatprep.mubr.bf16.mxu0 0
        %730 = vmatmul.mubr.bf16.gmra.mrb[0].mxu0 %v671
        %v731 = vpop.f32.mrb[0].mxu0
        %v732 = vadd.f32 %v633, %v731
        %v733 = vpop.f32.mrb[0].mxu0
        %v734 = vpop.f32.mrb[0].mxu0
        %v735 = vadd.f32 %v638, %v734
        %v736 = vpop.f32.mrb[0].mxu0
        %737 = vdwg.mxu0
        %v738 = vmax.f32 %v708, 0.0
        %v739 = vmax.f32 %v711, 0.0
        %v740 = vmax.f32 %v716, 0.0
        %v741 = vmax.f32 %v719, 0.0
        %v742 = vmax.f32 %v724, 0.0
        %v743 = vmax.f32 %v727, 0.0
        %v744 = vmax.f32 %v732, 0.0
        %v745 = vmax.f32 %v735, 0.0
        %v746 = vpack.c.bf16 %v739, %v738
        %v747 = vpack.c.bf16 %v741, %v740
        %v748 = vpack.c.bf16 %v743, %v742
        %v749 = vpack.c.bf16 %v745, %v744
        %v750 = vld [vmem:[%s5] sm:$0xf]
        %v751 = vld [vmem:[%s5 + $0x4] sm:$0xf]
        %v752 = vld [vmem:[%s5 + $0x8] sm:$0xf]
        %v753 = vld [vmem:[%s5 + $0xc] sm:$0xf]
        %v754 = vld [vmem:[%s5 + $0x10] sm:$0xf]
        %v755 = vld [vmem:[%s5 + $0x14] sm:$0xf]
        %v756 = vld [vmem:[%s5 + $0x18] sm:$0xf]
        %v757 = vld [vmem:[%s5 + $0x1c] sm:$0xf]
        %v758 = vld [vmem:[%s5 + $0x20] sm:$0xf]
        %v759 = vld [vmem:[%s5 + $0x24] sm:$0xf]
        %v760 = vld [vmem:[%s5 + $0x28] sm:$0xf]
        %v761 = vld [vmem:[%s5 + $0x2c] sm:$0xf]
        %v762 = vld [vmem:[%s5 + $0x30] sm:$0xf]
        %v763 = vld [vmem:[%s5 + $0x34] sm:$0xf]
        %v764 = vld [vmem:[%s5 + $0x38] sm:$0xf]
        %v765 = vld [vmem:[%s5 + $0x3c] sm:$0xf]
        %767 = vset.pattern.permute.xlu0 0
        %768 = vperm.xlu0 %767, %v467
        %v769 = vpop.permute.xlu0 %768
        %772 = vset.pattern.permute.xlu0 0
        %773 = vperm.xlu0 %772, %v468
        %v774 = vpop.permute.xlu0 %773
        %777 = vset.pattern.permute.xlu0 0
        %778 = vperm.xlu0 %777, %v469
        %v779 = vpop.permute.xlu0 %778
        %782 = vset.pattern.permute.xlu0 0
        %783 = vperm.xlu0 %782, %v470
        %v784 = vpop.permute.xlu0 %783
        %787 = vset.pattern.permute.xlu0 0
        %788 = vperm.xlu0 %787, %v471
        %v789 = vpop.permute.xlu0 %788
        %792 = vset.pattern.permute.xlu0 0
        %793 = vperm.xlu0 %792, %v472
        %v794 = vpop.permute.xlu0 %793
        %797 = vset.pattern.permute.xlu0 0
        %798 = vperm.xlu0 %797, %v473
        %v799 = vpop.permute.xlu0 %798
        %802 = vset.pattern.permute.xlu0 0
        %803 = vperm.xlu0 %802, %v474
        %v804 = vpop.permute.xlu0 %803
        %807 = vset.pattern.permute.xlu0 0
        %808 = vperm.xlu0 %807, %v475
        %v809 = vpop.permute.xlu0 %808
        %812 = vset.pattern.permute.xlu0 0
        %813 = vperm.xlu0 %812, %v476
        %v814 = vpop.permute.xlu0 %813
        %817 = vset.pattern.permute.xlu0 0
        %818 = vperm.xlu0 %817, %v477
        %v819 = vpop.permute.xlu0 %818
        %822 = vset.pattern.permute.xlu0 0
        %823 = vperm.xlu0 %822, %v478
        %v824 = vpop.permute.xlu0 %823
        %827 = vset.pattern.permute.xlu0 0
        %828 = vperm.xlu0 %827, %v479
        %v829 = vpop.permute.xlu0 %828
        %832 = vset.pattern.permute.xlu0 0
        %833 = vperm.xlu0 %832, %v480
        %v834 = vpop.permute.xlu0 %833
        %837 = vset.pattern.permute.xlu0 0
        %838 = vperm.xlu0 %837, %v481
        %v839 = vpop.permute.xlu0 %838
        %842 = vset.pattern.permute.xlu0 0
        %843 = vperm.xlu0 %842, %v482
        %v844 = vpop.permute.xlu0 %843
        %v862 = vunpack.c.l.b16 %v750
        %v863 = vunpack.c.l.b16 %v751
        %v864 = vunpack.c.l.b16 %v752
        %v865 = vunpack.c.l.b16 %v753
        %v866 = vunpack.c.l.b16 %v754
        %v867 = vunpack.c.l.b16 %v755
        %v868 = vunpack.c.l.b16 %v756
        %v869 = vunpack.c.l.b16 %v757
        %v870 = vunpack.c.l.b16 %v758
        %v871 = vunpack.c.l.b16 %v759
        %v872 = vunpack.c.l.b16 %v760
        %v873 = vunpack.c.l.b16 %v761
        %v874 = vunpack.c.l.b16 %v762
        %v875 = vunpack.c.l.b16 %v763
        %v876 = vunpack.c.l.b16 %v764
        %v877 = vunpack.c.l.b16 %v765
        %v878 = vpack.c.b16 %v863, %v862
        %v879 = vpack.c.b16 %v865, %v864
        %v880 = vpack.c.b16 %v867, %v866
        %v881 = vpack.c.b16 %v869, %v868
        %v882 = vpack.c.b16 %v871, %v870
        %v883 = vpack.c.b16 %v873, %v872
        %v884 = vpack.c.b16 %v875, %v874
        %v885 = vpack.c.b16 %v877, %v876
        %vm886 = vcmask 523264
        %v888 = vsel %vm886, %v878, 0
        %v891 = vsel %vm886, %v879, 0
        %v894 = vsel %vm886, %v880, 0
        %v897 = vsel %vm886, %v881, 0
        %v900 = vsel %vm886, %v882, 0
        %v903 = vsel %vm886, %v883, 0
        %v906 = vsel %vm886, %v884, 0
        %v909 = vsel %vm886, %v885, 0
        %911 = vmatprep.subr.bf16.mxu0 0
        %912 = vmatpush1.bf16.msra.mxu0 %v746
        %913 = vmatprep.subr.bf16.mxu0 0
        %914 = vmatpush1.bf16.msra.mxu0 %v747
        %915 = vmatprep.subr.bf16.mxu0 0
        %916 = vmatpush1.bf16.msra.mxu0 %v748
        %917 = vmatprep.subr.bf16.mxu0 0
        %918 = vmatpush1.bf16.msra.mxu0 %v749
        %919 = vmatprep.subr.bf16.mxu0 0
        %920 = vmatpush1.bf16.msra.mxu0 0
        %921 = vmatprep.subr.bf16.mxu0 0
        %922 = vmatpush1.bf16.msra.mxu0 0
        %923 = vmatprep.subr.bf16.mxu0 0
        %924 = vmatpush1.bf16.msra.mxu0 0
        %925 = vmatprep.subr.bf16.mxu0 0
        %926 = vmatpush1.bf16.msra.mxu0 0
        %927 = vmatprep.subr.bf16.mxu0 0
        %928 = vmatpush1.bf16.msra.mxu0 0
        %929 = vmatprep.subr.bf16.mxu0 0
        %930 = vmatpush1.bf16.msra.mxu0 0
        %931 = vmatprep.subr.bf16.mxu0 0
        %932 = vmatpush1.bf16.msra.mxu0 0
        %933 = vmatprep.subr.bf16.mxu0 0
        %934 = vmatpush1.bf16.msra.mxu0 0
        %935 = vmatprep.subr.bf16.mxu0 0
        %936 = vmatpush1.bf16.msra.mxu0 0
        %937 = vmatprep.subr.bf16.mxu0 0
        %938 = vmatpush1.bf16.msra.mxu0 0
        %939 = vmatprep.subr.bf16.mxu0 0
        %940 = vmatpush1.bf16.msra.mxu0 0
        %941 = vmatprep.subr.bf16.mxu0 0
        %942 = vmatpush1.bf16.msra.mxu0 0
        %943 = vmatprep.mubr.bf16.mxu0 0
        %944 = vmatmul.mubr.bf16.gmra.mrb[0].mxu0 %v888
        %v945 = vpop.f32.mrb[0].mxu0
        %v946 = vadd.f32 %v769, %v945
        %v947 = vpop.f32.mrb[0].mxu0
        %v948 = vpop.f32.mrb[0].mxu0
        %v949 = vadd.f32 %v774, %v948
        %v950 = vpop.f32.mrb[0].mxu0
        %951 = vmatprep.mubr.bf16.mxu0 0
        %952 = vmatmul.mubr.bf16.gmra.mrb[0].mxu0 %v891
        %v953 = vpop.f32.mrb[0].mxu0
        %v954 = vadd.f32 %v779, %v953
        %v955 = vpop.f32.mrb[0].mxu0
        %v956 = vpop.f32.mrb[0].mxu0
        %v957 = vadd.f32 %v784, %v956
        %v958 = vpop.f32.mrb[0].mxu0
        %959 = vmatprep.mubr.bf16.mxu0 0
        %960 = vmatmul.mubr.bf16.gmra.mrb[0].mxu0 %v894
        %v961 = vpop.f32.mrb[0].mxu0
        %v962 = vadd.f32 %v789, %v961
        %v963 = vpop.f32.mrb[0].mxu0
        %v964 = vpop.f32.mrb[0].mxu0
        %v965 = vadd.f32 %v794, %v964
        %v966 = vpop.f32.mrb[0].mxu0
        %967 = vmatprep.mubr.bf16.mxu0 0
        %968 = vmatmul.mubr.bf16.gmra.mrb[0].mxu0 %v897
        %v969 = vpop.f32.mrb[0].mxu0
        %v970 = vadd.f32 %v799, %v969
        %v971 = vpop.f32.mrb[0].mxu0
        %v972 = vpop.f32.mrb[0].mxu0
        %v973 = vadd.f32 %v804, %v972
        %v974 = vpop.f32.mrb[0].mxu0
        %975 = vmatprep.mubr.bf16.mxu0 0
        %976 = vmatmul.mubr.bf16.gmra.mrb[0].mxu0 %v900
        %v977 = vpop.f32.mrb[0].mxu0
        %v978 = vadd.f32 %v809, %v977
        %v979 = vpop.f32.mrb[0].mxu0
        %v980 = vpop.f32.mrb[0].mxu0
        %v981 = vadd.f32 %v814, %v980
        %v982 = vpop.f32.mrb[0].mxu0
        %983 = vmatprep.mubr.bf16.mxu0 0
        %984 = vmatmul.mubr.bf16.gmra.mrb[0].mxu0 %v903
        %v985 = vpop.f32.mrb[0].mxu0
        %v986 = vadd.f32 %v819, %v985
        %v987 = vpop.f32.mrb[0].mxu0
        %v988 = vpop.f32.mrb[0].mxu0
        %v989 = vadd.f32 %v824, %v988
        %v990 = vpop.f32.mrb[0].mxu0
        %991 = vmatprep.mubr.bf16.mxu0 0
        %992 = vmatmul.mubr.bf16.gmra.mrb[0].mxu0 %v906
        %v993 = vpop.f32.mrb[0].mxu0
        %v994 = vadd.f32 %v829, %v993
        %v995 = vpop.f32.mrb[0].mxu0
        %v996 = vpop.f32.mrb[0].mxu0
        %v997 = vadd.f32 %v834, %v996
        %v998 = vpop.f32.mrb[0].mxu0
        %999 = vmatprep.mubr.bf16.mxu0 0
        %1000 = vmatmul.mubr.bf16.gmra.mrb[0].mxu0 %v909
        %v1001 = vpop.f32.mrb[0].mxu0
        %v1002 = vadd.f32 %v839, %v1001
        %v1003 = vpop.f32.mrb[0].mxu0
        %v1004 = vpop.f32.mrb[0].mxu0
        %v1005 = vadd.f32 %v844, %v1004
        %v1006 = vpop.f32.mrb[0].mxu0
        %1007 = vdwg.mxu0
        %v1008 = vmax.f32 %v946, 0.0
        %v1009 = vmax.f32 %v949, 0.0
        %v1010 = vmax.f32 %v954, 0.0
        %v1011 = vmax.f32 %v957, 0.0
        %v1012 = vmax.f32 %v962, 0.0
        %v1013 = vmax.f32 %v965, 0.0
        %v1014 = vmax.f32 %v970, 0.0
        %v1015 = vmax.f32 %v973, 0.0
        %v1016 = vmax.f32 %v978, 0.0
        %v1017 = vmax.f32 %v981, 0.0
        %v1018 = vmax.f32 %v986, 0.0
        %v1019 = vmax.f32 %v989, 0.0
        %v1020 = vmax.f32 %v994, 0.0
        %v1021 = vmax.f32 %v997, 0.0
        %v1022 = vmax.f32 %v1002, 0.0
        %v1023 = vmax.f32 %v1005, 0.0
        %v1024 = vpack.c.bf16 %v1009, %v1008
        %v1025 = vpack.c.bf16 %v1011, %v1010
        %v1026 = vpack.c.bf16 %v1013, %v1012
        %v1027 = vpack.c.bf16 %v1015, %v1014
        %v1028 = vpack.c.bf16 %v1017, %v1016
        %v1029 = vpack.c.bf16 %v1019, %v1018
        %v1030 = vpack.c.bf16 %v1021, %v1020
        %v1031 = vpack.c.bf16 %v1023, %v1022
        %v1032 = vld [vmem:[%s7] sm:$0xf]
        %v1033 = vld [vmem:[%s7 + $0x4] sm:$0xf]
        %v1034 = vld [vmem:[%s7 + $0x8] sm:$0xf]
        %v1035 = vld [vmem:[%s7 + $0xc] sm:$0xf]
        %v1036 = vld [vmem:[%s7 + $0x10] sm:$0xf]
        %v1037 = vld [vmem:[%s7 + $0x14] sm:$0xf]
        %v1038 = vld [vmem:[%s7 + $0x18] sm:$0xf]
        %v1039 = vld [vmem:[%s7 + $0x1c] sm:$0xf]
        %1041 = vset.pattern.permute.xlu0 0
        %1042 = vperm.xlu0 %1041, %v483
        %v1043 = vpop.permute.xlu0 %1042
        %1046 = vset.pattern.permute.xlu0 0
        %1047 = vperm.xlu0 %1046, %v484
        %v1048 = vpop.permute.xlu0 %1047
        %1051 = vset.pattern.permute.xlu0 0
        %1052 = vperm.xlu0 %1051, %v485
        %v1053 = vpop.permute.xlu0 %1052
        %1056 = vset.pattern.permute.xlu0 0
        %1057 = vperm.xlu0 %1056, %v486
        %v1058 = vpop.permute.xlu0 %1057
        %1061 = vset.pattern.permute.xlu0 0
        %1062 = vperm.xlu0 %1061, %v487
        %v1063 = vpop.permute.xlu0 %1062
        %1066 = vset.pattern.permute.xlu0 0
        %1067 = vperm.xlu0 %1066, %v488
        %v1068 = vpop.permute.xlu0 %1067
        %1071 = vset.pattern.permute.xlu0 0
        %1072 = vperm.xlu0 %1071, %v489
        %v1073 = vpop.permute.xlu0 %1072
        %1076 = vset.pattern.permute.xlu0 0
        %1077 = vperm.xlu0 %1076, %v490
        %v1078 = vpop.permute.xlu0 %1077
        %v1088 = vunpack.c.l.b16 %v1032
        %v1089 = vunpack.c.l.b16 %v1033
        %v1090 = vunpack.c.l.b16 %v1034
        %v1091 = vunpack.c.l.b16 %v1035
        %v1092 = vunpack.c.l.b16 %v1036
        %v1093 = vunpack.c.l.b16 %v1037
        %v1094 = vunpack.c.l.b16 %v1038
        %v1095 = vunpack.c.l.b16 %v1039
        %v1096 = vpack.c.b16 %v1089, %v1088
        %v1097 = vpack.c.b16 %v1091, %v1090
        %v1098 = vpack.c.b16 %v1093, %v1092
        %v1099 = vpack.c.b16 %v1095, %v1094
        %1104 = vmatprep.subr.bf16.mxu0 0
        %1105 = vmatpush1.bf16.msra.mxu0 %v1024
        %1106 = vmatprep.subr.bf16.mxu0 0
        %1107 = vmatpush1.bf16.msra.mxu0 %v1025
        %1108 = vmatprep.subr.bf16.mxu0 0
        %1109 = vmatpush1.bf16.msra.mxu0 %v1026
        %1110 = vmatprep.subr.bf16.mxu0 0
        %1111 = vmatpush1.bf16.msra.mxu0 %v1027
        %1112 = vmatprep.subr.bf16.mxu0 0
        %1113 = vmatpush1.bf16.msra.mxu0 %v1028
        %1114 = vmatprep.subr.bf16.mxu0 0
        %1115 = vmatpush1.bf16.msra.mxu0 %v1029
        %1116 = vmatprep.subr.bf16.mxu0 0
        %1117 = vmatpush1.bf16.msra.mxu0 %v1030
        %1118 = vmatprep.subr.bf16.mxu0 0
        %1119 = vmatpush1.bf16.msra.mxu0 %v1031
        %1120 = vmatprep.subr.bf16.mxu0 0
        %1121 = vmatpush1.bf16.msra.mxu0 0
        %1122 = vmatprep.subr.bf16.mxu0 0
        %1123 = vmatpush1.bf16.msra.mxu0 0
        %1124 = vmatprep.subr.bf16.mxu0 0
        %1125 = vmatpush1.bf16.msra.mxu0 0
        %1126 = vmatprep.subr.bf16.mxu0 0
        %1127 = vmatpush1.bf16.msra.mxu0 0
        %1128 = vmatprep.subr.bf16.mxu0 0
        %1129 = vmatpush1.bf16.msra.mxu0 0
        %1130 = vmatprep.subr.bf16.mxu0 0
        %1131 = vmatpush1.bf16.msra.mxu0 0
        %1132 = vmatprep.subr.bf16.mxu0 0
        %1133 = vmatpush1.bf16.msra.mxu0 0
        %1134 = vmatprep.subr.bf16.mxu0 0
        %1135 = vmatpush1.bf16.msra.mxu0 0
        %1136 = vmatprep.mubr.bf16.mxu0 0
        %1137 = vmatmul.mubr.bf16.gmra.mrb[0].mxu0 %v1096
        %v1138 = vpop.f32.mrb[0].mxu0
        %v1139 = vadd.f32 %v1043, %v1138
        %v1140 = vpop.f32.mrb[0].mxu0
        %v1141 = vpop.f32.mrb[0].mxu0
        %v1142 = vadd.f32 %v1048, %v1141
        %v1143 = vpop.f32.mrb[0].mxu0
        %1144 = vmatprep.mubr.bf16.mxu0 0
        %1145 = vmatmul.mubr.bf16.gmra.mrb[0].mxu0 %v1097
        %v1146 = vpop.f32.mrb[0].mxu0
        %v1147 = vadd.f32 %v1053, %v1146
        %v1148 = vpop.f32.mrb[0].mxu0
        %v1149 = vpop.f32.mrb[0].mxu0
        %v1150 = vadd.f32 %v1058, %v1149
        %v1151 = vpop.f32.mrb[0].mxu0
        %1152 = vmatprep.mubr.bf16.mxu0 0
        %1153 = vmatmul.mubr.bf16.gmra.mrb[0].mxu0 %v1098
        %v1154 = vpop.f32.mrb[0].mxu0
        %v1155 = vadd.f32 %v1063, %v1154
        %v1156 = vpop.f32.mrb[0].mxu0
        %v1157 = vpop.f32.mrb[0].mxu0
        %v1158 = vadd.f32 %v1068, %v1157
        %v1159 = vpop.f32.mrb[0].mxu0
        %1160 = vmatprep.mubr.bf16.mxu0 0
        %1161 = vmatmul.mubr.bf16.gmra.mrb[0].mxu0 %v1099
        %v1162 = vpop.f32.mrb[0].mxu0
        %v1163 = vadd.f32 %v1073, %v1162
        %v1164 = vpop.f32.mrb[0].mxu0
        %v1165 = vpop.f32.mrb[0].mxu0
        %v1166 = vadd.f32 %v1078, %v1165
        %v1167 = vpop.f32.mrb[0].mxu0
        %1168 = vdwg.mxu0
        %v1169 = vmax.f32 %v1139, 0.0
        %v1170 = vmax.f32 %v1142, 0.0
        %v1171 = vmax.f32 %v1147, 0.0
        %v1172 = vmax.f32 %v1150, 0.0
        %v1173 = vmax.f32 %v1155, 0.0
        %v1174 = vmax.f32 %v1158, 0.0
        %v1175 = vmax.f32 %v1163, 0.0
        %v1176 = vmax.f32 %v1166, 0.0
        %v1177 = vpack.c.bf16 %v1170, %v1169
        %v1178 = vpack.c.bf16 %v1172, %v1171
        %v1179 = vpack.c.bf16 %v1174, %v1173
        %v1180 = vpack.c.bf16 %v1176, %v1175
        %v1181 = vmax.bf16 %v590, 0
        %v1182 = vmax.bf16 %v591, 0
        %v1183 = vmax.bf16 %v746, 0
        %v1184 = vmax.bf16 %v747, 0
        %v1185 = vmax.bf16 %v748, 0
        %v1186 = vmax.bf16 %v749, 0
        %v1187 = vmax.bf16 %v1024, 0
        %v1188 = vmax.bf16 %v1025, 0
        %v1189 = vmax.bf16 %v1026, 0
        %v1190 = vmax.bf16 %v1027, 0
        %v1191 = vmax.bf16 %v1028, 0
        %v1192 = vmax.bf16 %v1029, 0
        %v1193 = vmax.bf16 %v1030, 0
        %v1194 = vmax.bf16 %v1031, 0
        %v1195 = vmax.bf16 %v1177, 0
        %v1196 = vmax.bf16 %v1178, 0
        %v1197 = vmax.bf16 %v1179, 0
        %v1198 = vmax.bf16 %v1180, 0
        %s1199 = scalar_lea.vmem %s417, 2 [#allocation2]
        %v1200 = vld [vmem:[%s1199] sm:$0x3]
        %v1202 = vsel %vm533, %v1200, 0
        %1204 = vmatprep.subr.bf16.mxu0 0
        %1205 = vmatpush1.bf16.msra.mxu0 %v1202
        %1206 = vmatprep.subr.bf16.mxu0 0
        %1207 = vmatpush1.bf16.msra.mxu0 0
        %1208 = vmatprep.subr.bf16.mxu0 0
        %1209 = vmatpush1.bf16.msra.mxu0 0
        %1210 = vmatprep.subr.bf16.mxu0 0
        %1211 = vmatpush1.bf16.msra.mxu0 0
        %1212 = vmatprep.subr.bf16.mxu0 0
        %1213 = vmatpush1.bf16.msra.mxu0 0
        %1214 = vmatprep.subr.bf16.mxu0 0
        %1215 = vmatpush1.bf16.msra.mxu0 0
        %1216 = vmatprep.subr.bf16.mxu0 0
        %1217 = vmatpush1.bf16.msra.mxu0 0
        %1218 = vmatprep.subr.bf16.mxu0 0
        %1219 = vmatpush1.bf16.msra.mxu0 0
        %1220 = vmatprep.subr.bf16.mxu0 0
        %1221 = vmatpush1.bf16.msra.mxu0 0
        %1222 = vmatprep.subr.bf16.mxu0 0
        %1223 = vmatpush1.bf16.msra.mxu0 0
        %1224 = vmatprep.subr.bf16.mxu0 0
        %1225 = vmatpush1.bf16.msra.mxu0 0
        %1226 = vmatprep.subr.bf16.mxu0 0
        %1227 = vmatpush1.bf16.msra.mxu0 0
        %1228 = vmatprep.subr.bf16.mxu0 0
        %1229 = vmatpush1.bf16.msra.mxu0 0
        %1230 = vmatprep.subr.bf16.mxu0 0
        %1231 = vmatpush1.bf16.msra.mxu0 0
        %1232 = vmatprep.subr.bf16.mxu0 0
        %1233 = vmatpush1.bf16.msra.mxu0 0
        %1234 = vmatprep.subr.bf16.mxu0 0
        %1235 = vmatpush1.bf16.msra.mxu0 0
        %1236 = vmatprep.mubr.bf16.mxu0 0
        %1237 = vmatmul.mubr.bf16.gmra.mrb[0].mxu0 %v528
        %v1238 = vpop.f32.mrb[0].mxu0
        %v1239 = vadd.f32 %v499, %v1238
        %v1240 = vpop.f32.mrb[0].mxu0
        %v1241 = vpop.f32.mrb[0].mxu0
        %v1242 = vadd.f32 %v504, %v1241
        %v1243 = vpop.f32.mrb[0].mxu0
        %1244 = vmatprep.mubr.bf16.mxu0 0
        %1245 = vmatmul.mubr.bf16.gmra.mrb[0].mxu0 %v531
        %v1246 = vpop.f32.mrb[0].mxu0
        %v1247 = vadd.f32 %v509, %v1246
        %v1248 = vpop.f32.mrb[0].mxu0
        %v1249 = vpop.f32.mrb[0].mxu0
        %v1250 = vadd.f32 %v514, %v1249
        %v1251 = vpop.f32.mrb[0].mxu0
        %1252 = vdwg.mxu0
        %v1253 = vmax.f32 %v1239, 0.0
        %v1254 = vmax.f32 %v1242, 0.0
        %v1255 = vmax.f32 %v1247, 0.0
        %v1256 = vmax.f32 %v1250, 0.0
        %v1257 = vpack.c.bf16 %v1254, %v1253
        %v1258 = vpack.c.bf16 %v1256, %v1255
        %1259 = vmatprep.subr.bf16.mxu0 0
        %1260 = vmatpush1.bf16.msra.mxu0 %v1257
        %1261 = vmatprep.subr.bf16.mxu0 0
        %1262 = vmatpush1.bf16.msra.mxu0 %v1258
        %1263 = vmatprep.subr.bf16.mxu0 0
        %1264 = vmatpush1.bf16.msra.mxu0 0
        %1265 = vmatprep.subr.bf16.mxu0 0
        %1266 = vmatpush1.bf16.msra.mxu0 0
        %1267 = vmatprep.subr.bf16.mxu0 0
        %1268 = vmatpush1.bf16.msra.mxu0 0
        %1269 = vmatprep.subr.bf16.mxu0 0
        %1270 = vmatpush1.bf16.msra.mxu0 0
        %1271 = vmatprep.subr.bf16.mxu0 0
        %1272 = vmatpush1.bf16.msra.mxu0 0
        %1273 = vmatprep.subr.bf16.mxu0 0
        %1274 = vmatpush1.bf16.msra.mxu0 0
        %1275 = vmatprep.subr.bf16.mxu0 0
        %1276 = vmatpush1.bf16.msra.mxu0 0
        %1277 = vmatprep.subr.bf16.mxu0 0
        %1278 = vmatpush1.bf16.msra.mxu0 0
        %1279 = vmatprep.subr.bf16.mxu0 0
        %1280 = vmatpush1.bf16.msra.mxu0 0
        %1281 = vmatprep.subr.bf16.mxu0 0
        %1282 = vmatpush1.bf16.msra.mxu0 0
        %1283 = vmatprep.subr.bf16.mxu0 0
        %1284 = vmatpush1.bf16.msra.mxu0 0
        %1285 = vmatprep.subr.bf16.mxu0 0
        %1286 = vmatpush1.bf16.msra.mxu0 0
        %1287 = vmatprep.subr.bf16.mxu0 0
        %1288 = vmatpush1.bf16.msra.mxu0 0
        %1289 = vmatprep.subr.bf16.mxu0 0
        %1290 = vmatpush1.bf16.msra.mxu0 0
        %1291 = vmatprep.mubr.bf16.mxu0 0
        %1292 = vmatmul.mubr.bf16.gmra.mrb[0].mxu0 %v662
        %v1293 = vpop.f32.mrb[0].mxu0
        %v1294 = vadd.f32 %v603, %v1293
        %v1295 = vpop.f32.mrb[0].mxu0
        %v1296 = vpop.f32.mrb[0].mxu0
        %v1297 = vadd.f32 %v608, %v1296
        %v1298 = vpop.f32.mrb[0].mxu0
        %1299 = vmatprep.mubr.bf16.mxu0 0
        %1300 = vmatmul.mubr.bf16.gmra.mrb[0].mxu0 %v665
        %v1301 = vpop.f32.mrb[0].mxu0
        %v1302 = vadd.f32 %v613, %v1301
        %v1303 = vpop.f32.mrb[0].mxu0
        %v1304 = vpop.f32.mrb[0].mxu0
        %v1305 = vadd.f32 %v618, %v1304
        %v1306 = vpop.f32.mrb[0].mxu0
        %1307 = vmatprep.mubr.bf16.mxu0 0
        %1308 = vmatmul.mubr.bf16.gmra.mrb[0].mxu0 %v668
        %v1309 = vpop.f32.mrb[0].mxu0
        %v1310 = vadd.f32 %v623, %v1309
        %v1311 = vpop.f32.mrb[0].mxu0
        %v1312 = vpop.f32.mrb[0].mxu0
        %v1313 = vadd.f32 %v628, %v1312
        %v1314 = vpop.f32.mrb[0].mxu0
        %1315 = vmatprep.mubr.bf16.mxu0 0
        %1316 = vmatmul.mubr.bf16.gmra.mrb[0].mxu0 %v671
        %v1317 = vpop.f32.mrb[0].mxu0
        %v1318 = vadd.f32 %v633, %v1317
        %v1319 = vpop.f32.mrb[0].mxu0
        %v1320 = vpop.f32.mrb[0].mxu0
        %v1321 = vadd.f32 %v638, %v1320
        %v1322 = vpop.f32.mrb[0].mxu0
        %1323 = vdwg.mxu0
        %v1324 = vmax.f32 %v1294, 0.0
        %v1325 = vmax.f32 %v1297, 0.0
        %v1326 = vmax.f32 %v1302, 0.0
        %v1327 = vmax.f32 %v1305, 0.0
        %v1328 = vmax.f32 %v1310, 0.0
        %v1329 = vmax.f32 %v1313, 0.0
        %v1330 = vmax.f32 %v1318, 0.0
        %v1331 = vmax.f32 %v1321, 0.0
        %v1332 = vpack.c.bf16 %v1325, %v1324
        %v1333 = vpack.c.bf16 %v1327, %v1326
        %v1334 = vpack.c.bf16 %v1329, %v1328
        %v1335 = vpack.c.bf16 %v1331, %v1330
        %1336 = vmatprep.subr.bf16.mxu0 0
        %1337 = vmatpush1.bf16.msra.mxu0 %v1332
        %1338 = vmatprep.subr.bf16.mxu0 0
        %1339 = vmatpush1.bf16.msra.mxu0 %v1333
        %1340 = vmatprep.subr.bf16.mxu0 0
        %1341 = vmatpush1.bf16.msra.mxu0 %v1334
        %1342 = vmatprep.subr.bf16.mxu0 0
        %1343 = vmatpush1.bf16.msra.mxu0 %v1335
        %1344 = vmatprep.subr.bf16.mxu0 0
        %1345 = vmatpush1.bf16.msra.mxu0 0
        %1346 = vmatprep.subr.bf16.mxu0 0
        %1347 = vmatpush1.bf16.msra.mxu0 0
        %1348 = vmatprep.subr.bf16.mxu0 0
        %1349 = vmatpush1.bf16.msra.mxu0 0
        %1350 = vmatprep.subr.bf16.mxu0 0
        %1351 = vmatpush1.bf16.msra.mxu0 0
        %1352 = vmatprep.subr.bf16.mxu0 0
        %1353 = vmatpush1.bf16.msra.mxu0 0
        %1354 = vmatprep.subr.bf16.mxu0 0
        %1355 = vmatpush1.bf16.msra.mxu0 0
        %1356 = vmatprep.subr.bf16.mxu0 0
        %1357 = vmatpush1.bf16.msra.mxu0 0
        %1358 = vmatprep.subr.bf16.mxu0 0
        %1359 = vmatpush1.bf16.msra.mxu0 0
        %1360 = vmatprep.subr.bf16.mxu0 0
        %1361 = vmatpush1.bf16.msra.mxu0 0
        %1362 = vmatprep.subr.bf16.mxu0 0
        %1363 = vmatpush1.bf16.msra.mxu0 0
        %1364 = vmatprep.subr.bf16.mxu0 0
        %1365 = vmatpush1.bf16.msra.mxu0 0
        %1366 = vmatprep.subr.bf16.mxu0 0
        %1367 = vmatpush1.bf16.msra.mxu0 0
        %1368 = vmatprep.mubr.bf16.mxu0 0
        %1369 = vmatmul.mubr.bf16.gmra.mrb[0].mxu0 %v888
        %v1370 = vpop.f32.mrb[0].mxu0
        %v1371 = vadd.f32 %v769, %v1370
        %v1372 = vpop.f32.mrb[0].mxu0
        %v1373 = vpop.f32.mrb[0].mxu0
        %v1374 = vadd.f32 %v774, %v1373
        %v1375 = vpop.f32.mrb[0].mxu0
        %1376 = vmatprep.mubr.bf16.mxu0 0
        %1377 = vmatmul.mubr.bf16.gmra.mrb[0].mxu0 %v891
        %v1378 = vpop.f32.mrb[0].mxu0
        %v1379 = vadd.f32 %v779, %v1378
        %v1380 = vpop.f32.mrb[0].mxu0
        %v1381 = vpop.f32.mrb[0].mxu0
        %v1382 = vadd.f32 %v784, %v1381
        %v1383 = vpop.f32.mrb[0].mxu0
        %1384 = vmatprep.mubr.bf16.mxu0 0
        %1385 = vmatmul.mubr.bf16.gmra.mrb[0].mxu0 %v894
        %v1386 = vpop.f32.mrb[0].mxu0
        %v1387 = vadd.f32 %v789, %v1386
        %v1388 = vpop.f32.mrb[0].mxu0
        %v1389 = vpop.f32.mrb[0].mxu0
        %v1390 = vadd.f32 %v794, %v1389
        %v1391 = vpop.f32.mrb[0].mxu0
        %1392 = vmatprep.mubr.bf16.mxu0 0
        %1393 = vmatmul.mubr.bf16.gmra.mrb[0].mxu0 %v897
        %v1394 = vpop.f32.mrb[0].mxu0
        %v1395 = vadd.f32 %v799, %v1394
        %v1396 = vpop.f32.mrb[0].mxu0
        %v1397 = vpop.f32.mrb[0].mxu0
        %v1398 = vadd.f32 %v804, %v1397
        %v1399 = vpop.f32.mrb[0].mxu0
        %1400 = vmatprep.mubr.bf16.mxu0 0
        %1401 = vmatmul.mubr.bf16.gmra.mrb[0].mxu0 %v900
        %v1402 = vpop.f32.mrb[0].mxu0
        %v1403 = vadd.f32 %v809, %v1402
        %v1404 = vpop.f32.mrb[0].mxu0
        %v1405 = vpop.f32.mrb[0].mxu0
        %v1406 = vadd.f32 %v814, %v1405
        %v1407 = vpop.f32.mrb[0].mxu0
        %1408 = vmatprep.mubr.bf16.mxu0 0
        %1409 = vmatmul.mubr.bf16.gmra.mrb[0].mxu0 %v903
        %v1410 = vpop.f32.mrb[0].mxu0
        %v1411 = vadd.f32 %v819, %v1410
        %v1412 = vpop.f32.mrb[0].mxu0
        %v1413 = vpop.f32.mrb[0].mxu0
        %v1414 = vadd.f32 %v824, %v1413
        %v1415 = vpop.f32.mrb[0].mxu0
        %1416 = vmatprep.mubr.bf16.mxu0 0
        %1417 = vmatmul.mubr.bf16.gmra.mrb[0].mxu0 %v906
        %v1418 = vpop.f32.mrb[0].mxu0
        %v1419 = vadd.f32 %v829, %v1418
        %v1420 = vpop.f32.mrb[0].mxu0
        %v1421 = vpop.f32.mrb[0].mxu0
        %v1422 = vadd.f32 %v834, %v1421
        %v1423 = vpop.f32.mrb[0].mxu0
        %1424 = vmatprep.mubr.bf16.mxu0 0
        %1425 = vmatmul.mubr.bf16.gmra.mrb[0].mxu0 %v909
        %v1426 = vpop.f32.mrb[0].mxu0
        %v1427 = vadd.f32 %v839, %v1426
        %v1428 = vpop.f32.mrb[0].mxu0
        %v1429 = vpop.f32.mrb[0].mxu0
        %v1430 = vadd.f32 %v844, %v1429
        %v1431 = vpop.f32.mrb[0].mxu0
        %1432 = vdwg.mxu0
        %v1433 = vmax.f32 %v1371, 0.0
        %v1434 = vmax.f32 %v1374, 0.0
        %v1435 = vmax.f32 %v1379, 0.0
        %v1436 = vmax.f32 %v1382, 0.0
        %v1437 = vmax.f32 %v1387, 0.0
        %v1438 = vmax.f32 %v1390, 0.0
        %v1439 = vmax.f32 %v1395, 0.0
        %v1440 = vmax.f32 %v1398, 0.0
        %v1441 = vmax.f32 %v1403, 0.0
        %v1442 = vmax.f32 %v1406, 0.0
        %v1443 = vmax.f32 %v1411, 0.0
        %v1444 = vmax.f32 %v1414, 0.0
        %v1445 = vmax.f32 %v1419, 0.0
        %v1446 = vmax.f32 %v1422, 0.0
        %v1447 = vmax.f32 %v1427, 0.0
        %v1448 = vmax.f32 %v1430, 0.0
        %v1449 = vpack.c.bf16 %v1434, %v1433
        %v1450 = vpack.c.bf16 %v1436, %v1435
        %v1451 = vpack.c.bf16 %v1438, %v1437
        %v1452 = vpack.c.bf16 %v1440, %v1439
        %v1453 = vpack.c.bf16 %v1442, %v1441
        %v1454 = vpack.c.bf16 %v1444, %v1443
        %v1455 = vpack.c.bf16 %v1446, %v1445
        %v1456 = vpack.c.bf16 %v1448, %v1447
        %1457 = vmatprep.subr.bf16.mxu0 0
        %1458 = vmatpush1.bf16.msra.mxu0 %v1449
        %1459 = vmatprep.subr.bf16.mxu0 0
        %1460 = vmatpush1.bf16.msra.mxu0 %v1450
        %1461 = vmatprep.subr.bf16.mxu0 0
        %1462 = vmatpush1.bf16.msra.mxu0 %v1451
        %1463 = vmatprep.subr.bf16.mxu0 0
        %1464 = vmatpush1.bf16.msra.mxu0 %v1452
        %1465 = vmatprep.subr.bf16.mxu0 0
        %1466 = vmatpush1.bf16.msra.mxu0 %v1453
        %1467 = vmatprep.subr.bf16.mxu0 0
        %1468 = vmatpush1.bf16.msra.mxu0 %v1454
        %1469 = vmatprep.subr.bf16.mxu0 0
        %1470 = vmatpush1.bf16.msra.mxu0 %v1455
        %1471 = vmatprep.subr.bf16.mxu0 0
        %1472 = vmatpush1.bf16.msra.mxu0 %v1456
        %1473 = vmatprep.subr.bf16.mxu0 0
        %1474 = vmatpush1.bf16.msra.mxu0 0
        %1475 = vmatprep.subr.bf16.mxu0 0
        %1476 = vmatpush1.bf16.msra.mxu0 0
        %1477 = vmatprep.subr.bf16.mxu0 0
        %1478 = vmatpush1.bf16.msra.mxu0 0
        %1479 = vmatprep.subr.bf16.mxu0 0
        %1480 = vmatpush1.bf16.msra.mxu0 0
        %1481 = vmatprep.subr.bf16.mxu0 0
        %1482 = vmatpush1.bf16.msra.mxu0 0
        %1483 = vmatprep.subr.bf16.mxu0 0
        %1484 = vmatpush1.bf16.msra.mxu0 0
        %1485 = vmatprep.subr.bf16.mxu0 0
        %1486 = vmatpush1.bf16.msra.mxu0 0
        %1487 = vmatprep.subr.bf16.mxu0 0
        %1488 = vmatpush1.bf16.msra.mxu0 0
        %1489 = vmatprep.mubr.bf16.mxu0 0
        %1490 = vmatmul.mubr.bf16.gmra.mrb[0].mxu0 %v1096
        %v1491 = vpop.f32.mrb[0].mxu0
        %v1492 = vadd.f32 %v1043, %v1491
        %v1493 = vpop.f32.mrb[0].mxu0
        %v1494 = vpop.f32.mrb[0].mxu0
        %v1495 = vadd.f32 %v1048, %v1494
        %v1496 = vpop.f32.mrb[0].mxu0
        %1497 = vmatprep.mubr.bf16.mxu0 0
        %1498 = vmatmul.mubr.bf16.gmra.mrb[0].mxu0 %v1097
        %v1499 = vpop.f32.mrb[0].mxu0
        %v1500 = vadd.f32 %v1053, %v1499
        %v1501 = vpop.f32.mrb[0].mxu0
        %v1502 = vpop.f32.mrb[0].mxu0
        %v1503 = vadd.f32 %v1058, %v1502
        %v1504 = vpop.f32.mrb[0].mxu0
        %1505 = vmatprep.mubr.bf16.mxu0 0
        %1506 = vmatmul.mubr.bf16.gmra.mrb[0].mxu0 %v1098
        %v1507 = vpop.f32.mrb[0].mxu0
        %v1508 = vadd.f32 %v1063, %v1507
        %v1509 = vpop.f32.mrb[0].mxu0
        %v1510 = vpop.f32.mrb[0].mxu0
        %v1511 = vadd.f32 %v1068, %v1510
        %v1512 = vpop.f32.mrb[0].mxu0
        %1513 = vmatprep.mubr.bf16.mxu0 0
        %1514 = vmatmul.mubr.bf16.gmra.mrb[0].mxu0 %v1099
        %v1515 = vpop.f32.mrb[0].mxu0
        %v1516 = vadd.f32 %v1073, %v1515
        %v1517 = vpop.f32.mrb[0].mxu0
        %v1518 = vpop.f32.mrb[0].mxu0
        %v1519 = vadd.f32 %v1078, %v1518
        %v1520 = vpop.f32.mrb[0].mxu0
        %1521 = vdwg.mxu0
        %v1522 = vmax.f32 %v1492, 0.0
        %v1523 = vmax.f32 %v1495, 0.0
        %v1524 = vmax.f32 %v1500, 0.0
        %v1525 = vmax.f32 %v1503, 0.0
        %v1526 = vmax.f32 %v1508, 0.0
        %v1527 = vmax.f32 %v1511, 0.0
        %v1528 = vmax.f32 %v1516, 0.0
        %v1529 = vmax.f32 %v1519, 0.0
        %v1530 = vpack.c.bf16 %v1523, %v1522
        %v1531 = vpack.c.bf16 %v1525, %v1524
        %v1532 = vpack.c.bf16 %v1527, %v1526
        %v1533 = vpack.c.bf16 %v1529, %v1528
        %v1534 = vmax.bf16 %v1181, %v1257
        %v1535 = vmax.bf16 %v1182, %v1258
        %v1536 = vmax.bf16 %v1183, %v1332
        %v1537 = vmax.bf16 %v1184, %v1333
        %v1538 = vmax.bf16 %v1185, %v1334
        %v1539 = vmax.bf16 %v1186, %v1335
        %v1540 = vmax.bf16 %v1187, %v1449
        %v1541 = vmax.bf16 %v1188, %v1450
        %v1542 = vmax.bf16 %v1189, %v1451
        %v1543 = vmax.bf16 %v1190, %v1452
        %v1544 = vmax.bf16 %v1191, %v1453
        %v1545 = vmax.bf16 %v1192, %v1454
        %v1546 = vmax.bf16 %v1193, %v1455
        %v1547 = vmax.bf16 %v1194, %v1456
        %v1548 = vmax.bf16 %v1195, %v1530
        %v1549 = vmax.bf16 %v1196, %v1531
        %v1550 = vmax.bf16 %v1197, %v1532
        %v1551 = vmax.bf16 %v1198, %v1533
        %s1552 = scalar_lea.vmem %s417, 4 [#allocation2]
        %v1553 = vld [vmem:[%s1552] sm:$0x3]
        %v1555 = vsel %vm533, %v1553, 0
        %1557 = vmatprep.subr.bf16.mxu0 0
        %1558 = vmatpush1.bf16.msra.mxu0 %v1555
        %1559 = vmatprep.subr.bf16.mxu0 0
        %1560 = vmatpush1.bf16.msra.mxu0 0
        %1561 = vmatprep.subr.bf16.mxu0 0
        %1562 = vmatpush1.bf16.msra.mxu0 0
        %1563 = vmatprep.subr.bf16.mxu0 0
        %1564 = vmatpush1.bf16.msra.mxu0 0
        %1565 = vmatprep.subr.bf16.mxu0 0
        %1566 = vmatpush1.bf16.msra.mxu0 0
        %1567 = vmatprep.subr.bf16.mxu0 0
        %1568 = vmatpush1.bf16.msra.mxu0 0
        %1569 = vmatprep.subr.bf16.mxu0 0
        %1570 = vmatpush1.bf16.msra.mxu0 0
        %1571 = vmatprep.subr.bf16.mxu0 0
        %1572 = vmatpush1.bf16.msra.mxu0 0
        %1573 = vmatprep.subr.bf16.mxu0 0
        %1574 = vmatpush1.bf16.msra.mxu0 0
        %1575 = vmatprep.subr.bf16.mxu0 0
        %1576 = vmatpush1.bf16.msra.mxu0 0
        %1577 = vmatprep.subr.bf16.mxu0 0
        %1578 = vmatpush1.bf16.msra.mxu0 0
        %1579 = vmatprep.subr.bf16.mxu0 0
        %1580 = vmatpush1.bf16.msra.mxu0 0
        %1581 = vmatprep.subr.bf16.mxu0 0
        %1582 = vmatpush1.bf16.msra.mxu0 0
        %1583 = vmatprep.subr.bf16.mxu0 0
        %1584 = vmatpush1.bf16.msra.mxu0 0
        %1585 = vmatprep.subr.bf16.mxu0 0
        %1586 = vmatpush1.bf16.msra.mxu0 0
        %1587 = vmatprep.subr.bf16.mxu0 0
        %1588 = vmatpush1.bf16.msra.mxu0 0
        %1589 = vmatprep.mubr.bf16.mxu0 0
        %1590 = vmatmul.mubr.bf16.gmra.mrb[0].mxu0 %v528
        %v1591 = vpop.f32.mrb[0].mxu0
        %v1592 = vadd.f32 %v499, %v1591
        %v1593 = vpop.f32.mrb[0].mxu0
        %v1594 = vpop.f32.mrb[0].mxu0
        %v1595 = vadd.f32 %v504, %v1594
        %v1596 = vpop.f32.mrb[0].mxu0
        %1597 = vmatprep.mubr.bf16.mxu0 0
        %1598 = vmatmul.mubr.bf16.gmra.mrb[0].mxu0 %v531
        %v1599 = vpop.f32.mrb[0].mxu0
        %v1600 = vadd.f32 %v509, %v1599
        %v1601 = vpop.f32.mrb[0].mxu0
        %v1602 = vpop.f32.mrb[0].mxu0
        %v1603 = vadd.f32 %v514, %v1602
        %v1604 = vpop.f32.mrb[0].mxu0
        %1605 = vdwg.mxu0
        %v1606 = vmax.f32 %v1592, 0.0
        %v1607 = vmax.f32 %v1595, 0.0
        %v1608 = vmax.f32 %v1600, 0.0
        %v1609 = vmax.f32 %v1603, 0.0
        %v1610 = vpack.c.bf16 %v1607, %v1606
        %v1611 = vpack.c.bf16 %v1609, %v1608
        %1612 = vmatprep.subr.bf16.mxu0 0
        %1613 = vmatpush1.bf16.msra.mxu0 %v1610
        %1614 = vmatprep.subr.bf16.mxu0 0
        %1615 = vmatpush1.bf16.msra.mxu0 %v1611
        %1616 = vmatprep.subr.bf16.mxu0 0
        %1617 = vmatpush1.bf16.msra.mxu0 0
        %1618 = vmatprep.subr.bf16.mxu0 0
        %1619 = vmatpush1.bf16.msra.mxu0 0
        %1620 = vmatprep.subr.bf16.mxu0 0
        %1621 = vmatpush1.bf16.msra.mxu0 0
        %1622 = vmatprep.subr.bf16.mxu0 0
        %1623 = vmatpush1.bf16.msra.mxu0 0
        %1624 = vmatprep.subr.bf16.mxu0 0
        %1625 = vmatpush1.bf16.msra.mxu0 0
        %1626 = vmatprep.subr.bf16.mxu0 0
        %1627 = vmatpush1.bf16.msra.mxu0 0
        %1628 = vmatprep.subr.bf16.mxu0 0
        %1629 = vmatpush1.bf16.msra.mxu0 0
        %1630 = vmatprep.subr.bf16.mxu0 0
        %1631 = vmatpush1.bf16.msra.mxu0 0
        %1632 = vmatprep.subr.bf16.mxu0 0
        %1633 = vmatpush1.bf16.msra.mxu0 0
        %1634 = vmatprep.subr.bf16.mxu0 0
        %1635 = vmatpush1.bf16.msra.mxu0 0
        %1636 = vmatprep.subr.bf16.mxu0 0
        %1637 = vmatpush1.bf16.msra.mxu0 0
        %1638 = vmatprep.subr.bf16.mxu0 0
        %1639 = vmatpush1.bf16.msra.mxu0 0
        %1640 = vmatprep.subr.bf16.mxu0 0
        %1641 = vmatpush1.bf16.msra.mxu0 0
        %1642 = vmatprep.subr.bf16.mxu0 0
        %1643 = vmatpush1.bf16.msra.mxu0 0
        %1644 = vmatprep.mubr.bf16.mxu0 0
        %1645 = vmatmul.mubr.bf16.gmra.mrb[0].mxu0 %v662
        %v1646 = vpop.f32.mrb[0].mxu0
        %v1647 = vadd.f32 %v603, %v1646
        %v1648 = vpop.f32.mrb[0].mxu0
        %v1649 = vpop.f32.mrb[0].mxu0
        %v1650 = vadd.f32 %v608, %v1649
        %v1651 = vpop.f32.mrb[0].mxu0
        %1652 = vmatprep.mubr.bf16.mxu0 0
        %1653 = vmatmul.mubr.bf16.gmra.mrb[0].mxu0 %v665
        %v1654 = vpop.f32.mrb[0].mxu0
        %v1655 = vadd.f32 %v613, %v1654
        %v1656 = vpop.f32.mrb[0].mxu0
        %v1657 = vpop.f32.mrb[0].mxu0
        %v1658 = vadd.f32 %v618, %v1657
        %v1659 = vpop.f32.mrb[0].mxu0
        %1660 = vmatprep.mubr.bf16.mxu0 0
        %1661 = vmatmul.mubr.bf16.gmra.mrb[0].mxu0 %v668
        %v1662 = vpop.f32.mrb[0].mxu0
        %v1663 = vadd.f32 %v623, %v1662
        %v1664 = vpop.f32.mrb[0].mxu0
        %v1665 = vpop.f32.mrb[0].mxu0
        %v1666 = vadd.f32 %v628, %v1665
        %v1667 = vpop.f32.mrb[0].mxu0
        %1668 = vmatprep.mubr.bf16.mxu0 0
        %1669 = vmatmul.mubr.bf16.gmra.mrb[0].mxu0 %v671
        %v1670 = vpop.f32.mrb[0].mxu0
        %v1671 = vadd.f32 %v633, %v1670
        %v1672 = vpop.f32.mrb[0].mxu0
        %v1673 = vpop.f32.mrb[0].mxu0
        %v1674 = vadd.f32 %v638, %v1673
        %v1675 = vpop.f32.mrb[0].mxu0
        %1676 = vdwg.mxu0
        %v1677 = vmax.f32 %v1647, 0.0
        %v1678 = vmax.f32 %v1650, 0.0
        %v1679 = vmax.f32 %v1655, 0.0
        %v1680 = vmax.f32 %v1658, 0.0
        %v1681 = vmax.f32 %v1663, 0.0
        %v1682 = vmax.f32 %v1666, 0.0
        %v1683 = vmax.f32 %v1671, 0.0
        %v1684 = vmax.f32 %v1674, 0.0
        %v1685 = vpack.c.bf16 %v1678, %v1677
        %v1686 = vpack.c.bf16 %v1680, %v1679
        %v1687 = vpack.c.bf16 %v1682, %v1681
        %v1688 = vpack.c.bf16 %v1684, %v1683
        %1689 = vmatprep.subr.bf16.mxu0 0
        %1690 = vmatpush1.bf16.msra.mxu0 %v1685
        %1691 = vmatprep.subr.bf16.mxu0 0
        %1692 = vmatpush1.bf16.msra.mxu0 %v1686
        %1693 = vmatprep.subr.bf16.mxu0 0
        %1694 = vmatpush1.bf16.msra.mxu0 %v1687
        %1695 = vmatprep.subr.bf16.mxu0 0
        %1696 = vmatpush1.bf16.msra.mxu0 %v1688
        %1697 = vmatprep.subr.bf16.mxu0 0
        %1698 = vmatpush1.bf16.msra.mxu0 0
        %1699 = vmatprep.subr.bf16.mxu0 0
        %1700 = vmatpush1.bf16.msra.mxu0 0
        %1701 = vmatprep.subr.bf16.mxu0 0
        %1702 = vmatpush1.bf16.msra.mxu0 0
        %1703 = vmatprep.subr.bf16.mxu0 0
        %1704 = vmatpush1.bf16.msra.mxu0 0
        %1705 = vmatprep.subr.bf16.mxu0 0
        %1706 = vmatpush1.bf16.msra.mxu0 0
        %1707 = vmatprep.subr.bf16.mxu0 0
        %1708 = vmatpush1.bf16.msra.mxu0 0
        %1709 = vmatprep.subr.bf16.mxu0 0
        %1710 = vmatpush1.bf16.msra.mxu0 0
        %1711 = vmatprep.subr.bf16.mxu0 0
        %1712 = vmatpush1.bf16.msra.mxu0 0
        %1713 = vmatprep.subr.bf16.mxu0 0
        %1714 = vmatpush1.bf16.msra.mxu0 0
        %1715 = vmatprep.subr.bf16.mxu0 0
        %1716 = vmatpush1.bf16.msra.mxu0 0
        %1717 = vmatprep.subr.bf16.mxu0 0
        %1718 = vmatpush1.bf16.msra.mxu0 0
        %1719 = vmatprep.subr.bf16.mxu0 0
        %1720 = vmatpush1.bf16.msra.mxu0 0
        %1721 = vmatprep.mubr.bf16.mxu0 0
        %1722 = vmatmul.mubr.bf16.gmra.mrb[0].mxu0 %v888
        %v1723 = vpop.f32.mrb[0].mxu0
        %v1724 = vadd.f32 %v769, %v1723
        %v1725 = vpop.f32.mrb[0].mxu0
        %v1726 = vpop.f32.mrb[0].mxu0
        %v1727 = vadd.f32 %v774, %v1726
        %v1728 = vpop.f32.mrb[0].mxu0
        %1729 = vmatprep.mubr.bf16.mxu0 0
        %1730 = vmatmul.mubr.bf16.gmra.mrb[0].mxu0 %v891
        %v1731 = vpop.f32.mrb[0].mxu0
        %v1732 = vadd.f32 %v779, %v1731
        %v1733 = vpop.f32.mrb[0].mxu0
        %v1734 = vpop.f32.mrb[0].mxu0
        %v1735 = vadd.f32 %v784, %v1734
        %v1736 = vpop.f32.mrb[0].mxu0
        %1737 = vmatprep.mubr.bf16.mxu0 0
        %1738 = vmatmul.mubr.bf16.gmra.mrb[0].mxu0 %v894
        %v1739 = vpop.f32.mrb[0].mxu0
        %v1740 = vadd.f32 %v789, %v1739
        %v1741 = vpop.f32.mrb[0].mxu0
        %v1742 = vpop.f32.mrb[0].mxu0
        %v1743 = vadd.f32 %v794, %v1742
        %v1744 = vpop.f32.mrb[0].mxu0
        %1745 = vmatprep.mubr.bf16.mxu0 0
        %1746 = vmatmul.mubr.bf16.gmra.mrb[0].mxu0 %v897
        %v1747 = vpop.f32.mrb[0].mxu0
        %v1748 = vadd.f32 %v799, %v1747
        %v1749 = vpop.f32.mrb[0].mxu0
        %v1750 = vpop.f32.mrb[0].mxu0
        %v1751 = vadd.f32 %v804, %v1750
        %v1752 = vpop.f32.mrb[0].mxu0
        %1753 = vmatprep.mubr.bf16.mxu0 0
        %1754 = vmatmul.mubr.bf16.gmra.mrb[0].mxu0 %v900
        %v1755 = vpop.f32.mrb[0].mxu0
        %v1756 = vadd.f32 %v809, %v1755
        %v1757 = vpop.f32.mrb[0].mxu0
        %v1758 = vpop.f32.mrb[0].mxu0
        %v1759 = vadd.f32 %v814, %v1758
        %v1760 = vpop.f32.mrb[0].mxu0
        %1761 = vmatprep.mubr.bf16.mxu0 0
        %1762 = vmatmul.mubr.bf16.gmra.mrb[0].mxu0 %v903
        %v1763 = vpop.f32.mrb[0].mxu0
        %v1764 = vadd.f32 %v819, %v1763
        %v1765 = vpop.f32.mrb[0].mxu0
        %v1766 = vpop.f32.mrb[0].mxu0
        %v1767 = vadd.f32 %v824, %v1766
        %v1768 = vpop.f32.mrb[0].mxu0
        %1769 = vmatprep.mubr.bf16.mxu0 0
        %1770 = vmatmul.mubr.bf16.gmra.mrb[0].mxu0 %v906
        %v1771 = vpop.f32.mrb[0].mxu0
        %v1772 = vadd.f32 %v829, %v1771
        %v1773 = vpop.f32.mrb[0].mxu0
        %v1774 = vpop.f32.mrb[0].mxu0
        %v1775 = vadd.f32 %v834, %v1774
        %v1776 = vpop.f32.mrb[0].mxu0
        %1777 = vmatprep.mubr.bf16.mxu0 0
        %1778 = vmatmul.mubr.bf16.gmra.mrb[0].mxu0 %v909
        %v1779 = vpop.f32.mrb[0].mxu0
        %v1780 = vadd.f32 %v839, %v1779
        %v1781 = vpop.f32.mrb[0].mxu0
        %v1782 = vpop.f32.mrb[0].mxu0
        %v1783 = vadd.f32 %v844, %v1782
        %v1784 = vpop.f32.mrb[0].mxu0
        %1785 = vdwg.mxu0
        %v1786 = vmax.f32 %v1724, 0.0
        %v1787 = vmax.f32 %v1727, 0.0
        %v1788 = vmax.f32 %v1732, 0.0
        %v1789 = vmax.f32 %v1735, 0.0
        %v1790 = vmax.f32 %v1740, 0.0
        %v1791 = vmax.f32 %v1743, 0.0
        %v1792 = vmax.f32 %v1748, 0.0
        %v1793 = vmax.f32 %v1751, 0.0
        %v1794 = vmax.f32 %v1756, 0.0
        %v1795 = vmax.f32 %v1759, 0.0
        %v1796 = vmax.f32 %v1764, 0.0
        %v1797 = vmax.f32 %v1767, 0.0
        %v1798 = vmax.f32 %v1772, 0.0
        %v1799 = vmax.f32 %v1775, 0.0
        %v1800 = vmax.f32 %v1780, 0.0
        %v1801 = vmax.f32 %v1783, 0.0
        %v1802 = vpack.c.bf16 %v1787, %v1786
        %v1803 = vpack.c.bf16 %v1789, %v1788
        %v1804 = vpack.c.bf16 %v1791, %v1790
        %v1805 = vpack.c.bf16 %v1793, %v1792
        %v1806 = vpack.c.bf16 %v1795, %v1794
        %v1807 = vpack.c.bf16 %v1797, %v1796
        %v1808 = vpack.c.bf16 %v1799, %v1798
        %v1809 = vpack.c.bf16 %v1801, %v1800
        %1810 = vmatprep.subr.bf16.mxu0 0
        %1811 = vmatpush1.bf16.msra.mxu0 %v1802
        %1812 = vmatprep.subr.bf16.mxu0 0
        %1813 = vmatpush1.bf16.msra.mxu0 %v1803
        %1814 = vmatprep.subr.bf16.mxu0 0
        %1815 = vmatpush1.bf16.msra.mxu0 %v1804
        %1816 = vmatprep.subr.bf16.mxu0 0
        %1817 = vmatpush1.bf16.msra.mxu0 %v1805
        %1818 = vmatprep.subr.bf16.mxu0 0
        %1819 = vmatpush1.bf16.msra.mxu0 %v1806
        %1820 = vmatprep.subr.bf16.mxu0 0
        %1821 = vmatpush1.bf16.msra.mxu0 %v1807
        %1822 = vmatprep.subr.bf16.mxu0 0
        %1823 = vmatpush1.bf16.msra.mxu0 %v1808
        %1824 = vmatprep.subr.bf16.mxu0 0
        %1825 = vmatpush1.bf16.msra.mxu0 %v1809
        %1826 = vmatprep.subr.bf16.mxu0 0
        %1827 = vmatpush1.bf16.msra.mxu0 0
        %1828 = vmatprep.subr.bf16.mxu0 0
        %1829 = vmatpush1.bf16.msra.mxu0 0
        %1830 = vmatprep.subr.bf16.mxu0 0
        %1831 = vmatpush1.bf16.msra.mxu0 0
        %1832 = vmatprep.subr.bf16.mxu0 0
        %1833 = vmatpush1.bf16.msra.mxu0 0
        %1834 = vmatprep.subr.bf16.mxu0 0
        %1835 = vmatpush1.bf16.msra.mxu0 0
        %1836 = vmatprep.subr.bf16.mxu0 0
        %1837 = vmatpush1.bf16.msra.mxu0 0
        %1838 = vmatprep.subr.bf16.mxu0 0
        %1839 = vmatpush1.bf16.msra.mxu0 0
        %1840 = vmatprep.subr.bf16.mxu0 0
        %1841 = vmatpush1.bf16.msra.mxu0 0
        %1842 = vmatprep.mubr.bf16.mxu0 0
        %1843 = vmatmul.mubr.bf16.gmra.mrb[0].mxu0 %v1096
        %v1844 = vpop.f32.mrb[0].mxu0
        %v1845 = vadd.f32 %v1043, %v1844
        %v1846 = vpop.f32.mrb[0].mxu0
        %v1847 = vpop.f32.mrb[0].mxu0
        %v1848 = vadd.f32 %v1048, %v1847
        %v1849 = vpop.f32.mrb[0].mxu0
        %1850 = vmatprep.mubr.bf16.mxu0 0
        %1851 = vmatmul.mubr.bf16.gmra.mrb[0].mxu0 %v1097
        %v1852 = vpop.f32.mrb[0].mxu0
        %v1853 = vadd.f32 %v1053, %v1852
        %v1854 = vpop.f32.mrb[0].mxu0
        %v1855 = vpop.f32.mrb[0].mxu0
        %v1856 = vadd.f32 %v1058, %v1855
        %v1857 = vpop.f32.mrb[0].mxu0
        %1858 = vmatprep.mubr.bf16.mxu0 0
        %1859 = vmatmul.mubr.bf16.gmra.mrb[0].mxu0 %v1098
        %v1860 = vpop.f32.mrb[0].mxu0
        %v1861 = vadd.f32 %v1063, %v1860
        %v1862 = vpop.f32.mrb[0].mxu0
        %v1863 = vpop.f32.mrb[0].mxu0
        %v1864 = vadd.f32 %v1068, %v1863
        %v1865 = vpop.f32.mrb[0].mxu0
        %1866 = vmatprep.mubr.bf16.mxu0 0
        %1867 = vmatmul.mubr.bf16.gmra.mrb[0].mxu0 %v1099
        %v1868 = vpop.f32.mrb[0].mxu0
        %v1869 = vadd.f32 %v1073, %v1868
        %v1870 = vpop.f32.mrb[0].mxu0
        %v1871 = vpop.f32.mrb[0].mxu0
        %v1872 = vadd.f32 %v1078, %v1871
        %v1873 = vpop.f32.mrb[0].mxu0
        %1874 = vdwg.mxu0
        %v1875 = vmax.f32 %v1845, 0.0
        %v1876 = vmax.f32 %v1848, 0.0
        %v1877 = vmax.f32 %v1853, 0.0
        %v1878 = vmax.f32 %v1856, 0.0
        %v1879 = vmax.f32 %v1861, 0.0
        %v1880 = vmax.f32 %v1864, 0.0
        %v1881 = vmax.f32 %v1869, 0.0
        %v1882 = vmax.f32 %v1872, 0.0
        %v1883 = vpack.c.bf16 %v1876, %v1875
        %v1884 = vpack.c.bf16 %v1878, %v1877
        %v1885 = vpack.c.bf16 %v1880, %v1879
        %v1886 = vpack.c.bf16 %v1882, %v1881
        %v1887 = vmax.bf16 %v1534, %v1610
        %v1888 = vmax.bf16 %v1535, %v1611
        %v1889 = vmax.bf16 %v1536, %v1685
        %v1890 = vmax.bf16 %v1537, %v1686
        %v1891 = vmax.bf16 %v1538, %v1687
        %v1892 = vmax.bf16 %v1539, %v1688
        %v1893 = vmax.bf16 %v1540, %v1802
        %v1894 = vmax.bf16 %v1541, %v1803
        %v1895 = vmax.bf16 %v1542, %v1804
        %v1896 = vmax.bf16 %v1543, %v1805
        %v1897 = vmax.bf16 %v1544, %v1806
        %v1898 = vmax.bf16 %v1545, %v1807
        %v1899 = vmax.bf16 %v1546, %v1808
        %v1900 = vmax.bf16 %v1547, %v1809
        %v1901 = vmax.bf16 %v1548, %v1883
        %v1902 = vmax.bf16 %v1549, %v1884
        %v1903 = vmax.bf16 %v1550, %v1885
        %v1904 = vmax.bf16 %v1551, %v1886
        %s1905 = scalar_lea.vmem %s417, 6 [#allocation2]
        %v1906 = vld [vmem:[%s1905] sm:$0x3]
        %v1908 = vsel %vm533, %v1906, 0
        %1910 = vmatprep.subr.bf16.mxu0 0
        %1911 = vmatpush1.bf16.msra.mxu0 %v1908
        %1912 = vmatprep.subr.bf16.mxu0 0
        %1913 = vmatpush1.bf16.msra.mxu0 0
        %1914 = vmatprep.subr.bf16.mxu0 0
        %1915 = vmatpush1.bf16.msra.mxu0 0
        %1916 = vmatprep.subr.bf16.mxu0 0
        %1917 = vmatpush1.bf16.msra.mxu0 0
        %1918 = vmatprep.subr.bf16.mxu0 0
        %1919 = vmatpush1.bf16.msra.mxu0 0
        %1920 = vmatprep.subr.bf16.mxu0 0
        %1921 = vmatpush1.bf16.msra.mxu0 0
        %1922 = vmatprep.subr.bf16.mxu0 0
        %1923 = vmatpush1.bf16.msra.mxu0 0
        %1924 = vmatprep.subr.bf16.mxu0 0
        %1925 = vmatpush1.bf16.msra.mxu0 0
        %1926 = vmatprep.subr.bf16.mxu0 0
        %1927 = vmatpush1.bf16.msra.mxu0 0
        %1928 = vmatprep.subr.bf16.mxu0 0
        %1929 = vmatpush1.bf16.msra.mxu0 0
        %1930 = vmatprep.subr.bf16.mxu0 0
        %1931 = vmatpush1.bf16.msra.mxu0 0
        %1932 = vmatprep.subr.bf16.mxu0 0
        %1933 = vmatpush1.bf16.msra.mxu0 0
        %1934 = vmatprep.subr.bf16.mxu0 0
        %1935 = vmatpush1.bf16.msra.mxu0 0
        %1936 = vmatprep.subr.bf16.mxu0 0
        %1937 = vmatpush1.bf16.msra.mxu0 0
        %1938 = vmatprep.subr.bf16.mxu0 0
        %1939 = vmatpush1.bf16.msra.mxu0 0
        %1940 = vmatprep.subr.bf16.mxu0 0
        %1941 = vmatpush1.bf16.msra.mxu0 0
        %1942 = vmatprep.mubr.bf16.mxu0 0
        %1943 = vmatmul.mubr.bf16.gmra.mrb[0].mxu0 %v528
        %v1944 = vpop.f32.mrb[0].mxu0
        %v1945 = vadd.f32 %v499, %v1944
        %v1946 = vpop.f32.mrb[0].mxu0
        %v1947 = vpop.f32.mrb[0].mxu0
        %v1948 = vadd.f32 %v504, %v1947
        %v1949 = vpop.f32.mrb[0].mxu0
        %1950 = vmatprep.mubr.bf16.mxu0 0
        %1951 = vmatmul.mubr.bf16.gmra.mrb[0].mxu0 %v531
        %v1952 = vpop.f32.mrb[0].mxu0
        %v1953 = vadd.f32 %v509, %v1952
        %v1954 = vpop.f32.mrb[0].mxu0
        %v1955 = vpop.f32.mrb[0].mxu0
        %v1956 = vadd.f32 %v514, %v1955
        %v1957 = vpop.f32.mrb[0].mxu0
        %1958 = vdwg.mxu0
        %v1959 = vmax.f32 %v1945, 0.0
        %v1960 = vmax.f32 %v1948, 0.0
        %v1961 = vmax.f32 %v1953, 0.0
        %v1962 = vmax.f32 %v1956, 0.0
        %v1963 = vpack.c.bf16 %v1960, %v1959
        %v1964 = vpack.c.bf16 %v1962, %v1961
        %1965 = vmatprep.subr.bf16.mxu0 0
        %1966 = vmatpush1.bf16.msra.mxu0 %v1963
        %1967 = vmatprep.subr.bf16.mxu0 0
        %1968 = vmatpush1.bf16.msra.mxu0 %v1964
        %1969 = vmatprep.subr.bf16.mxu0 0
        %1970 = vmatpush1.bf16.msra.mxu0 0
        %1971 = vmatprep.subr.bf16.mxu0 0
        %1972 = vmatpush1.bf16.msra.mxu0 0
        %1973 = vmatprep.subr.bf16.mxu0 0
        %1974 = vmatpush1.bf16.msra.mxu0 0
        %1975 = vmatprep.subr.bf16.mxu0 0
        %1976 = vmatpush1.bf16.msra.mxu0 0
        %1977 = vmatprep.subr.bf16.mxu0 0
        %1978 = vmatpush1.bf16.msra.mxu0 0
        %1979 = vmatprep.subr.bf16.mxu0 0
        %1980 = vmatpush1.bf16.msra.mxu0 0
        %1981 = vmatprep.subr.bf16.mxu0 0
        %1982 = vmatpush1.bf16.msra.mxu0 0
        %1983 = vmatprep.subr.bf16.mxu0 0
        %1984 = vmatpush1.bf16.msra.mxu0 0
        %1985 = vmatprep.subr.bf16.mxu0 0
        %1986 = vmatpush1.bf16.msra.mxu0 0
        %1987 = vmatprep.subr.bf16.mxu0 0
        %1988 = vmatpush1.bf16.msra.mxu0 0
        %1989 = vmatprep.subr.bf16.mxu0 0
        %1990 = vmatpush1.bf16.msra.mxu0 0
        %1991 = vmatprep.subr.bf16.mxu0 0
        %1992 = vmatpush1.bf16.msra.mxu0 0
        %1993 = vmatprep.subr.bf16.mxu0 0
        %1994 = vmatpush1.bf16.msra.mxu0 0
        %1995 = vmatprep.subr.bf16.mxu0 0
        %1996 = vmatpush1.bf16.msra.mxu0 0
        %1997 = vmatprep.mubr.bf16.mxu0 0
        %1998 = vmatmul.mubr.bf16.gmra.mrb[0].mxu0 %v662
        %v1999 = vpop.f32.mrb[0].mxu0
        %v2000 = vadd.f32 %v603, %v1999
        %v2001 = vpop.f32.mrb[0].mxu0
        %v2002 = vpop.f32.mrb[0].mxu0
        %v2003 = vadd.f32 %v608, %v2002
        %v2004 = vpop.f32.mrb[0].mxu0
        %2005 = vmatprep.mubr.bf16.mxu0 0
        %2006 = vmatmul.mubr.bf16.gmra.mrb[0].mxu0 %v665
        %v2007 = vpop.f32.mrb[0].mxu0
        %v2008 = vadd.f32 %v613, %v2007
        %v2009 = vpop.f32.mrb[0].mxu0
        %v2010 = vpop.f32.mrb[0].mxu0
        %v2011 = vadd.f32 %v618, %v2010
        %v2012 = vpop.f32.mrb[0].mxu0
        %2013 = vmatprep.mubr.bf16.mxu0 0
        %2014 = vmatmul.mubr.bf16.gmra.mrb[0].mxu0 %v668
        %v2015 = vpop.f32.mrb[0].mxu0
        %v2016 = vadd.f32 %v623, %v2015
        %v2017 = vpop.f32.mrb[0].mxu0
        %v2018 = vpop.f32.mrb[0].mxu0
        %v2019 = vadd.f32 %v628, %v2018
        %v2020 = vpop.f32.mrb[0].mxu0
        %2021 = vmatprep.mubr.bf16.mxu0 0
        %2022 = vmatmul.mubr.bf16.gmra.mrb[0].mxu0 %v671
        %v2023 = vpop.f32.mrb[0].mxu0
        %v2024 = vadd.f32 %v633, %v2023
        %v2025 = vpop.f32.mrb[0].mxu0
        %v2026 = vpop.f32.mrb[0].mxu0
        %v2027 = vadd.f32 %v638, %v2026
        %v2028 = vpop.f32.mrb[0].mxu0
        %2029 = vdwg.mxu0
        %v2030 = vmax.f32 %v2000, 0.0
        %v2031 = vmax.f32 %v2003, 0.0
        %v2032 = vmax.f32 %v2008, 0.0
        %v2033 = vmax.f32 %v2011, 0.0
        %v2034 = vmax.f32 %v2016, 0.0
        %v2035 = vmax.f32 %v2019, 0.0
        %v2036 = vmax.f32 %v2024, 0.0
        %v2037 = vmax.f32 %v2027, 0.0
        %v2038 = vpack.c.bf16 %v2031, %v2030
        %v2039 = vpack.c.bf16 %v2033, %v2032
        %v2040 = vpack.c.bf16 %v2035, %v2034
        %v2041 = vpack.c.bf16 %v2037, %v2036
        %2042 = vmatprep.subr.bf16.mxu0 0
        %2043 = vmatpush1.bf16.msra.mxu0 %v2038
        %2044 = vmatprep.subr.bf16.mxu0 0
        %2045 = vmatpush1.bf16.msra.mxu0 %v2039
        %2046 = vmatprep.subr.bf16.mxu0 0
        %2047 = vmatpush1.bf16.msra.mxu0 %v2040
        %2048 = vmatprep.subr.bf16.mxu0 0
        %2049 = vmatpush1.bf16.msra.mxu0 %v2041
        %2050 = vmatprep.subr.bf16.mxu0 0
        %2051 = vmatpush1.bf16.msra.mxu0 0
        %2052 = vmatprep.subr.bf16.mxu0 0
        %2053 = vmatpush1.bf16.msra.mxu0 0
        %2054 = vmatprep.subr.bf16.mxu0 0
        %2055 = vmatpush1.bf16.msra.mxu0 0
        %2056 = vmatprep.subr.bf16.mxu0 0
        %2057 = vmatpush1.bf16.msra.mxu0 0
        %2058 = vmatprep.subr.bf16.mxu0 0
        %2059 = vmatpush1.bf16.msra.mxu0 0
        %2060 = vmatprep.subr.bf16.mxu0 0
        %2061 = vmatpush1.bf16.msra.mxu0 0
        %2062 = vmatprep.subr.bf16.mxu0 0
        %2063 = vmatpush1.bf16.msra.mxu0 0
        %2064 = vmatprep.subr.bf16.mxu0 0
        %2065 = vmatpush1.bf16.msra.mxu0 0
        %2066 = vmatprep.subr.bf16.mxu0 0
        %2067 = vmatpush1.bf16.msra.mxu0 0
        %2068 = vmatprep.subr.bf16.mxu0 0
        %2069 = vmatpush1.bf16.msra.mxu0 0
        %2070 = vmatprep.subr.bf16.mxu0 0
        %2071 = vmatpush1.bf16.msra.mxu0 0
        %2072 = vmatprep.subr.bf16.mxu0 0
        %2073 = vmatpush1.bf16.msra.mxu0 0
        %2074 = vmatprep.mubr.bf16.mxu0 0
        %2075 = vmatmul.mubr.bf16.gmra.mrb[0].mxu0 %v888
        %v2076 = vpop.f32.mrb[0].mxu0
        %v2077 = vadd.f32 %v769, %v2076
        %v2078 = vpop.f32.mrb[0].mxu0
        %v2079 = vpop.f32.mrb[0].mxu0
        %v2080 = vadd.f32 %v774, %v2079
        %v2081 = vpop.f32.mrb[0].mxu0
        %2082 = vmatprep.mubr.bf16.mxu0 0
        %2083 = vmatmul.mubr.bf16.gmra.mrb[0].mxu0 %v891
        %v2084 = vpop.f32.mrb[0].mxu0
        %v2085 = vadd.f32 %v779, %v2084
        %v2086 = vpop.f32.mrb[0].mxu0
        %v2087 = vpop.f32.mrb[0].mxu0
        %v2088 = vadd.f32 %v784, %v2087
        %v2089 = vpop.f32.mrb[0].mxu0
        %2090 = vmatprep.mubr.bf16.mxu0 0
        %2091 = vmatmul.mubr.bf16.gmra.mrb[0].mxu0 %v894
        %v2092 = vpop.f32.mrb[0].mxu0
        %v2093 = vadd.f32 %v789, %v2092
        %v2094 = vpop.f32.mrb[0].mxu0
        %v2095 = vpop.f32.mrb[0].mxu0
        %v2096 = vadd.f32 %v794, %v2095
        %v2097 = vpop.f32.mrb[0].mxu0
        %2098 = vmatprep.mubr.bf16.mxu0 0
        %2099 = vmatmul.mubr.bf16.gmra.mrb[0].mxu0 %v897
        %v2100 = vpop.f32.mrb[0].mxu0
        %v2101 = vadd.f32 %v799, %v2100
        %v2102 = vpop.f32.mrb[0].mxu0
        %v2103 = vpop.f32.mrb[0].mxu0
        %v2104 = vadd.f32 %v804, %v2103
        %v2105 = vpop.f32.mrb[0].mxu0
        %2106 = vmatprep.mubr.bf16.mxu0 0
        %2107 = vmatmul.mubr.bf16.gmra.mrb[0].mxu0 %v900
        %v2108 = vpop.f32.mrb[0].mxu0
        %v2109 = vadd.f32 %v809, %v2108
        %v2110 = vpop.f32.mrb[0].mxu0
        %v2111 = vpop.f32.mrb[0].mxu0
        %v2112 = vadd.f32 %v814, %v2111
        %v2113 = vpop.f32.mrb[0].mxu0
        %2114 = vmatprep.mubr.bf16.mxu0 0
        %2115 = vmatmul.mubr.bf16.gmra.mrb[0].mxu0 %v903
        %v2116 = vpop.f32.mrb[0].mxu0
        %v2117 = vadd.f32 %v819, %v2116
        %v2118 = vpop.f32.mrb[0].mxu0
        %v2119 = vpop.f32.mrb[0].mxu0
        %v2120 = vadd.f32 %v824, %v2119
        %v2121 = vpop.f32.mrb[0].mxu0
        %2122 = vmatprep.mubr.bf16.mxu0 0
        %2123 = vmatmul.mubr.bf16.gmra.mrb[0].mxu0 %v906
        %v2124 = vpop.f32.mrb[0].mxu0
        %v2125 = vadd.f32 %v829, %v2124
        %v2126 = vpop.f32.mrb[0].mxu0
        %v2127 = vpop.f32.mrb[0].mxu0
        %v2128 = vadd.f32 %v834, %v2127
        %v2129 = vpop.f32.mrb[0].mxu0
        %2130 = vmatprep.mubr.bf16.mxu0 0
        %2131 = vmatmul.mubr.bf16.gmra.mrb[0].mxu0 %v909
        %v2132 = vpop.f32.mrb[0].mxu0
        %v2133 = vadd.f32 %v839, %v2132
        %v2134 = vpop.f32.mrb[0].mxu0
        %v2135 = vpop.f32.mrb[0].mxu0
        %v2136 = vadd.f32 %v844, %v2135
        %v2137 = vpop.f32.mrb[0].mxu0
        %2138 = vdwg.mxu0
        %v2139 = vmax.f32 %v2077, 0.0
        %v2140 = vmax.f32 %v2080, 0.0
        %v2141 = vmax.f32 %v2085, 0.0
        %v2142 = vmax.f32 %v2088, 0.0
        %v2143 = vmax.f32 %v2093, 0.0
        %v2144 = vmax.f32 %v2096, 0.0
        %v2145 = vmax.f32 %v2101, 0.0
        %v2146 = vmax.f32 %v2104, 0.0
        %v2147 = vmax.f32 %v2109, 0.0
        %v2148 = vmax.f32 %v2112, 0.0
        %v2149 = vmax.f32 %v2117, 0.0
        %v2150 = vmax.f32 %v2120, 0.0
        %v2151 = vmax.f32 %v2125, 0.0
        %v2152 = vmax.f32 %v2128, 0.0
        %v2153 = vmax.f32 %v2133, 0.0
        %v2154 = vmax.f32 %v2136, 0.0
        %v2155 = vpack.c.bf16 %v2140, %v2139
        %v2156 = vpack.c.bf16 %v2142, %v2141
        %v2157 = vpack.c.bf16 %v2144, %v2143
        %v2158 = vpack.c.bf16 %v2146, %v2145
        %v2159 = vpack.c.bf16 %v2148, %v2147
        %v2160 = vpack.c.bf16 %v2150, %v2149
        %v2161 = vpack.c.bf16 %v2152, %v2151
        %v2162 = vpack.c.bf16 %v2154, %v2153
        %2163 = vmatprep.subr.bf16.mxu0 0
        %2164 = vmatpush1.bf16.msra.mxu0 %v2155
        %2165 = vmatprep.subr.bf16.mxu0 0
        %2166 = vmatpush1.bf16.msra.mxu0 %v2156
        %2167 = vmatprep.subr.bf16.mxu0 0
        %2168 = vmatpush1.bf16.msra.mxu0 %v2157
        %2169 = vmatprep.subr.bf16.mxu0 0
        %2170 = vmatpush1.bf16.msra.mxu0 %v2158
        %2171 = vmatprep.subr.bf16.mxu0 0
        %2172 = vmatpush1.bf16.msra.mxu0 %v2159
        %2173 = vmatprep.subr.bf16.mxu0 0
        %2174 = vmatpush1.bf16.msra.mxu0 %v2160
        %2175 = vmatprep.subr.bf16.mxu0 0
        %2176 = vmatpush1.bf16.msra.mxu0 %v2161
        %2177 = vmatprep.subr.bf16.mxu0 0
        %2178 = vmatpush1.bf16.msra.mxu0 %v2162
        %2179 = vmatprep.subr.bf16.mxu0 0
        %2180 = vmatpush1.bf16.msra.mxu0 0
        %2181 = vmatprep.subr.bf16.mxu0 0
        %2182 = vmatpush1.bf16.msra.mxu0 0
        %2183 = vmatprep.subr.bf16.mxu0 0
        %2184 = vmatpush1.bf16.msra.mxu0 0
        %2185 = vmatprep.subr.bf16.mxu0 0
        %2186 = vmatpush1.bf16.msra.mxu0 0
        %2187 = vmatprep.subr.bf16.mxu0 0
        %2188 = vmatpush1.bf16.msra.mxu0 0
        %2189 = vmatprep.subr.bf16.mxu0 0
        %2190 = vmatpush1.bf16.msra.mxu0 0
        %2191 = vmatprep.subr.bf16.mxu0 0
        %2192 = vmatpush1.bf16.msra.mxu0 0
        %2193 = vmatprep.subr.bf16.mxu0 0
        %2194 = vmatpush1.bf16.msra.mxu0 0
        %2195 = vmatprep.mubr.bf16.mxu0 0
        %2196 = vmatmul.mubr.bf16.gmra.mrb[0].mxu0 %v1096
        %v2197 = vpop.f32.mrb[0].mxu0
        %v2198 = vadd.f32 %v1043, %v2197
        %v2199 = vpop.f32.mrb[0].mxu0
        %v2200 = vpop.f32.mrb[0].mxu0
        %v2201 = vadd.f32 %v1048, %v2200
        %v2202 = vpop.f32.mrb[0].mxu0
        %2203 = vmatprep.mubr.bf16.mxu0 0
        %2204 = vmatmul.mubr.bf16.gmra.mrb[0].mxu0 %v1097
        %v2205 = vpop.f32.mrb[0].mxu0
        %v2206 = vadd.f32 %v1053, %v2205
        %v2207 = vpop.f32.mrb[0].mxu0
        %v2208 = vpop.f32.mrb[0].mxu0
        %v2209 = vadd.f32 %v1058, %v2208
        %v2210 = vpop.f32.mrb[0].mxu0
        %2211 = vmatprep.mubr.bf16.mxu0 0
        %2212 = vmatmul.mubr.bf16.gmra.mrb[0].mxu0 %v1098
        %v2213 = vpop.f32.mrb[0].mxu0
        %v2214 = vadd.f32 %v1063, %v2213
        %v2215 = vpop.f32.mrb[0].mxu0
        %v2216 = vpop.f32.mrb[0].mxu0
        %v2217 = vadd.f32 %v1068, %v2216
        %v2218 = vpop.f32.mrb[0].mxu0
        %2219 = vmatprep.mubr.bf16.mxu0 0
        %2220 = vmatmul.mubr.bf16.gmra.mrb[0].mxu0 %v1099
        %v2221 = vpop.f32.mrb[0].mxu0
        %v2222 = vadd.f32 %v1073, %v2221
        %v2223 = vpop.f32.mrb[0].mxu0
        %v2224 = vpop.f32.mrb[0].mxu0
        %v2225 = vadd.f32 %v1078, %v2224
        %v2226 = vpop.f32.mrb[0].mxu0
        %2227 = vdwg.mxu0
        %v2228 = vmax.f32 %v2198, 0.0
        %v2229 = vmax.f32 %v2201, 0.0
        %v2230 = vmax.f32 %v2206, 0.0
        %v2231 = vmax.f32 %v2209, 0.0
        %v2232 = vmax.f32 %v2214, 0.0
        %v2233 = vmax.f32 %v2217, 0.0
        %v2234 = vmax.f32 %v2222, 0.0
        %v2235 = vmax.f32 %v2225, 0.0
        %v2236 = vpack.c.bf16 %v2229, %v2228
        %v2237 = vpack.c.bf16 %v2231, %v2230
        %v2238 = vpack.c.bf16 %v2233, %v2232
        %v2239 = vpack.c.bf16 %v2235, %v2234
        %v2240 = vmax.bf16 %v1887, %v1963
        %v2241 = vmax.bf16 %v1888, %v1964
        %v2242 = vmax.bf16 %v1889, %v2038
        %v2243 = vmax.bf16 %v1890, %v2039
        %v2244 = vmax.bf16 %v1891, %v2040
        %v2245 = vmax.bf16 %v1892, %v2041
        %v2246 = vmax.bf16 %v1893, %v2155
        %v2247 = vmax.bf16 %v1894, %v2156
        %v2248 = vmax.bf16 %v1895, %v2157
        %v2249 = vmax.bf16 %v1896, %v2158
        %v2250 = vmax.bf16 %v1897, %v2159
        %v2251 = vmax.bf16 %v1898, %v2160
        %v2252 = vmax.bf16 %v1899, %v2161
        %v2253 = vmax.bf16 %v1900, %v2162
        %v2254 = vmax.bf16 %v1901, %v2236
        %v2255 = vmax.bf16 %v1902, %v2237
        %v2256 = vmax.bf16 %v1903, %v2238
        %v2257 = vmax.bf16 %v1904, %v2239
        %s2258 = scalar_lea.vmem %s417, 8 [#allocation2]
        %v2259 = vld [vmem:[%s2258] sm:$0x3]
        %v2261 = vsel %vm533, %v2259, 0
        %2263 = vmatprep.subr.bf16.mxu0 0
        %2264 = vmatpush1.bf16.msra.mxu0 %v2261
        %2265 = vmatprep.subr.bf16.mxu0 0
        %2266 = vmatpush1.bf16.msra.mxu0 0
        %2267 = vmatprep.subr.bf16.mxu0 0
        %2268 = vmatpush1.bf16.msra.mxu0 0
        %2269 = vmatprep.subr.bf16.mxu0 0
        %2270 = vmatpush1.bf16.msra.mxu0 0
        %2271 = vmatprep.subr.bf16.mxu0 0
        %2272 = vmatpush1.bf16.msra.mxu0 0
        %2273 = vmatprep.subr.bf16.mxu0 0
        %2274 = vmatpush1.bf16.msra.mxu0 0
        %2275 = vmatprep.subr.bf16.mxu0 0
        %2276 = vmatpush1.bf16.msra.mxu0 0
        %2277 = vmatprep.subr.bf16.mxu0 0
        %2278 = vmatpush1.bf16.msra.mxu0 0
        %2279 = vmatprep.subr.bf16.mxu0 0
        %2280 = vmatpush1.bf16.msra.mxu0 0
        %2281 = vmatprep.subr.bf16.mxu0 0
        %2282 = vmatpush1.bf16.msra.mxu0 0
        %2283 = vmatprep.subr.bf16.mxu0 0
        %2284 = vmatpush1.bf16.msra.mxu0 0
        %2285 = vmatprep.subr.bf16.mxu0 0
        %2286 = vmatpush1.bf16.msra.mxu0 0
        %2287 = vmatprep.subr.bf16.mxu0 0
        %2288 = vmatpush1.bf16.msra.mxu0 0
        %2289 = vmatprep.subr.bf16.mxu0 0
        %2290 = vmatpush1.bf16.msra.mxu0 0
        %2291 = vmatprep.subr.bf16.mxu0 0
        %2292 = vmatpush1.bf16.msra.mxu0 0
        %2293 = vmatprep.subr.bf16.mxu0 0
        %2294 = vmatpush1.bf16.msra.mxu0 0
        %2295 = vmatprep.mubr.bf16.mxu0 0
        %2296 = vmatmul.mubr.bf16.gmra.mrb[0].mxu0 %v528
        %v2297 = vpop.f32.mrb[0].mxu0
        %v2298 = vadd.f32 %v499, %v2297
        %v2299 = vpop.f32.mrb[0].mxu0
        %v2300 = vpop.f32.mrb[0].mxu0
        %v2301 = vadd.f32 %v504, %v2300
        %v2302 = vpop.f32.mrb[0].mxu0
        %2303 = vmatprep.mubr.bf16.mxu0 0
        %2304 = vmatmul.mubr.bf16.gmra.mrb[0].mxu0 %v531
        %v2305 = vpop.f32.mrb[0].mxu0
        %v2306 = vadd.f32 %v509, %v2305
        %v2307 = vpop.f32.mrb[0].mxu0
        %v2308 = vpop.f32.mrb[0].mxu0
        %v2309 = vadd.f32 %v514, %v2308
        %v2310 = vpop.f32.mrb[0].mxu0
        %2311 = vdwg.mxu0
        %v2312 = vmax.f32 %v2298, 0.0
        %v2313 = vmax.f32 %v2301, 0.0
        %v2314 = vmax.f32 %v2306, 0.0
        %v2315 = vmax.f32 %v2309, 0.0
        %v2316 = vpack.c.bf16 %v2313, %v2312
        %v2317 = vpack.c.bf16 %v2315, %v2314
        %2318 = vmatprep.subr.bf16.mxu0 0
        %2319 = vmatpush1.bf16.msra.mxu0 %v2316
        %2320 = vmatprep.subr.bf16.mxu0 0
        %2321 = vmatpush1.bf16.msra.mxu0 %v2317
        %2322 = vmatprep.subr.bf16.mxu0 0
        %2323 = vmatpush1.bf16.msra.mxu0 0
        %2324 = vmatprep.subr.bf16.mxu0 0
        %2325 = vmatpush1.bf16.msra.mxu0 0
        %2326 = vmatprep.subr.bf16.mxu0 0
        %2327 = vmatpush1.bf16.msra.mxu0 0
        %2328 = vmatprep.subr.bf16.mxu0 0
        %2329 = vmatpush1.bf16.msra.mxu0 0
        %2330 = vmatprep.subr.bf16.mxu0 0
        %2331 = vmatpush1.bf16.msra.mxu0 0
        %2332 = vmatprep.subr.bf16.mxu0 0
        %2333 = vmatpush1.bf16.msra.mxu0 0
        %2334 = vmatprep.subr.bf16.mxu0 0
        %2335 = vmatpush1.bf16.msra.mxu0 0
        %2336 = vmatprep.subr.bf16.mxu0 0
        %2337 = vmatpush1.bf16.msra.mxu0 0
        %2338 = vmatprep.subr.bf16.mxu0 0
        %2339 = vmatpush1.bf16.msra.mxu0 0
        %2340 = vmatprep.subr.bf16.mxu0 0
        %2341 = vmatpush1.bf16.msra.mxu0 0
        %2342 = vmatprep.subr.bf16.mxu0 0
        %2343 = vmatpush1.bf16.msra.mxu0 0
        %2344 = vmatprep.subr.bf16.mxu0 0
        %2345 = vmatpush1.bf16.msra.mxu0 0
        %2346 = vmatprep.subr.bf16.mxu0 0
        %2347 = vmatpush1.bf16.msra.mxu0 0
        %2348 = vmatprep.subr.bf16.mxu0 0
        %2349 = vmatpush1.bf16.msra.mxu0 0
        %2350 = vmatprep.mubr.bf16.mxu0 0
        %2351 = vmatmul.mubr.bf16.gmra.mrb[0].mxu0 %v662
        %v2352 = vpop.f32.mrb[0].mxu0
        %v2353 = vadd.f32 %v603, %v2352
        %v2354 = vpop.f32.mrb[0].mxu0
        %v2355 = vpop.f32.mrb[0].mxu0
        %v2356 = vadd.f32 %v608, %v2355
        %v2357 = vpop.f32.mrb[0].mxu0
        %2358 = vmatprep.mubr.bf16.mxu0 0
        %2359 = vmatmul.mubr.bf16.gmra.mrb[0].mxu0 %v665
        %v2360 = vpop.f32.mrb[0].mxu0
        %v2361 = vadd.f32 %v613, %v2360
        %v2362 = vpop.f32.mrb[0].mxu0
        %v2363 = vpop.f32.mrb[0].mxu0
        %v2364 = vadd.f32 %v618, %v2363
        %v2365 = vpop.f32.mrb[0].mxu0
        %2366 = vmatprep.mubr.bf16.mxu0 0
        %2367 = vmatmul.mubr.bf16.gmra.mrb[0].mxu0 %v668
        %v2368 = vpop.f32.mrb[0].mxu0
        %v2369 = vadd.f32 %v623, %v2368
        %v2370 = vpop.f32.mrb[0].mxu0
        %v2371 = vpop.f32.mrb[0].mxu0
        %v2372 = vadd.f32 %v628, %v2371
        %v2373 = vpop.f32.mrb[0].mxu0
        %2374 = vmatprep.mubr.bf16.mxu0 0
        %2375 = vmatmul.mubr.bf16.gmra.mrb[0].mxu0 %v671
        %v2376 = vpop.f32.mrb[0].mxu0
        %v2377 = vadd.f32 %v633, %v2376
        %v2378 = vpop.f32.mrb[0].mxu0
        %v2379 = vpop.f32.mrb[0].mxu0
        %v2380 = vadd.f32 %v638, %v2379
        %v2381 = vpop.f32.mrb[0].mxu0
        %2382 = vdwg.mxu0
        %v2383 = vmax.f32 %v2353, 0.0
        %v2384 = vmax.f32 %v2356, 0.0
        %v2385 = vmax.f32 %v2361, 0.0
        %v2386 = vmax.f32 %v2364, 0.0
        %v2387 = vmax.f32 %v2369, 0.0
        %v2388 = vmax.f32 %v2372, 0.0
        %v2389 = vmax.f32 %v2377, 0.0
        %v2390 = vmax.f32 %v2380, 0.0
        %v2391 = vpack.c.bf16 %v2384, %v2383
        %v2392 = vpack.c.bf16 %v2386, %v2385
        %v2393 = vpack.c.bf16 %v2388, %v2387
        %v2394 = vpack.c.bf16 %v2390, %v2389
        %2395 = vmatprep.subr.bf16.mxu0 0
        %2396 = vmatpush1.bf16.msra.mxu0 %v2391
        %2397 = vmatprep.subr.bf16.mxu0 0
        %2398 = vmatpush1.bf16.msra.mxu0 %v2392
        %2399 = vmatprep.subr.bf16.mxu0 0
        %2400 = vmatpush1.bf16.msra.mxu0 %v2393
        %2401 = vmatprep.subr.bf16.mxu0 0
        %2402 = vmatpush1.bf16.msra.mxu0 %v2394
        %2403 = vmatprep.subr.bf16.mxu0 0
        %2404 = vmatpush1.bf16.msra.mxu0 0
        %2405 = vmatprep.subr.bf16.mxu0 0
        %2406 = vmatpush1.bf16.msra.mxu0 0
        %2407 = vmatprep.subr.bf16.mxu0 0
        %2408 = vmatpush1.bf16.msra.mxu0 0
        %2409 = vmatprep.subr.bf16.mxu0 0
        %2410 = vmatpush1.bf16.msra.mxu0 0
        %2411 = vmatprep.subr.bf16.mxu0 0
        %2412 = vmatpush1.bf16.msra.mxu0 0
        %2413 = vmatprep.subr.bf16.mxu0 0
        %2414 = vmatpush1.bf16.msra.mxu0 0
        %2415 = vmatprep.subr.bf16.mxu0 0
        %2416 = vmatpush1.bf16.msra.mxu0 0
        %2417 = vmatprep.subr.bf16.mxu0 0
        %2418 = vmatpush1.bf16.msra.mxu0 0
        %2419 = vmatprep.subr.bf16.mxu0 0
        %2420 = vmatpush1.bf16.msra.mxu0 0
        %2421 = vmatprep.subr.bf16.mxu0 0
        %2422 = vmatpush1.bf16.msra.mxu0 0
        %2423 = vmatprep.subr.bf16.mxu0 0
        %2424 = vmatpush1.bf16.msra.mxu0 0
        %2425 = vmatprep.subr.bf16.mxu0 0
        %2426 = vmatpush1.bf16.msra.mxu0 0
        %2427 = vmatprep.mubr.bf16.mxu0 0
        %2428 = vmatmul.mubr.bf16.gmra.mrb[0].mxu0 %v888
        %v2429 = vpop.f32.mrb[0].mxu0
        %v2430 = vadd.f32 %v769, %v2429
        %v2431 = vpop.f32.mrb[0].mxu0
        %v2432 = vpop.f32.mrb[0].mxu0
        %v2433 = vadd.f32 %v774, %v2432
        %v2434 = vpop.f32.mrb[0].mxu0
        %2435 = vmatprep.mubr.bf16.mxu0 0
        %2436 = vmatmul.mubr.bf16.gmra.mrb[0].mxu0 %v891
        %v2437 = vpop.f32.mrb[0].mxu0
        %v2438 = vadd.f32 %v779, %v2437
        %v2439 = vpop.f32.mrb[0].mxu0
        %v2440 = vpop.f32.mrb[0].mxu0
        %v2441 = vadd.f32 %v784, %v2440
        %v2442 = vpop.f32.mrb[0].mxu0
        %2443 = vmatprep.mubr.bf16.mxu0 0
        %2444 = vmatmul.mubr.bf16.gmra.mrb[0].mxu0 %v894
        %v2445 = vpop.f32.mrb[0].mxu0
        %v2446 = vadd.f32 %v789, %v2445
        %v2447 = vpop.f32.mrb[0].mxu0
        %v2448 = vpop.f32.mrb[0].mxu0
        %v2449 = vadd.f32 %v794, %v2448
        %v2450 = vpop.f32.mrb[0].mxu0
        %2451 = vmatprep.mubr.bf16.mxu0 0
        %2452 = vmatmul.mubr.bf16.gmra.mrb[0].mxu0 %v897
        %v2453 = vpop.f32.mrb[0].mxu0
        %v2454 = vadd.f32 %v799, %v2453
        %v2455 = vpop.f32.mrb[0].mxu0
        %v2456 = vpop.f32.mrb[0].mxu0
        %v2457 = vadd.f32 %v804, %v2456
        %v2458 = vpop.f32.mrb[0].mxu0
        %2459 = vmatprep.mubr.bf16.mxu0 0
        %2460 = vmatmul.mubr.bf16.gmra.mrb[0].mxu0 %v900
        %v2461 = vpop.f32.mrb[0].mxu0
        %v2462 = vadd.f32 %v809, %v2461
        %v2463 = vpop.f32.mrb[0].mxu0
        %v2464 = vpop.f32.mrb[0].mxu0
        %v2465 = vadd.f32 %v814, %v2464
        %v2466 = vpop.f32.mrb[0].mxu0
        %2467 = vmatprep.mubr.bf16.mxu0 0
        %2468 = vmatmul.mubr.bf16.gmra.mrb[0].mxu0 %v903
        %v2469 = vpop.f32.mrb[0].mxu0
        %v2470 = vadd.f32 %v819, %v2469
        %v2471 = vpop.f32.mrb[0].mxu0
        %v2472 = vpop.f32.mrb[0].mxu0
        %v2473 = vadd.f32 %v824, %v2472
        %v2474 = vpop.f32.mrb[0].mxu0
        %2475 = vmatprep.mubr.bf16.mxu0 0
        %2476 = vmatmul.mubr.bf16.gmra.mrb[0].mxu0 %v906
        %v2477 = vpop.f32.mrb[0].mxu0
        %v2478 = vadd.f32 %v829, %v2477
        %v2479 = vpop.f32.mrb[0].mxu0
        %v2480 = vpop.f32.mrb[0].mxu0
        %v2481 = vadd.f32 %v834, %v2480
        %v2482 = vpop.f32.mrb[0].mxu0
        %2483 = vmatprep.mubr.bf16.mxu0 0
        %2484 = vmatmul.mubr.bf16.gmra.mrb[0].mxu0 %v909
        %v2485 = vpop.f32.mrb[0].mxu0
        %v2486 = vadd.f32 %v839, %v2485
        %v2487 = vpop.f32.mrb[0].mxu0
        %v2488 = vpop.f32.mrb[0].mxu0
        %v2489 = vadd.f32 %v844, %v2488
        %v2490 = vpop.f32.mrb[0].mxu0
        %2491 = vdwg.mxu0
        %v2492 = vmax.f32 %v2430, 0.0
        %v2493 = vmax.f32 %v2433, 0.0
        %v2494 = vmax.f32 %v2438, 0.0
        %v2495 = vmax.f32 %v2441, 0.0
        %v2496 = vmax.f32 %v2446, 0.0
        %v2497 = vmax.f32 %v2449, 0.0
        %v2498 = vmax.f32 %v2454, 0.0
        %v2499 = vmax.f32 %v2457, 0.0
        %v2500 = vmax.f32 %v2462, 0.0
        %v2501 = vmax.f32 %v2465, 0.0
        %v2502 = vmax.f32 %v2470, 0.0
        %v2503 = vmax.f32 %v2473, 0.0
        %v2504 = vmax.f32 %v2478, 0.0
        %v2505 = vmax.f32 %v2481, 0.0
        %v2506 = vmax.f32 %v2486, 0.0
        %v2507 = vmax.f32 %v2489, 0.0
        %v2508 = vpack.c.bf16 %v2493, %v2492
        %v2509 = vpack.c.bf16 %v2495, %v2494
        %v2510 = vpack.c.bf16 %v2497, %v2496
        %v2511 = vpack.c.bf16 %v2499, %v2498
        %v2512 = vpack.c.bf16 %v2501, %v2500
        %v2513 = vpack.c.bf16 %v2503, %v2502
        %v2514 = vpack.c.bf16 %v2505, %v2504
        %v2515 = vpack.c.bf16 %v2507, %v2506
        %2516 = vmatprep.subr.bf16.mxu0 0
        %2517 = vmatpush1.bf16.msra.mxu0 %v2508
        %2518 = vmatprep.subr.bf16.mxu0 0
        %2519 = vmatpush1.bf16.msra.mxu0 %v2509
        %2520 = vmatprep.subr.bf16.mxu0 0
        %2521 = vmatpush1.bf16.msra.mxu0 %v2510
        %2522 = vmatprep.subr.bf16.mxu0 0
        %2523 = vmatpush1.bf16.msra.mxu0 %v2511
        %2524 = vmatprep.subr.bf16.mxu0 0
        %2525 = vmatpush1.bf16.msra.mxu0 %v2512
        %2526 = vmatprep.subr.bf16.mxu0 0
        %2527 = vmatpush1.bf16.msra.mxu0 %v2513
        %2528 = vmatprep.subr.bf16.mxu0 0
        %2529 = vmatpush1.bf16.msra.mxu0 %v2514
        %2530 = vmatprep.subr.bf16.mxu0 0
        %2531 = vmatpush1.bf16.msra.mxu0 %v2515
        %2532 = vmatprep.subr.bf16.mxu0 0
        %2533 = vmatpush1.bf16.msra.mxu0 0
        %2534 = vmatprep.subr.bf16.mxu0 0
        %2535 = vmatpush1.bf16.msra.mxu0 0
        %2536 = vmatprep.subr.bf16.mxu0 0
        %2537 = vmatpush1.bf16.msra.mxu0 0
        %2538 = vmatprep.subr.bf16.mxu0 0
        %2539 = vmatpush1.bf16.msra.mxu0 0
        %2540 = vmatprep.subr.bf16.mxu0 0
        %2541 = vmatpush1.bf16.msra.mxu0 0
        %2542 = vmatprep.subr.bf16.mxu0 0
        %2543 = vmatpush1.bf16.msra.mxu0 0
        %2544 = vmatprep.subr.bf16.mxu0 0
        %2545 = vmatpush1.bf16.msra.mxu0 0
        %2546 = vmatprep.subr.bf16.mxu0 0
        %2547 = vmatpush1.bf16.msra.mxu0 0
        %2548 = vmatprep.mubr.bf16.mxu0 0
        %2549 = vmatmul.mubr.bf16.gmra.mrb[0].mxu0 %v1096
        %v2550 = vpop.f32.mrb[0].mxu0
        %v2551 = vadd.f32 %v1043, %v2550
        %v2552 = vpop.f32.mrb[0].mxu0
        %v2553 = vpop.f32.mrb[0].mxu0
        %v2554 = vadd.f32 %v1048, %v2553
        %v2555 = vpop.f32.mrb[0].mxu0
        %2556 = vmatprep.mubr.bf16.mxu0 0
        %2557 = vmatmul.mubr.bf16.gmra.mrb[0].mxu0 %v1097
        %v2558 = vpop.f32.mrb[0].mxu0
        %v2559 = vadd.f32 %v1053, %v2558
        %v2560 = vpop.f32.mrb[0].mxu0
        %v2561 = vpop.f32.mrb[0].mxu0
        %v2562 = vadd.f32 %v1058, %v2561
        %v2563 = vpop.f32.mrb[0].mxu0
        %2564 = vmatprep.mubr.bf16.mxu0 0
        %2565 = vmatmul.mubr.bf16.gmra.mrb[0].mxu0 %v1098
        %v2566 = vpop.f32.mrb[0].mxu0
        %v2567 = vadd.f32 %v1063, %v2566
        %v2568 = vpop.f32.mrb[0].mxu0
        %v2569 = vpop.f32.mrb[0].mxu0
        %v2570 = vadd.f32 %v1068, %v2569
        %v2571 = vpop.f32.mrb[0].mxu0
        %2572 = vmatprep.mubr.bf16.mxu0 0
        %2573 = vmatmul.mubr.bf16.gmra.mrb[0].mxu0 %v1099
        %v2574 = vpop.f32.mrb[0].mxu0
        %v2575 = vadd.f32 %v1073, %v2574
        %v2576 = vpop.f32.mrb[0].mxu0
        %v2577 = vpop.f32.mrb[0].mxu0
        %v2578 = vadd.f32 %v1078, %v2577
        %v2579 = vpop.f32.mrb[0].mxu0
        %2580 = vdwg.mxu0
        %v2581 = vmax.f32 %v2551, 0.0
        %v2582 = vmax.f32 %v2554, 0.0
        %v2583 = vmax.f32 %v2559, 0.0
        %v2584 = vmax.f32 %v2562, 0.0
        %v2585 = vmax.f32 %v2567, 0.0
        %v2586 = vmax.f32 %v2570, 0.0
        %v2587 = vmax.f32 %v2575, 0.0
        %v2588 = vmax.f32 %v2578, 0.0
        %v2589 = vpack.c.bf16 %v2582, %v2581
        %v2590 = vpack.c.bf16 %v2584, %v2583
        %v2591 = vpack.c.bf16 %v2586, %v2585
        %v2592 = vpack.c.bf16 %v2588, %v2587
        %v2593 = vmax.bf16 %v2240, %v2316
        %v2594 = vmax.bf16 %v2241, %v2317
        %v2595 = vmax.bf16 %v2242, %v2391
        %v2596 = vmax.bf16 %v2243, %v2392
        %v2597 = vmax.bf16 %v2244, %v2393
        %v2598 = vmax.bf16 %v2245, %v2394
        %v2599 = vmax.bf16 %v2246, %v2508
        %v2600 = vmax.bf16 %v2247, %v2509
        %v2601 = vmax.bf16 %v2248, %v2510
        %v2602 = vmax.bf16 %v2249, %v2511
        %v2603 = vmax.bf16 %v2250, %v2512
        %v2604 = vmax.bf16 %v2251, %v2513
        %v2605 = vmax.bf16 %v2252, %v2514
        %v2606 = vmax.bf16 %v2253, %v2515
        %v2607 = vmax.bf16 %v2254, %v2589
        %v2608 = vmax.bf16 %v2255, %v2590
        %v2609 = vmax.bf16 %v2256, %v2591
        %v2610 = vmax.bf16 %v2257, %v2592
        %s2611 = scalar_lea.vmem %s417, 10 [#allocation2]
        %v2612 = vld [vmem:[%s2611] sm:$0x3]
        %v2614 = vsel %vm533, %v2612, 0
        %2616 = vmatprep.subr.bf16.mxu0 0
        %2617 = vmatpush1.bf16.msra.mxu0 %v2614
        %2618 = vmatprep.subr.bf16.mxu0 0
        %2619 = vmatpush1.bf16.msra.mxu0 0
        %2620 = vmatprep.subr.bf16.mxu0 0
        %2621 = vmatpush1.bf16.msra.mxu0 0
        %2622 = vmatprep.subr.bf16.mxu0 0
        %2623 = vmatpush1.bf16.msra.mxu0 0
        %2624 = vmatprep.subr.bf16.mxu0 0
        %2625 = vmatpush1.bf16.msra.mxu0 0
        %2626 = vmatprep.subr.bf16.mxu0 0
        %2627 = vmatpush1.bf16.msra.mxu0 0
        %2628 = vmatprep.subr.bf16.mxu0 0
        %2629 = vmatpush1.bf16.msra.mxu0 0
        %2630 = vmatprep.subr.bf16.mxu0 0
        %2631 = vmatpush1.bf16.msra.mxu0 0
        %2632 = vmatprep.subr.bf16.mxu0 0
        %2633 = vmatpush1.bf16.msra.mxu0 0
        %2634 = vmatprep.subr.bf16.mxu0 0
        %2635 = vmatpush1.bf16.msra.mxu0 0
        %2636 = vmatprep.subr.bf16.mxu0 0
        %2637 = vmatpush1.bf16.msra.mxu0 0
        %2638 = vmatprep.subr.bf16.mxu0 0
        %2639 = vmatpush1.bf16.msra.mxu0 0
        %2640 = vmatprep.subr.bf16.mxu0 0
        %2641 = vmatpush1.bf16.msra.mxu0 0
        %2642 = vmatprep.subr.bf16.mxu0 0
        %2643 = vmatpush1.bf16.msra.mxu0 0
        %2644 = vmatprep.subr.bf16.mxu0 0
        %2645 = vmatpush1.bf16.msra.mxu0 0
        %2646 = vmatprep.subr.bf16.mxu0 0
        %2647 = vmatpush1.bf16.msra.mxu0 0
        %2648 = vmatprep.mubr.bf16.mxu0 0
        %2649 = vmatmul.mubr.bf16.gmra.mrb[0].mxu0 %v528
        %v2650 = vpop.f32.mrb[0].mxu0
        %v2651 = vadd.f32 %v499, %v2650
        %v2652 = vpop.f32.mrb[0].mxu0
        %v2653 = vpop.f32.mrb[0].mxu0
        %v2654 = vadd.f32 %v504, %v2653
        %v2655 = vpop.f32.mrb[0].mxu0
        %2656 = vmatprep.mubr.bf16.mxu0 0
        %2657 = vmatmul.mubr.bf16.gmra.mrb[0].mxu0 %v531
        %v2658 = vpop.f32.mrb[0].mxu0
        %v2659 = vadd.f32 %v509, %v2658
        %v2660 = vpop.f32.mrb[0].mxu0
        %v2661 = vpop.f32.mrb[0].mxu0
        %v2662 = vadd.f32 %v514, %v2661
        %v2663 = vpop.f32.mrb[0].mxu0
        %2664 = vdwg.mxu0
        %v2665 = vmax.f32 %v2651, 0.0
        %v2666 = vmax.f32 %v2654, 0.0
        %v2667 = vmax.f32 %v2659, 0.0
        %v2668 = vmax.f32 %v2662, 0.0
        %v2669 = vpack.c.bf16 %v2666, %v2665
        %v2670 = vpack.c.bf16 %v2668, %v2667
        %2671 = vmatprep.subr.bf16.mxu0 0
        %2672 = vmatpush1.bf16.msra.mxu0 %v2669
        %2673 = vmatprep.subr.bf16.mxu0 0
        %2674 = vmatpush1.bf16.msra.mxu0 %v2670
        %2675 = vmatprep.subr.bf16.mxu0 0
        %2676 = vmatpush1.bf16.msra.mxu0 0
        %2677 = vmatprep.subr.bf16.mxu0 0
        %2678 = vmatpush1.bf16.msra.mxu0 0
        %2679 = vmatprep.subr.bf16.mxu0 0
        %2680 = vmatpush1.bf16.msra.mxu0 0
        %2681 = vmatprep.subr.bf16.mxu0 0
        %2682 = vmatpush1.bf16.msra.mxu0 0
        %2683 = vmatprep.subr.bf16.mxu0 0
        %2684 = vmatpush1.bf16.msra.mxu0 0
        %2685 = vmatprep.subr.bf16.mxu0 0
        %2686 = vmatpush1.bf16.msra.mxu0 0
        %2687 = vmatprep.subr.bf16.mxu0 0
        %2688 = vmatpush1.bf16.msra.mxu0 0
        %2689 = vmatprep.subr.bf16.mxu0 0
        %2690 = vmatpush1.bf16.msra.mxu0 0
        %2691 = vmatprep.subr.bf16.mxu0 0
        %2692 = vmatpush1.bf16.msra.mxu0 0
        %2693 = vmatprep.subr.bf16.mxu0 0
        %2694 = vmatpush1.bf16.msra.mxu0 0
        %2695 = vmatprep.subr.bf16.mxu0 0
        %2696 = vmatpush1.bf16.msra.mxu0 0
        %2697 = vmatprep.subr.bf16.mxu0 0
        %2698 = vmatpush1.bf16.msra.mxu0 0
        %2699 = vmatprep.subr.bf16.mxu0 0
        %2700 = vmatpush1.bf16.msra.mxu0 0
        %2701 = vmatprep.subr.bf16.mxu0 0
        %2702 = vmatpush1.bf16.msra.mxu0 0
        %2703 = vmatprep.mubr.bf16.mxu0 0
        %2704 = vmatmul.mubr.bf16.gmra.mrb[0].mxu0 %v662
        %v2705 = vpop.f32.mrb[0].mxu0
        %v2706 = vadd.f32 %v603, %v2705
        %v2707 = vpop.f32.mrb[0].mxu0
        %v2708 = vpop.f32.mrb[0].mxu0
        %v2709 = vadd.f32 %v608, %v2708
        %v2710 = vpop.f32.mrb[0].mxu0
        %2711 = vmatprep.mubr.bf16.mxu0 0
        %2712 = vmatmul.mubr.bf16.gmra.mrb[0].mxu0 %v665
        %v2713 = vpop.f32.mrb[0].mxu0
        %v2714 = vadd.f32 %v613, %v2713
        %v2715 = vpop.f32.mrb[0].mxu0
        %v2716 = vpop.f32.mrb[0].mxu0
        %v2717 = vadd.f32 %v618, %v2716
        %v2718 = vpop.f32.mrb[0].mxu0
        %2719 = vmatprep.mubr.bf16.mxu0 0
        %2720 = vmatmul.mubr.bf16.gmra.mrb[0].mxu0 %v668
        %v2721 = vpop.f32.mrb[0].mxu0
        %v2722 = vadd.f32 %v623, %v2721
        %v2723 = vpop.f32.mrb[0].mxu0
        %v2724 = vpop.f32.mrb[0].mxu0
        %v2725 = vadd.f32 %v628, %v2724
        %v2726 = vpop.f32.mrb[0].mxu0
        %2727 = vmatprep.mubr.bf16.mxu0 0
        %2728 = vmatmul.mubr.bf16.gmra.mrb[0].mxu0 %v671
        %v2729 = vpop.f32.mrb[0].mxu0
        %v2730 = vadd.f32 %v633, %v2729
        %v2731 = vpop.f32.mrb[0].mxu0
        %v2732 = vpop.f32.mrb[0].mxu0
        %v2733 = vadd.f32 %v638, %v2732
        %v2734 = vpop.f32.mrb[0].mxu0
        %2735 = vdwg.mxu0
        %v2736 = vmax.f32 %v2706, 0.0
        %v2737 = vmax.f32 %v2709, 0.0
        %v2738 = vmax.f32 %v2714, 0.0
        %v2739 = vmax.f32 %v2717, 0.0
        %v2740 = vmax.f32 %v2722, 0.0
        %v2741 = vmax.f32 %v2725, 0.0
        %v2742 = vmax.f32 %v2730, 0.0
        %v2743 = vmax.f32 %v2733, 0.0
        %v2744 = vpack.c.bf16 %v2737, %v2736
        %v2745 = vpack.c.bf16 %v2739, %v2738
        %v2746 = vpack.c.bf16 %v2741, %v2740
        %v2747 = vpack.c.bf16 %v2743, %v2742
        %2748 = vmatprep.subr.bf16.mxu0 0
        %2749 = vmatpush1.bf16.msra.mxu0 %v2744
        %2750 = vmatprep.subr.bf16.mxu0 0
        %2751 = vmatpush1.bf16.msra.mxu0 %v2745
        %2752 = vmatprep.subr.bf16.mxu0 0
        %2753 = vmatpush1.bf16.msra.mxu0 %v2746
        %2754 = vmatprep.subr.bf16.mxu0 0
        %2755 = vmatpush1.bf16.msra.mxu0 %v2747
        %2756 = vmatprep.subr.bf16.mxu0 0
        %2757 = vmatpush1.bf16.msra.mxu0 0
        %2758 = vmatprep.subr.bf16.mxu0 0
        %2759 = vmatpush1.bf16.msra.mxu0 0
        %2760 = vmatprep.subr.bf16.mxu0 0
        %2761 = vmatpush1.bf16.msra.mxu0 0
        %2762 = vmatprep.subr.bf16.mxu0 0
        %2763 = vmatpush1.bf16.msra.mxu0 0
        %2764 = vmatprep.subr.bf16.mxu0 0
        %2765 = vmatpush1.bf16.msra.mxu0 0
        %2766 = vmatprep.subr.bf16.mxu0 0
        %2767 = vmatpush1.bf16.msra.mxu0 0
        %2768 = vmatprep.subr.bf16.mxu0 0
        %2769 = vmatpush1.bf16.msra.mxu0 0
        %2770 = vmatprep.subr.bf16.mxu0 0
        %2771 = vmatpush1.bf16.msra.mxu0 0
        %2772 = vmatprep.subr.bf16.mxu0 0
        %2773 = vmatpush1.bf16.msra.mxu0 0
        %2774 = vmatprep.subr.bf16.mxu0 0
        %2775 = vmatpush1.bf16.msra.mxu0 0
        %2776 = vmatprep.subr.bf16.mxu0 0
        %2777 = vmatpush1.bf16.msra.mxu0 0
        %2778 = vmatprep.subr.bf16.mxu0 0
        %2779 = vmatpush1.bf16.msra.mxu0 0
        %2780 = vmatprep.mubr.bf16.mxu0 0
        %2781 = vmatmul.mubr.bf16.gmra.mrb[0].mxu0 %v888
        %v2782 = vpop.f32.mrb[0].mxu0
        %v2783 = vadd.f32 %v769, %v2782
        %v2784 = vpop.f32.mrb[0].mxu0
        %v2785 = vpop.f32.mrb[0].mxu0
        %v2786 = vadd.f32 %v774, %v2785
        %v2787 = vpop.f32.mrb[0].mxu0
        %2788 = vmatprep.mubr.bf16.mxu0 0
        %2789 = vmatmul.mubr.bf16.gmra.mrb[0].mxu0 %v891
        %v2790 = vpop.f32.mrb[0].mxu0
        %v2791 = vadd.f32 %v779, %v2790
        %v2792 = vpop.f32.mrb[0].mxu0
        %v2793 = vpop.f32.mrb[0].mxu0
        %v2794 = vadd.f32 %v784, %v2793
        %v2795 = vpop.f32.mrb[0].mxu0
        %2796 = vmatprep.mubr.bf16.mxu0 0
        %2797 = vmatmul.mubr.bf16.gmra.mrb[0].mxu0 %v894
        %v2798 = vpop.f32.mrb[0].mxu0
        %v2799 = vadd.f32 %v789, %v2798
        %v2800 = vpop.f32.mrb[0].mxu0
        %v2801 = vpop.f32.mrb[0].mxu0
        %v2802 = vadd.f32 %v794, %v2801
        %v2803 = vpop.f32.mrb[0].mxu0
        %2804 = vmatprep.mubr.bf16.mxu0 0
        %2805 = vmatmul.mubr.bf16.gmra.mrb[0].mxu0 %v897
        %v2806 = vpop.f32.mrb[0].mxu0
        %v2807 = vadd.f32 %v799, %v2806
        %v2808 = vpop.f32.mrb[0].mxu0
        %v2809 = vpop.f32.mrb[0].mxu0
        %v2810 = vadd.f32 %v804, %v2809
        %v2811 = vpop.f32.mrb[0].mxu0
        %2812 = vmatprep.mubr.bf16.mxu0 0
        %2813 = vmatmul.mubr.bf16.gmra.mrb[0].mxu0 %v900
        %v2814 = vpop.f32.mrb[0].mxu0
        %v2815 = vadd.f32 %v809, %v2814
        %v2816 = vpop.f32.mrb[0].mxu0
        %v2817 = vpop.f32.mrb[0].mxu0
        %v2818 = vadd.f32 %v814, %v2817
        %v2819 = vpop.f32.mrb[0].mxu0
        %2820 = vmatprep.mubr.bf16.mxu0 0
        %2821 = vmatmul.mubr.bf16.gmra.mrb[0].mxu0 %v903
        %v2822 = vpop.f32.mrb[0].mxu0
        %v2823 = vadd.f32 %v819, %v2822
        %v2824 = vpop.f32.mrb[0].mxu0
        %v2825 = vpop.f32.mrb[0].mxu0
        %v2826 = vadd.f32 %v824, %v2825
        %v2827 = vpop.f32.mrb[0].mxu0
        %2828 = vmatprep.mubr.bf16.mxu0 0
        %2829 = vmatmul.mubr.bf16.gmra.mrb[0].mxu0 %v906
        %v2830 = vpop.f32.mrb[0].mxu0
        %v2831 = vadd.f32 %v829, %v2830
        %v2832 = vpop.f32.mrb[0].mxu0
        %v2833 = vpop.f32.mrb[0].mxu0
        %v2834 = vadd.f32 %v834, %v2833
        %v2835 = vpop.f32.mrb[0].mxu0
        %2836 = vmatprep.mubr.bf16.mxu0 0
        %2837 = vmatmul.mubr.bf16.gmra.mrb[0].mxu0 %v909
        %v2838 = vpop.f32.mrb[0].mxu0
        %v2839 = vadd.f32 %v839, %v2838
        %v2840 = vpop.f32.mrb[0].mxu0
        %v2841 = vpop.f32.mrb[0].mxu0
        %v2842 = vadd.f32 %v844, %v2841
        %v2843 = vpop.f32.mrb[0].mxu0
        %2844 = vdwg.mxu0
        %v2845 = vmax.f32 %v2783, 0.0
        %v2846 = vmax.f32 %v2786, 0.0
        %v2847 = vmax.f32 %v2791, 0.0
        %v2848 = vmax.f32 %v2794, 0.0
        %v2849 = vmax.f32 %v2799, 0.0
        %v2850 = vmax.f32 %v2802, 0.0
        %v2851 = vmax.f32 %v2807, 0.0
        %v2852 = vmax.f32 %v2810, 0.0
        %v2853 = vmax.f32 %v2815, 0.0
        %v2854 = vmax.f32 %v2818, 0.0
        %v2855 = vmax.f32 %v2823, 0.0
        %v2856 = vmax.f32 %v2826, 0.0
        %v2857 = vmax.f32 %v2831, 0.0
        %v2858 = vmax.f32 %v2834, 0.0
        %v2859 = vmax.f32 %v2839, 0.0
        %v2860 = vmax.f32 %v2842, 0.0
        %v2861 = vpack.c.bf16 %v2846, %v2845
        %v2862 = vpack.c.bf16 %v2848, %v2847
        %v2863 = vpack.c.bf16 %v2850, %v2849
        %v2864 = vpack.c.bf16 %v2852, %v2851
        %v2865 = vpack.c.bf16 %v2854, %v2853
        %v2866 = vpack.c.bf16 %v2856, %v2855
        %v2867 = vpack.c.bf16 %v2858, %v2857
        %v2868 = vpack.c.bf16 %v2860, %v2859
        %2869 = vmatprep.subr.bf16.mxu0 0
        %2870 = vmatpush1.bf16.msra.mxu0 %v2861
        %2871 = vmatprep.subr.bf16.mxu0 0
        %2872 = vmatpush1.bf16.msra.mxu0 %v2862
        %2873 = vmatprep.subr.bf16.mxu0 0
        %2874 = vmatpush1.bf16.msra.mxu0 %v2863
        %2875 = vmatprep.subr.bf16.mxu0 0
        %2876 = vmatpush1.bf16.msra.mxu0 %v2864
        %2877 = vmatprep.subr.bf16.mxu0 0
        %2878 = vmatpush1.bf16.msra.mxu0 %v2865
        %2879 = vmatprep.subr.bf16.mxu0 0
        %2880 = vmatpush1.bf16.msra.mxu0 %v2866
        %2881 = vmatprep.subr.bf16.mxu0 0
        %2882 = vmatpush1.bf16.msra.mxu0 %v2867
        %2883 = vmatprep.subr.bf16.mxu0 0
        %2884 = vmatpush1.bf16.msra.mxu0 %v2868
        %2885 = vmatprep.subr.bf16.mxu0 0
        %2886 = vmatpush1.bf16.msra.mxu0 0
        %2887 = vmatprep.subr.bf16.mxu0 0
        %2888 = vmatpush1.bf16.msra.mxu0 0
        %2889 = vmatprep.subr.bf16.mxu0 0
        %2890 = vmatpush1.bf16.msra.mxu0 0
        %2891 = vmatprep.subr.bf16.mxu0 0
        %2892 = vmatpush1.bf16.msra.mxu0 0
        %2893 = vmatprep.subr.bf16.mxu0 0
        %2894 = vmatpush1.bf16.msra.mxu0 0
        %2895 = vmatprep.subr.bf16.mxu0 0
        %2896 = vmatpush1.bf16.msra.mxu0 0
        %2897 = vmatprep.subr.bf16.mxu0 0
        %2898 = vmatpush1.bf16.msra.mxu0 0
        %2899 = vmatprep.subr.bf16.mxu0 0
        %2900 = vmatpush1.bf16.msra.mxu0 0
        %2901 = vmatprep.mubr.bf16.mxu0 0
        %2902 = vmatmul.mubr.bf16.gmra.mrb[0].mxu0 %v1096
        %v2903 = vpop.f32.mrb[0].mxu0
        %v2904 = vadd.f32 %v1043, %v2903
        %v2905 = vpop.f32.mrb[0].mxu0
        %v2906 = vpop.f32.mrb[0].mxu0
        %v2907 = vadd.f32 %v1048, %v2906
        %v2908 = vpop.f32.mrb[0].mxu0
        %2909 = vmatprep.mubr.bf16.mxu0 0
        %2910 = vmatmul.mubr.bf16.gmra.mrb[0].mxu0 %v1097
        %v2911 = vpop.f32.mrb[0].mxu0
        %v2912 = vadd.f32 %v1053, %v2911
        %v2913 = vpop.f32.mrb[0].mxu0
        %v2914 = vpop.f32.mrb[0].mxu0
        %v2915 = vadd.f32 %v1058, %v2914
        %v2916 = vpop.f32.mrb[0].mxu0
        %2917 = vmatprep.mubr.bf16.mxu0 0
        %2918 = vmatmul.mubr.bf16.gmra.mrb[0].mxu0 %v1098
        %v2919 = vpop.f32.mrb[0].mxu0
        %v2920 = vadd.f32 %v1063, %v2919
        %v2921 = vpop.f32.mrb[0].mxu0
        %v2922 = vpop.f32.mrb[0].mxu0
        %v2923 = vadd.f32 %v1068, %v2922
        %v2924 = vpop.f32.mrb[0].mxu0
        %2925 = vmatprep.mubr.bf16.mxu0 0
        %2926 = vmatmul.mubr.bf16.gmra.mrb[0].mxu0 %v1099
        %v2927 = vpop.f32.mrb[0].mxu0
        %v2928 = vadd.f32 %v1073, %v2927
        %v2929 = vpop.f32.mrb[0].mxu0
        %v2930 = vpop.f32.mrb[0].mxu0
        %v2931 = vadd.f32 %v1078, %v2930
        %v2932 = vpop.f32.mrb[0].mxu0
        %2933 = vdwg.mxu0
        %v2934 = vmax.f32 %v2904, 0.0
        %v2935 = vmax.f32 %v2907, 0.0
        %v2936 = vmax.f32 %v2912, 0.0
        %v2937 = vmax.f32 %v2915, 0.0
        %v2938 = vmax.f32 %v2920, 0.0
        %v2939 = vmax.f32 %v2923, 0.0
        %v2940 = vmax.f32 %v2928, 0.0
        %v2941 = vmax.f32 %v2931, 0.0
        %v2942 = vpack.c.bf16 %v2935, %v2934
        %v2943 = vpack.c.bf16 %v2937, %v2936
        %v2944 = vpack.c.bf16 %v2939, %v2938
        %v2945 = vpack.c.bf16 %v2941, %v2940
        %v2946 = vmax.bf16 %v2593, %v2669
        %v2947 = vmax.bf16 %v2594, %v2670
        %v2948 = vmax.bf16 %v2595, %v2744
        %v2949 = vmax.bf16 %v2596, %v2745
        %v2950 = vmax.bf16 %v2597, %v2746
        %v2951 = vmax.bf16 %v2598, %v2747
        %v2952 = vmax.bf16 %v2599, %v2861
        %v2953 = vmax.bf16 %v2600, %v2862
        %v2954 = vmax.bf16 %v2601, %v2863
        %v2955 = vmax.bf16 %v2602, %v2864
        %v2956 = vmax.bf16 %v2603, %v2865
        %v2957 = vmax.bf16 %v2604, %v2866
        %v2958 = vmax.bf16 %v2605, %v2867
        %v2959 = vmax.bf16 %v2606, %v2868
        %v2960 = vmax.bf16 %v2607, %v2942
        %v2961 = vmax.bf16 %v2608, %v2943
        %v2962 = vmax.bf16 %v2609, %v2944
        %v2963 = vmax.bf16 %v2610, %v2945
        %s2964 = scalar_lea.vmem %s417, 12 [#allocation2]
        %v2965 = vld [vmem:[%s2964] sm:$0x3]
        %v2967 = vsel %vm533, %v2965, 0
        %2969 = vmatprep.subr.bf16.mxu0 0
        %2970 = vmatpush1.bf16.msra.mxu0 %v2967
        %2971 = vmatprep.subr.bf16.mxu0 0
        %2972 = vmatpush1.bf16.msra.mxu0 0
        %2973 = vmatprep.subr.bf16.mxu0 0
        %2974 = vmatpush1.bf16.msra.mxu0 0
        %2975 = vmatprep.subr.bf16.mxu0 0
        %2976 = vmatpush1.bf16.msra.mxu0 0
        %2977 = vmatprep.subr.bf16.mxu0 0
        %2978 = vmatpush1.bf16.msra.mxu0 0
        %2979 = vmatprep.subr.bf16.mxu0 0
        %2980 = vmatpush1.bf16.msra.mxu0 0
        %2981 = vmatprep.subr.bf16.mxu0 0
        %2982 = vmatpush1.bf16.msra.mxu0 0
        %2983 = vmatprep.subr.bf16.mxu0 0
        %2984 = vmatpush1.bf16.msra.mxu0 0
        %2985 = vmatprep.subr.bf16.mxu0 0
        %2986 = vmatpush1.bf16.msra.mxu0 0
        %2987 = vmatprep.subr.bf16.mxu0 0
        %2988 = vmatpush1.bf16.msra.mxu0 0
        %2989 = vmatprep.subr.bf16.mxu0 0
        %2990 = vmatpush1.bf16.msra.mxu0 0
        %2991 = vmatprep.subr.bf16.mxu0 0
        %2992 = vmatpush1.bf16.msra.mxu0 0
        %2993 = vmatprep.subr.bf16.mxu0 0
        %2994 = vmatpush1.bf16.msra.mxu0 0
        %2995 = vmatprep.subr.bf16.mxu0 0
        %2996 = vmatpush1.bf16.msra.mxu0 0
        %2997 = vmatprep.subr.bf16.mxu0 0
        %2998 = vmatpush1.bf16.msra.mxu0 0
        %2999 = vmatprep.subr.bf16.mxu0 0
        %3000 = vmatpush1.bf16.msra.mxu0 0
        %3001 = vmatprep.mubr.bf16.mxu0 0
        %3002 = vmatmul.mubr.bf16.gmra.mrb[0].mxu0 %v528
        %v3003 = vpop.f32.mrb[0].mxu0
        %v3004 = vadd.f32 %v499, %v3003
        %v3005 = vpop.f32.mrb[0].mxu0
        %v3006 = vpop.f32.mrb[0].mxu0
        %v3007 = vadd.f32 %v504, %v3006
        %v3008 = vpop.f32.mrb[0].mxu0
        %3009 = vmatprep.mubr.bf16.mxu0 0
        %3010 = vmatmul.mubr.bf16.gmra.mrb[0].mxu0 %v531
        %v3011 = vpop.f32.mrb[0].mxu0
        %v3012 = vadd.f32 %v509, %v3011
        %v3013 = vpop.f32.mrb[0].mxu0
        %v3014 = vpop.f32.mrb[0].mxu0
        %v3015 = vadd.f32 %v514, %v3014
        %v3016 = vpop.f32.mrb[0].mxu0
        %3017 = vdwg.mxu0
        %v3018 = vmax.f32 %v3004, 0.0
        %v3019 = vmax.f32 %v3007, 0.0
        %v3020 = vmax.f32 %v3012, 0.0
        %v3021 = vmax.f32 %v3015, 0.0
        %v3022 = vpack.c.bf16 %v3019, %v3018
        %v3023 = vpack.c.bf16 %v3021, %v3020
        %3024 = vmatprep.subr.bf16.mxu0 0
        %3025 = vmatpush1.bf16.msra.mxu0 %v3022
        %3026 = vmatprep.subr.bf16.mxu0 0
        %3027 = vmatpush1.bf16.msra.mxu0 %v3023
        %3028 = vmatprep.subr.bf16.mxu0 0
        %3029 = vmatpush1.bf16.msra.mxu0 0
        %3030 = vmatprep.subr.bf16.mxu0 0
        %3031 = vmatpush1.bf16.msra.mxu0 0
        %3032 = vmatprep.subr.bf16.mxu0 0
        %3033 = vmatpush1.bf16.msra.mxu0 0
        %3034 = vmatprep.subr.bf16.mxu0 0
        %3035 = vmatpush1.bf16.msra.mxu0 0
        %3036 = vmatprep.subr.bf16.mxu0 0
        %3037 = vmatpush1.bf16.msra.mxu0 0
        %3038 = vmatprep.subr.bf16.mxu0 0
        %3039 = vmatpush1.bf16.msra.mxu0 0
        %3040 = vmatprep.subr.bf16.mxu0 0
        %3041 = vmatpush1.bf16.msra.mxu0 0
        %3042 = vmatprep.subr.bf16.mxu0 0
        %3043 = vmatpush1.bf16.msra.mxu0 0
        %3044 = vmatprep.subr.bf16.mxu0 0
        %3045 = vmatpush1.bf16.msra.mxu0 0
        %3046 = vmatprep.subr.bf16.mxu0 0
        %3047 = vmatpush1.bf16.msra.mxu0 0
        %3048 = vmatprep.subr.bf16.mxu0 0
        %3049 = vmatpush1.bf16.msra.mxu0 0
        %3050 = vmatprep.subr.bf16.mxu0 0
        %3051 = vmatpush1.bf16.msra.mxu0 0
        %3052 = vmatprep.subr.bf16.mxu0 0
        %3053 = vmatpush1.bf16.msra.mxu0 0
        %3054 = vmatprep.subr.bf16.mxu0 0
        %3055 = vmatpush1.bf16.msra.mxu0 0
        %3056 = vmatprep.mubr.bf16.mxu0 0
        %3057 = vmatmul.mubr.bf16.gmra.mrb[0].mxu0 %v662
        %v3058 = vpop.f32.mrb[0].mxu0
        %v3059 = vadd.f32 %v603, %v3058
        %v3060 = vpop.f32.mrb[0].mxu0
        %v3061 = vpop.f32.mrb[0].mxu0
        %v3062 = vadd.f32 %v608, %v3061
        %v3063 = vpop.f32.mrb[0].mxu0
        %3064 = vmatprep.mubr.bf16.mxu0 0
        %3065 = vmatmul.mubr.bf16.gmra.mrb[0].mxu0 %v665
        %v3066 = vpop.f32.mrb[0].mxu0
        %v3067 = vadd.f32 %v613, %v3066
        %v3068 = vpop.f32.mrb[0].mxu0
        %v3069 = vpop.f32.mrb[0].mxu0
        %v3070 = vadd.f32 %v618, %v3069
        %v3071 = vpop.f32.mrb[0].mxu0
        %3072 = vmatprep.mubr.bf16.mxu0 0
        %3073 = vmatmul.mubr.bf16.gmra.mrb[0].mxu0 %v668
        %v3074 = vpop.f32.mrb[0].mxu0
        %v3075 = vadd.f32 %v623, %v3074
        %v3076 = vpop.f32.mrb[0].mxu0
        %v3077 = vpop.f32.mrb[0].mxu0
        %v3078 = vadd.f32 %v628, %v3077
        %v3079 = vpop.f32.mrb[0].mxu0
        %3080 = vmatprep.mubr.bf16.mxu0 0
        %3081 = vmatmul.mubr.bf16.gmra.mrb[0].mxu0 %v671
        %v3082 = vpop.f32.mrb[0].mxu0
        %v3083 = vadd.f32 %v633, %v3082
        %v3084 = vpop.f32.mrb[0].mxu0
        %v3085 = vpop.f32.mrb[0].mxu0
        %v3086 = vadd.f32 %v638, %v3085
        %v3087 = vpop.f32.mrb[0].mxu0
        %3088 = vdwg.mxu0
        %v3089 = vmax.f32 %v3059, 0.0
        %v3090 = vmax.f32 %v3062, 0.0
        %v3091 = vmax.f32 %v3067, 0.0
        %v3092 = vmax.f32 %v3070, 0.0
        %v3093 = vmax.f32 %v3075, 0.0
        %v3094 = vmax.f32 %v3078, 0.0
        %v3095 = vmax.f32 %v3083, 0.0
        %v3096 = vmax.f32 %v3086, 0.0
        %v3097 = vpack.c.bf16 %v3090, %v3089
        %v3098 = vpack.c.bf16 %v3092, %v3091
        %v3099 = vpack.c.bf16 %v3094, %v3093
        %v3100 = vpack.c.bf16 %v3096, %v3095
        %3101 = vmatprep.subr.bf16.mxu0 0
        %3102 = vmatpush1.bf16.msra.mxu0 %v3097
        %3103 = vmatprep.subr.bf16.mxu0 0
        %3104 = vmatpush1.bf16.msra.mxu0 %v3098
        %3105 = vmatprep.subr.bf16.mxu0 0
        %3106 = vmatpush1.bf16.msra.mxu0 %v3099
        %3107 = vmatprep.subr.bf16.mxu0 0
        %3108 = vmatpush1.bf16.msra.mxu0 %v3100
        %3109 = vmatprep.subr.bf16.mxu0 0
        %3110 = vmatpush1.bf16.msra.mxu0 0
        %3111 = vmatprep.subr.bf16.mxu0 0
        %3112 = vmatpush1.bf16.msra.mxu0 0
        %3113 = vmatprep.subr.bf16.mxu0 0
        %3114 = vmatpush1.bf16.msra.mxu0 0
        %3115 = vmatprep.subr.bf16.mxu0 0
        %3116 = vmatpush1.bf16.msra.mxu0 0
        %3117 = vmatprep.subr.bf16.mxu0 0
        %3118 = vmatpush1.bf16.msra.mxu0 0
        %3119 = vmatprep.subr.bf16.mxu0 0
        %3120 = vmatpush1.bf16.msra.mxu0 0
        %3121 = vmatprep.subr.bf16.mxu0 0
        %3122 = vmatpush1.bf16.msra.mxu0 0
        %3123 = vmatprep.subr.bf16.mxu0 0
        %3124 = vmatpush1.bf16.msra.mxu0 0
        %3125 = vmatprep.subr.bf16.mxu0 0
        %3126 = vmatpush1.bf16.msra.mxu0 0
        %3127 = vmatprep.subr.bf16.mxu0 0
        %3128 = vmatpush1.bf16.msra.mxu0 0
        %3129 = vmatprep.subr.bf16.mxu0 0
        %3130 = vmatpush1.bf16.msra.mxu0 0
        %3131 = vmatprep.subr.bf16.mxu0 0
        %3132 = vmatpush1.bf16.msra.mxu0 0
        %3133 = vmatprep.mubr.bf16.mxu0 0
        %3134 = vmatmul.mubr.bf16.gmra.mrb[0].mxu0 %v888
        %v3135 = vpop.f32.mrb[0].mxu0
        %v3136 = vadd.f32 %v769, %v3135
        %v3137 = vpop.f32.mrb[0].mxu0
        %v3138 = vpop.f32.mrb[0].mxu0
        %v3139 = vadd.f32 %v774, %v3138
        %v3140 = vpop.f32.mrb[0].mxu0
        %3141 = vmatprep.mubr.bf16.mxu0 0
        %3142 = vmatmul.mubr.bf16.gmra.mrb[0].mxu0 %v891
        %v3143 = vpop.f32.mrb[0].mxu0
        %v3144 = vadd.f32 %v779, %v3143
        %v3145 = vpop.f32.mrb[0].mxu0
        %v3146 = vpop.f32.mrb[0].mxu0
        %v3147 = vadd.f32 %v784, %v3146
        %v3148 = vpop.f32.mrb[0].mxu0
        %3149 = vmatprep.mubr.bf16.mxu0 0
        %3150 = vmatmul.mubr.bf16.gmra.mrb[0].mxu0 %v894
        %v3151 = vpop.f32.mrb[0].mxu0
        %v3152 = vadd.f32 %v789, %v3151
        %v3153 = vpop.f32.mrb[0].mxu0
        %v3154 = vpop.f32.mrb[0].mxu0
        %v3155 = vadd.f32 %v794, %v3154
        %v3156 = vpop.f32.mrb[0].mxu0
        %3157 = vmatprep.mubr.bf16.mxu0 0
        %3158 = vmatmul.mubr.bf16.gmra.mrb[0].mxu0 %v897
        %v3159 = vpop.f32.mrb[0].mxu0
        %v3160 = vadd.f32 %v799, %v3159
        %v3161 = vpop.f32.mrb[0].mxu0
        %v3162 = vpop.f32.mrb[0].mxu0
        %v3163 = vadd.f32 %v804, %v3162
        %v3164 = vpop.f32.mrb[0].mxu0
        %3165 = vmatprep.mubr.bf16.mxu0 0
        %3166 = vmatmul.mubr.bf16.gmra.mrb[0].mxu0 %v900
        %v3167 = vpop.f32.mrb[0].mxu0
        %v3168 = vadd.f32 %v809, %v3167
        %v3169 = vpop.f32.mrb[0].mxu0
        %v3170 = vpop.f32.mrb[0].mxu0
        %v3171 = vadd.f32 %v814, %v3170
        %v3172 = vpop.f32.mrb[0].mxu0
        %3173 = vmatprep.mubr.bf16.mxu0 0
        %3174 = vmatmul.mubr.bf16.gmra.mrb[0].mxu0 %v903
        %v3175 = vpop.f32.mrb[0].mxu0
        %v3176 = vadd.f32 %v819, %v3175
        %v3177 = vpop.f32.mrb[0].mxu0
        %v3178 = vpop.f32.mrb[0].mxu0
        %v3179 = vadd.f32 %v824, %v3178
        %v3180 = vpop.f32.mrb[0].mxu0
        %3181 = vmatprep.mubr.bf16.mxu0 0
        %3182 = vmatmul.mubr.bf16.gmra.mrb[0].mxu0 %v906
        %v3183 = vpop.f32.mrb[0].mxu0
        %v3184 = vadd.f32 %v829, %v3183
        %v3185 = vpop.f32.mrb[0].mxu0
        %v3186 = vpop.f32.mrb[0].mxu0
        %v3187 = vadd.f32 %v834, %v3186
        %v3188 = vpop.f32.mrb[0].mxu0
        %3189 = vmatprep.mubr.bf16.mxu0 0
        %3190 = vmatmul.mubr.bf16.gmra.mrb[0].mxu0 %v909
        %v3191 = vpop.f32.mrb[0].mxu0
        %v3192 = vadd.f32 %v839, %v3191
        %v3193 = vpop.f32.mrb[0].mxu0
        %v3194 = vpop.f32.mrb[0].mxu0
        %v3195 = vadd.f32 %v844, %v3194
        %v3196 = vpop.f32.mrb[0].mxu0
        %3197 = vdwg.mxu0
        %v3198 = vmax.f32 %v3136, 0.0
        %v3199 = vmax.f32 %v3139, 0.0
        %v3200 = vmax.f32 %v3144, 0.0
        %v3201 = vmax.f32 %v3147, 0.0
        %v3202 = vmax.f32 %v3152, 0.0
        %v3203 = vmax.f32 %v3155, 0.0
        %v3204 = vmax.f32 %v3160, 0.0
        %v3205 = vmax.f32 %v3163, 0.0
        %v3206 = vmax.f32 %v3168, 0.0
        %v3207 = vmax.f32 %v3171, 0.0
        %v3208 = vmax.f32 %v3176, 0.0
        %v3209 = vmax.f32 %v3179, 0.0
        %v3210 = vmax.f32 %v3184, 0.0
        %v3211 = vmax.f32 %v3187, 0.0
        %v3212 = vmax.f32 %v3192, 0.0
        %v3213 = vmax.f32 %v3195, 0.0
        %v3214 = vpack.c.bf16 %v3199, %v3198
        %v3215 = vpack.c.bf16 %v3201, %v3200
        %v3216 = vpack.c.bf16 %v3203, %v3202
        %v3217 = vpack.c.bf16 %v3205, %v3204
        %v3218 = vpack.c.bf16 %v3207, %v3206
        %v3219 = vpack.c.bf16 %v3209, %v3208
        %v3220 = vpack.c.bf16 %v3211, %v3210
        %v3221 = vpack.c.bf16 %v3213, %v3212
        %3222 = vmatprep.subr.bf16.mxu0 0
        %3223 = vmatpush1.bf16.msra.mxu0 %v3214
        %3224 = vmatprep.subr.bf16.mxu0 0
        %3225 = vmatpush1.bf16.msra.mxu0 %v3215
        %3226 = vmatprep.subr.bf16.mxu0 0
        %3227 = vmatpush1.bf16.msra.mxu0 %v3216
        %3228 = vmatprep.subr.bf16.mxu0 0
        %3229 = vmatpush1.bf16.msra.mxu0 %v3217
        %3230 = vmatprep.subr.bf16.mxu0 0
        %3231 = vmatpush1.bf16.msra.mxu0 %v3218
        %3232 = vmatprep.subr.bf16.mxu0 0
        %3233 = vmatpush1.bf16.msra.mxu0 %v3219
        %3234 = vmatprep.subr.bf16.mxu0 0
        %3235 = vmatpush1.bf16.msra.mxu0 %v3220
        %3236 = vmatprep.subr.bf16.mxu0 0
        %3237 = vmatpush1.bf16.msra.mxu0 %v3221
        %3238 = vmatprep.subr.bf16.mxu0 0
        %3239 = vmatpush1.bf16.msra.mxu0 0
        %3240 = vmatprep.subr.bf16.mxu0 0
        %3241 = vmatpush1.bf16.msra.mxu0 0
        %3242 = vmatprep.subr.bf16.mxu0 0
        %3243 = vmatpush1.bf16.msra.mxu0 0
        %3244 = vmatprep.subr.bf16.mxu0 0
        %3245 = vmatpush1.bf16.msra.mxu0 0
        %3246 = vmatprep.subr.bf16.mxu0 0
        %3247 = vmatpush1.bf16.msra.mxu0 0
        %3248 = vmatprep.subr.bf16.mxu0 0
        %3249 = vmatpush1.bf16.msra.mxu0 0
        %3250 = vmatprep.subr.bf16.mxu0 0
        %3251 = vmatpush1.bf16.msra.mxu0 0
        %3252 = vmatprep.subr.bf16.mxu0 0
        %3253 = vmatpush1.bf16.msra.mxu0 0
        %3254 = vmatprep.mubr.bf16.mxu0 0
        %3255 = vmatmul.mubr.bf16.gmra.mrb[0].mxu0 %v1096
        %v3256 = vpop.f32.mrb[0].mxu0
        %v3257 = vadd.f32 %v1043, %v3256
        %v3258 = vpop.f32.mrb[0].mxu0
        %v3259 = vpop.f32.mrb[0].mxu0
        %v3260 = vadd.f32 %v1048, %v3259
        %v3261 = vpop.f32.mrb[0].mxu0
        %3262 = vmatprep.mubr.bf16.mxu0 0
        %3263 = vmatmul.mubr.bf16.gmra.mrb[0].mxu0 %v1097
        %v3264 = vpop.f32.mrb[0].mxu0
        %v3265 = vadd.f32 %v1053, %v3264
        %v3266 = vpop.f32.mrb[0].mxu0
        %v3267 = vpop.f32.mrb[0].mxu0
        %v3268 = vadd.f32 %v1058, %v3267
        %v3269 = vpop.f32.mrb[0].mxu0
        %3270 = vmatprep.mubr.bf16.mxu0 0
        %3271 = vmatmul.mubr.bf16.gmra.mrb[0].mxu0 %v1098
        %v3272 = vpop.f32.mrb[0].mxu0
        %v3273 = vadd.f32 %v1063, %v3272
        %v3274 = vpop.f32.mrb[0].mxu0
        %v3275 = vpop.f32.mrb[0].mxu0
        %v3276 = vadd.f32 %v1068, %v3275
        %v3277 = vpop.f32.mrb[0].mxu0
        %3278 = vmatprep.mubr.bf16.mxu0 0
        %3279 = vmatmul.mubr.bf16.gmra.mrb[0].mxu0 %v1099
        %v3280 = vpop.f32.mrb[0].mxu0
        %v3281 = vadd.f32 %v1073, %v3280
        %v3282 = vpop.f32.mrb[0].mxu0
        %v3283 = vpop.f32.mrb[0].mxu0
        %v3284 = vadd.f32 %v1078, %v3283
        %v3285 = vpop.f32.mrb[0].mxu0
        %3286 = vdwg.mxu0
        %v3287 = vmax.f32 %v3257, 0.0
        %v3288 = vmax.f32 %v3260, 0.0
        %v3289 = vmax.f32 %v3265, 0.0
        %v3290 = vmax.f32 %v3268, 0.0
        %v3291 = vmax.f32 %v3273, 0.0
        %v3292 = vmax.f32 %v3276, 0.0
        %v3293 = vmax.f32 %v3281, 0.0
        %v3294 = vmax.f32 %v3284, 0.0
        %v3295 = vpack.c.bf16 %v3288, %v3287
        %v3296 = vpack.c.bf16 %v3290, %v3289
        %v3297 = vpack.c.bf16 %v3292, %v3291
        %v3298 = vpack.c.bf16 %v3294, %v3293
        %v3299 = vmax.bf16 %v2946, %v3022
        %v3300 = vmax.bf16 %v2947, %v3023
        %v3301 = vmax.bf16 %v2948, %v3097
        %v3302 = vmax.bf16 %v2949, %v3098
        %v3303 = vmax.bf16 %v2950, %v3099
        %v3304 = vmax.bf16 %v2951, %v3100
        %v3305 = vmax.bf16 %v2952, %v3214
        %v3306 = vmax.bf16 %v2953, %v3215
        %v3307 = vmax.bf16 %v2954, %v3216
        %v3308 = vmax.bf16 %v2955, %v3217
        %v3309 = vmax.bf16 %v2956, %v3218
        %v3310 = vmax.bf16 %v2957, %v3219
        %v3311 = vmax.bf16 %v2958, %v3220
        %v3312 = vmax.bf16 %v2959, %v3221
        %v3313 = vmax.bf16 %v2960, %v3295
        %v3314 = vmax.bf16 %v2961, %v3296
        %v3315 = vmax.bf16 %v2962, %v3297
        %v3316 = vmax.bf16 %v2963, %v3298
        %s3317 = scalar_lea.vmem %s417, 14 [#allocation2]
        %v3318 = vld [vmem:[%s3317] sm:$0x3]
        %v3320 = vsel %vm533, %v3318, 0
        %3322 = vmatprep.subr.bf16.mxu0 0
        %3323 = vmatpush1.bf16.msra.mxu0 %v3320
        %3324 = vmatprep.subr.bf16.mxu0 0
        %3325 = vmatpush1.bf16.msra.mxu0 0
        %3326 = vmatprep.subr.bf16.mxu0 0
        %3327 = vmatpush1.bf16.msra.mxu0 0
        %3328 = vmatprep.subr.bf16.mxu0 0
        %3329 = vmatpush1.bf16.msra.mxu0 0
        %3330 = vmatprep.subr.bf16.mxu0 0
        %3331 = vmatpush1.bf16.msra.mxu0 0
        %3332 = vmatprep.subr.bf16.mxu0 0
        %3333 = vmatpush1.bf16.msra.mxu0 0
        %3334 = vmatprep.subr.bf16.mxu0 0
        %3335 = vmatpush1.bf16.msra.mxu0 0
        %3336 = vmatprep.subr.bf16.mxu0 0
        %3337 = vmatpush1.bf16.msra.mxu0 0
        %3338 = vmatprep.subr.bf16.mxu0 0
        %3339 = vmatpush1.bf16.msra.mxu0 0
        %3340 = vmatprep.subr.bf16.mxu0 0
        %3341 = vmatpush1.bf16.msra.mxu0 0
        %3342 = vmatprep.subr.bf16.mxu0 0
        %3343 = vmatpush1.bf16.msra.mxu0 0
        %3344 = vmatprep.subr.bf16.mxu0 0
        %3345 = vmatpush1.bf16.msra.mxu0 0
        %3346 = vmatprep.subr.bf16.mxu0 0
        %3347 = vmatpush1.bf16.msra.mxu0 0
        %3348 = vmatprep.subr.bf16.mxu0 0
        %3349 = vmatpush1.bf16.msra.mxu0 0
        %3350 = vmatprep.subr.bf16.mxu0 0
        %3351 = vmatpush1.bf16.msra.mxu0 0
        %3352 = vmatprep.subr.bf16.mxu0 0
        %3353 = vmatpush1.bf16.msra.mxu0 0
        %3354 = vmatprep.mubr.bf16.mxu0 0
        %3355 = vmatmul.mubr.bf16.gmra.mrb[0].mxu0 %v528
        %v3356 = vpop.f32.mrb[0].mxu0
        %v3357 = vadd.f32 %v499, %v3356
        %v3358 = vpop.f32.mrb[0].mxu0
        %v3359 = vpop.f32.mrb[0].mxu0
        %v3360 = vadd.f32 %v504, %v3359
        %v3361 = vpop.f32.mrb[0].mxu0
        %3362 = vmatprep.mubr.bf16.mxu0 0
        %3363 = vmatmul.mubr.bf16.gmra.mrb[0].mxu0 %v531
        %v3364 = vpop.f32.mrb[0].mxu0
        %v3365 = vadd.f32 %v509, %v3364
        %v3366 = vpop.f32.mrb[0].mxu0
        %v3367 = vpop.f32.mrb[0].mxu0
        %v3368 = vadd.f32 %v514, %v3367
        %v3369 = vpop.f32.mrb[0].mxu0
        %3370 = vdwg.mxu0
        %v3371 = vmax.f32 %v3357, 0.0
        %v3372 = vmax.f32 %v3360, 0.0
        %v3373 = vmax.f32 %v3365, 0.0
        %v3374 = vmax.f32 %v3368, 0.0
        %v3375 = vpack.c.bf16 %v3372, %v3371
        %v3376 = vpack.c.bf16 %v3374, %v3373
        %3377 = vmatprep.subr.bf16.mxu0 0
        %3378 = vmatpush1.bf16.msra.mxu0 %v3375
        %3379 = vmatprep.subr.bf16.mxu0 0
        %3380 = vmatpush1.bf16.msra.mxu0 %v3376
        %3381 = vmatprep.subr.bf16.mxu0 0
        %3382 = vmatpush1.bf16.msra.mxu0 0
        %3383 = vmatprep.subr.bf16.mxu0 0
        %3384 = vmatpush1.bf16.msra.mxu0 0
        %3385 = vmatprep.subr.bf16.mxu0 0
        %3386 = vmatpush1.bf16.msra.mxu0 0
        %3387 = vmatprep.subr.bf16.mxu0 0
        %3388 = vmatpush1.bf16.msra.mxu0 0
        %3389 = vmatprep.subr.bf16.mxu0 0
        %3390 = vmatpush1.bf16.msra.mxu0 0
        %3391 = vmatprep.subr.bf16.mxu0 0
        %3392 = vmatpush1.bf16.msra.mxu0 0
        %3393 = vmatprep.subr.bf16.mxu0 0
        %3394 = vmatpush1.bf16.msra.mxu0 0
        %3395 = vmatprep.subr.bf16.mxu0 0
        %3396 = vmatpush1.bf16.msra.mxu0 0
        %3397 = vmatprep.subr.bf16.mxu0 0
        %3398 = vmatpush1.bf16.msra.mxu0 0
        %3399 = vmatprep.subr.bf16.mxu0 0
        %3400 = vmatpush1.bf16.msra.mxu0 0
        %3401 = vmatprep.subr.bf16.mxu0 0
        %3402 = vmatpush1.bf16.msra.mxu0 0
        %3403 = vmatprep.subr.bf16.mxu0 0
        %3404 = vmatpush1.bf16.msra.mxu0 0
        %3405 = vmatprep.subr.bf16.mxu0 0
        %3406 = vmatpush1.bf16.msra.mxu0 0
        %3407 = vmatprep.subr.bf16.mxu0 0
        %3408 = vmatpush1.bf16.msra.mxu0 0
        %3409 = vmatprep.mubr.bf16.mxu0 0
        %3410 = vmatmul.mubr.bf16.gmra.mrb[0].mxu0 %v662
        %v3411 = vpop.f32.mrb[0].mxu0
        %v3412 = vadd.f32 %v603, %v3411
        %v3413 = vpop.f32.mrb[0].mxu0
        %v3414 = vpop.f32.mrb[0].mxu0
        %v3415 = vadd.f32 %v608, %v3414
        %v3416 = vpop.f32.mrb[0].mxu0
        %3417 = vmatprep.mubr.bf16.mxu0 0
        %3418 = vmatmul.mubr.bf16.gmra.mrb[0].mxu0 %v665
        %v3419 = vpop.f32.mrb[0].mxu0
        %v3420 = vadd.f32 %v613, %v3419
        %v3421 = vpop.f32.mrb[0].mxu0
        %v3422 = vpop.f32.mrb[0].mxu0
        %v3423 = vadd.f32 %v618, %v3422
        %v3424 = vpop.f32.mrb[0].mxu0
        %3425 = vmatprep.mubr.bf16.mxu0 0
        %3426 = vmatmul.mubr.bf16.gmra.mrb[0].mxu0 %v668
        %v3427 = vpop.f32.mrb[0].mxu0
        %v3428 = vadd.f32 %v623, %v3427
        %v3429 = vpop.f32.mrb[0].mxu0
        %v3430 = vpop.f32.mrb[0].mxu0
        %v3431 = vadd.f32 %v628, %v3430
        %v3432 = vpop.f32.mrb[0].mxu0
        %3433 = vmatprep.mubr.bf16.mxu0 0
        %3434 = vmatmul.mubr.bf16.gmra.mrb[0].mxu0 %v671
        %v3435 = vpop.f32.mrb[0].mxu0
        %v3436 = vadd.f32 %v633, %v3435
        %v3437 = vpop.f32.mrb[0].mxu0
        %v3438 = vpop.f32.mrb[0].mxu0
        %v3439 = vadd.f32 %v638, %v3438
        %v3440 = vpop.f32.mrb[0].mxu0
        %3441 = vdwg.mxu0
        %v3442 = vmax.f32 %v3412, 0.0
        %v3443 = vmax.f32 %v3415, 0.0
        %v3444 = vmax.f32 %v3420, 0.0
        %v3445 = vmax.f32 %v3423, 0.0
        %v3446 = vmax.f32 %v3428, 0.0
        %v3447 = vmax.f32 %v3431, 0.0
        %v3448 = vmax.f32 %v3436, 0.0
        %v3449 = vmax.f32 %v3439, 0.0
        %v3450 = vpack.c.bf16 %v3443, %v3442
        %v3451 = vpack.c.bf16 %v3445, %v3444
        %v3452 = vpack.c.bf16 %v3447, %v3446
        %v3453 = vpack.c.bf16 %v3449, %v3448
        %3454 = vmatprep.subr.bf16.mxu0 0
        %3455 = vmatpush1.bf16.msra.mxu0 %v3450
        %3456 = vmatprep.subr.bf16.mxu0 0
        %3457 = vmatpush1.bf16.msra.mxu0 %v3451
        %3458 = vmatprep.subr.bf16.mxu0 0
        %3459 = vmatpush1.bf16.msra.mxu0 %v3452
        %3460 = vmatprep.subr.bf16.mxu0 0
        %3461 = vmatpush1.bf16.msra.mxu0 %v3453
        %3462 = vmatprep.subr.bf16.mxu0 0
        %3463 = vmatpush1.bf16.msra.mxu0 0
        %3464 = vmatprep.subr.bf16.mxu0 0
        %3465 = vmatpush1.bf16.msra.mxu0 0
        %3466 = vmatprep.subr.bf16.mxu0 0
        %3467 = vmatpush1.bf16.msra.mxu0 0
        %3468 = vmatprep.subr.bf16.mxu0 0
        %3469 = vmatpush1.bf16.msra.mxu0 0
        %3470 = vmatprep.subr.bf16.mxu0 0
        %3471 = vmatpush1.bf16.msra.mxu0 0
        %3472 = vmatprep.subr.bf16.mxu0 0
        %3473 = vmatpush1.bf16.msra.mxu0 0
        %3474 = vmatprep.subr.bf16.mxu0 0
        %3475 = vmatpush1.bf16.msra.mxu0 0
        %3476 = vmatprep.subr.bf16.mxu0 0
        %3477 = vmatpush1.bf16.msra.mxu0 0
        %3478 = vmatprep.subr.bf16.mxu0 0
        %3479 = vmatpush1.bf16.msra.mxu0 0
        %3480 = vmatprep.subr.bf16.mxu0 0
        %3481 = vmatpush1.bf16.msra.mxu0 0
        %3482 = vmatprep.subr.bf16.mxu0 0
        %3483 = vmatpush1.bf16.msra.mxu0 0
        %3484 = vmatprep.subr.bf16.mxu0 0
        %3485 = vmatpush1.bf16.msra.mxu0 0
        %3486 = vmatprep.mubr.bf16.mxu0 0
        %3487 = vmatmul.mubr.bf16.gmra.mrb[0].mxu0 %v888
        %v3488 = vpop.f32.mrb[0].mxu0
        %v3489 = vadd.f32 %v769, %v3488
        %v3490 = vpop.f32.mrb[0].mxu0
        %v3491 = vpop.f32.mrb[0].mxu0
        %v3492 = vadd.f32 %v774, %v3491
        %v3493 = vpop.f32.mrb[0].mxu0
        %3494 = vmatprep.mubr.bf16.mxu0 0
        %3495 = vmatmul.mubr.bf16.gmra.mrb[0].mxu0 %v891
        %v3496 = vpop.f32.mrb[0].mxu0
        %v3497 = vadd.f32 %v779, %v3496
        %v3498 = vpop.f32.mrb[0].mxu0
        %v3499 = vpop.f32.mrb[0].mxu0
        %v3500 = vadd.f32 %v784, %v3499
        %v3501 = vpop.f32.mrb[0].mxu0
        %3502 = vmatprep.mubr.bf16.mxu0 0
        %3503 = vmatmul.mubr.bf16.gmra.mrb[0].mxu0 %v894
        %v3504 = vpop.f32.mrb[0].mxu0
        %v3505 = vadd.f32 %v789, %v3504
        %v3506 = vpop.f32.mrb[0].mxu0
        %v3507 = vpop.f32.mrb[0].mxu0
        %v3508 = vadd.f32 %v794, %v3507
        %v3509 = vpop.f32.mrb[0].mxu0
        %3510 = vmatprep.mubr.bf16.mxu0 0
        %3511 = vmatmul.mubr.bf16.gmra.mrb[0].mxu0 %v897
        %v3512 = vpop.f32.mrb[0].mxu0
        %v3513 = vadd.f32 %v799, %v3512
        %v3514 = vpop.f32.mrb[0].mxu0
        %v3515 = vpop.f32.mrb[0].mxu0
        %v3516 = vadd.f32 %v804, %v3515
        %v3517 = vpop.f32.mrb[0].mxu0
        %3518 = vmatprep.mubr.bf16.mxu0 0
        %3519 = vmatmul.mubr.bf16.gmra.mrb[0].mxu0 %v900
        %v3520 = vpop.f32.mrb[0].mxu0
        %v3521 = vadd.f32 %v809, %v3520
        %v3522 = vpop.f32.mrb[0].mxu0
        %v3523 = vpop.f32.mrb[0].mxu0
        %v3524 = vadd.f32 %v814, %v3523
        %v3525 = vpop.f32.mrb[0].mxu0
        %3526 = vmatprep.mubr.bf16.mxu0 0
        %3527 = vmatmul.mubr.bf16.gmra.mrb[0].mxu0 %v903
        %v3528 = vpop.f32.mrb[0].mxu0
        %v3529 = vadd.f32 %v819, %v3528
        %v3530 = vpop.f32.mrb[0].mxu0
        %v3531 = vpop.f32.mrb[0].mxu0
        %v3532 = vadd.f32 %v824, %v3531
        %v3533 = vpop.f32.mrb[0].mxu0
        %3534 = vmatprep.mubr.bf16.mxu0 0
        %3535 = vmatmul.mubr.bf16.gmra.mrb[0].mxu0 %v906
        %v3536 = vpop.f32.mrb[0].mxu0
        %v3537 = vadd.f32 %v829, %v3536
        %v3538 = vpop.f32.mrb[0].mxu0
        %v3539 = vpop.f32.mrb[0].mxu0
        %v3540 = vadd.f32 %v834, %v3539
        %v3541 = vpop.f32.mrb[0].mxu0
        %3542 = vmatprep.mubr.bf16.mxu0 0
        %3543 = vmatmul.mubr.bf16.gmra.mrb[0].mxu0 %v909
        %v3544 = vpop.f32.mrb[0].mxu0
        %v3545 = vadd.f32 %v839, %v3544
        %v3546 = vpop.f32.mrb[0].mxu0
        %v3547 = vpop.f32.mrb[0].mxu0
        %v3548 = vadd.f32 %v844, %v3547
        %v3549 = vpop.f32.mrb[0].mxu0
        %3550 = vdwg.mxu0
        %v3551 = vmax.f32 %v3489, 0.0
        %v3552 = vmax.f32 %v3492, 0.0
        %v3553 = vmax.f32 %v3497, 0.0
        %v3554 = vmax.f32 %v3500, 0.0
        %v3555 = vmax.f32 %v3505, 0.0
        %v3556 = vmax.f32 %v3508, 0.0
        %v3557 = vmax.f32 %v3513, 0.0
        %v3558 = vmax.f32 %v3516, 0.0
        %v3559 = vmax.f32 %v3521, 0.0
        %v3560 = vmax.f32 %v3524, 0.0
        %v3561 = vmax.f32 %v3529, 0.0
        %v3562 = vmax.f32 %v3532, 0.0
        %v3563 = vmax.f32 %v3537, 0.0
        %v3564 = vmax.f32 %v3540, 0.0
        %v3565 = vmax.f32 %v3545, 0.0
        %v3566 = vmax.f32 %v3548, 0.0
        %v3567 = vpack.c.bf16 %v3552, %v3551
        %v3568 = vpack.c.bf16 %v3554, %v3553
        %v3569 = vpack.c.bf16 %v3556, %v3555
        %v3570 = vpack.c.bf16 %v3558, %v3557
        %v3571 = vpack.c.bf16 %v3560, %v3559
        %v3572 = vpack.c.bf16 %v3562, %v3561
        %v3573 = vpack.c.bf16 %v3564, %v3563
        %v3574 = vpack.c.bf16 %v3566, %v3565
        %3575 = vmatprep.subr.bf16.mxu0 0
        %3576 = vmatpush1.bf16.msra.mxu0 %v3567
        %3577 = vmatprep.subr.bf16.mxu0 0
        %3578 = vmatpush1.bf16.msra.mxu0 %v3568
        %3579 = vmatprep.subr.bf16.mxu0 0
        %3580 = vmatpush1.bf16.msra.mxu0 %v3569
        %3581 = vmatprep.subr.bf16.mxu0 0
        %3582 = vmatpush1.bf16.msra.mxu0 %v3570
        %3583 = vmatprep.subr.bf16.mxu0 0
        %3584 = vmatpush1.bf16.msra.mxu0 %v3571
        %3585 = vmatprep.subr.bf16.mxu0 0
        %3586 = vmatpush1.bf16.msra.mxu0 %v3572
        %3587 = vmatprep.subr.bf16.mxu0 0
        %3588 = vmatpush1.bf16.msra.mxu0 %v3573
        %3589 = vmatprep.subr.bf16.mxu0 0
        %3590 = vmatpush1.bf16.msra.mxu0 %v3574
        %3591 = vmatprep.subr.bf16.mxu0 0
        %3592 = vmatpush1.bf16.msra.mxu0 0
        %3593 = vmatprep.subr.bf16.mxu0 0
        %3594 = vmatpush1.bf16.msra.mxu0 0
        %3595 = vmatprep.subr.bf16.mxu0 0
        %3596 = vmatpush1.bf16.msra.mxu0 0
        %3597 = vmatprep.subr.bf16.mxu0 0
        %3598 = vmatpush1.bf16.msra.mxu0 0
        %3599 = vmatprep.subr.bf16.mxu0 0
        %3600 = vmatpush1.bf16.msra.mxu0 0
        %3601 = vmatprep.subr.bf16.mxu0 0
        %3602 = vmatpush1.bf16.msra.mxu0 0
        %3603 = vmatprep.subr.bf16.mxu0 0
        %3604 = vmatpush1.bf16.msra.mxu0 0
        %3605 = vmatprep.subr.bf16.mxu0 0
        %3606 = vmatpush1.bf16.msra.mxu0 0
        %3607 = vmatprep.mubr.bf16.mxu0 0
        %3608 = vmatmul.mubr.bf16.gmra.mrb[0].mxu0 %v1096
        %v3609 = vpop.f32.mrb[0].mxu0
        %v3610 = vadd.f32 %v1043, %v3609
        %v3611 = vpop.f32.mrb[0].mxu0
        %v3612 = vpop.f32.mrb[0].mxu0
        %v3613 = vadd.f32 %v1048, %v3612
        %v3614 = vpop.f32.mrb[0].mxu0
        %3615 = vmatprep.mubr.bf16.mxu0 0
        %3616 = vmatmul.mubr.bf16.gmra.mrb[0].mxu0 %v1097
        %v3617 = vpop.f32.mrb[0].mxu0
        %v3618 = vadd.f32 %v1053, %v3617
        %v3619 = vpop.f32.mrb[0].mxu0
        %v3620 = vpop.f32.mrb[0].mxu0
        %v3621 = vadd.f32 %v1058, %v3620
        %v3622 = vpop.f32.mrb[0].mxu0
        %3623 = vmatprep.mubr.bf16.mxu0 0
        %3624 = vmatmul.mubr.bf16.gmra.mrb[0].mxu0 %v1098
        %v3625 = vpop.f32.mrb[0].mxu0
        %v3626 = vadd.f32 %v1063, %v3625
        %v3627 = vpop.f32.mrb[0].mxu0
        %v3628 = vpop.f32.mrb[0].mxu0
        %v3629 = vadd.f32 %v1068, %v3628
        %v3630 = vpop.f32.mrb[0].mxu0
        %3631 = vmatprep.mubr.bf16.mxu0 0
        %3632 = vmatmul.mubr.bf16.gmra.mrb[0].mxu0 %v1099
        %v3633 = vpop.f32.mrb[0].mxu0
        %v3634 = vadd.f32 %v1073, %v3633
        %v3635 = vpop.f32.mrb[0].mxu0
        %v3636 = vpop.f32.mrb[0].mxu0
        %v3637 = vadd.f32 %v1078, %v3636
        %v3638 = vpop.f32.mrb[0].mxu0
        %3639 = vdwg.mxu0
        %v3640 = vmax.f32 %v3610, 0.0
        %v3641 = vmax.f32 %v3613, 0.0
        %v3642 = vmax.f32 %v3618, 0.0
        %v3643 = vmax.f32 %v3621, 0.0
        %v3644 = vmax.f32 %v3626, 0.0
        %v3645 = vmax.f32 %v3629, 0.0
        %v3646 = vmax.f32 %v3634, 0.0
        %v3647 = vmax.f32 %v3637, 0.0
        %v3648 = vpack.c.bf16 %v3641, %v3640
        %v3649 = vpack.c.bf16 %v3643, %v3642
        %v3650 = vpack.c.bf16 %v3645, %v3644
        %v3651 = vpack.c.bf16 %v3647, %v3646
        %v3652 = vmax.bf16 %v3299, %v3375
        %v3653 = vmax.bf16 %v3300, %v3376
        %v3654 = vmax.bf16 %v3301, %v3450
        %v3655 = vmax.bf16 %v3302, %v3451
        %v3656 = vmax.bf16 %v3303, %v3452
        %v3657 = vmax.bf16 %v3304, %v3453
        %v3658 = vmax.bf16 %v3305, %v3567
        %v3659 = vmax.bf16 %v3306, %v3568
        %v3660 = vmax.bf16 %v3307, %v3569
        %v3661 = vmax.bf16 %v3308, %v3570
        %v3662 = vmax.bf16 %v3309, %v3571
        %v3663 = vmax.bf16 %v3310, %v3572
        %v3664 = vmax.bf16 %v3311, %v3573
        %v3665 = vmax.bf16 %v3312, %v3574
        %v3666 = vmax.bf16 %v3313, %v3648
        %v3667 = vmax.bf16 %v3314, %v3649
        %v3668 = vmax.bf16 %v3315, %v3650
        %v3669 = vmax.bf16 %v3316, %v3651
        %v3670 = vld [vmem:[%s9] sm:$0xff]
        %v3671 = vld [vmem:[%s9 + $0x8] sm:$0xf]
        %v3672 = vld [vmem:[%s9 + $0xc] sm:$0xff]
        %v3673 = vld [vmem:[%s9 + $0x14] sm:$0xf]
        %v3674 = vld [vmem:[%s9 + $0x18] sm:$0xff]
        %v3675 = vld [vmem:[%s9 + $0x20] sm:$0xf]
        %v3676 = vld [vmem:[%s9 + $0x24] sm:$0xff]
        %v3677 = vld [vmem:[%s9 + $0x2c] sm:$0xf]
        %v3678 = vld [vmem:[%s9 + $0x30] sm:$0xff]
        %v3679 = vld [vmem:[%s9 + $0x38] sm:$0xf]
        %v3680 = vld [vmem:[%s9 + $0x3c] sm:$0xff]
        %v3681 = vld [vmem:[%s9 + $0x44] sm:$0xf]
        %v3682 = vld [vmem:[%s9 + $0x48] sm:$0xff]
        %v3683 = vld [vmem:[%s9 + $0x50] sm:$0xf]
        %v3684 = vld [vmem:[%s9 + $0x54] sm:$0xff]
        %v3685 = vld [vmem:[%s9 + $0x5c] sm:$0xf]
        %v3686 = vld [vmem:[%s9 + $0x60] sm:$0xff]
        %v3687 = vld [vmem:[%s9 + $0x68] sm:$0xf]
        %v3688 = vld [vmem:[%s9 + $0x6c] sm:$0xff]
        %v3689 = vld [vmem:[%s9 + $0x74] sm:$0xf]
        %v3690 = vld [vmem:[%s9 + $0x78] sm:$0xff]
        %v3691 = vld [vmem:[%s9 + $0x80] sm:$0xf]
        %v3692 = vld [vmem:[%s9 + $0x84] sm:$0xff]
        %v3693 = vld [vmem:[%s9 + $0x8c] sm:$0xf]
        %v3694 = vld [vmem:[%s9 + $0x90] sm:$0xff]
        %v3695 = vld [vmem:[%s9 + $0x98] sm:$0xf]
        %v3696 = vld [vmem:[%s9 + $0x9c] sm:$0xff]
        %v3697 = vld [vmem:[%s9 + $0xa4] sm:$0xf]
        %v3698 = vld [vmem:[%s9 + $0xa8] sm:$0xff]
        %v3699 = vld [vmem:[%s9 + $0xb0] sm:$0xf]
        %v3700 = vld [vmem:[%s9 + $0xb4] sm:$0xff]
        %v3701 = vld [vmem:[%s9 + $0xbc] sm:$0xf]
        %v3702 = vld [vmem:[%s9 + $0xc0] sm:$0xff]
        %v3703 = vld [vmem:[%s9 + $0xc8] sm:$0xf]
        %v3704 = vld [vmem:[%s9 + $0xcc] sm:$0xff]
        %v3705 = vld [vmem:[%s9 + $0xd4] sm:$0xf]
        %v3706 = vld [vmem:[%s9 + $0xd8] sm:$0xff]
        %v3707 = vld [vmem:[%s9 + $0xe0] sm:$0xf]
        %v3708 = vld [vmem:[%s9 + $0xe4] sm:$0xff]
        %v3709 = vld [vmem:[%s9 + $0xec] sm:$0xf]
        %v3710 = vld [vmem:[%s9 + $0xf0] sm:$0xff]
        %v3711 = vld [vmem:[%s9 + $0xf8] sm:$0xf]
        %v3712 = vld [vmem:[%s9 + $0xfc] sm:$0xff]
        %v3713 = vld [vmem:[%s9 + $0x104] sm:$0xf]
        %v3714 = vld [vmem:[%s9 + $0x108] sm:$0xff]
        %v3715 = vld [vmem:[%s9 + $0x110] sm:$0xf]
        %v3716 = vld [vmem:[%s9 + $0x114] sm:$0xff]
        %v3717 = vld [vmem:[%s9 + $0x11c] sm:$0xf]
        %v3718 = vld [vmem:[%s9 + $0x120] sm:$0xff]
        %v3719 = vld [vmem:[%s9 + $0x128] sm:$0xf]
        %v3720 = vld [vmem:[%s9 + $0x12c] sm:$0xff]
        %v3721 = vld [vmem:[%s9 + $0x134] sm:$0xf]
        %v3722 = vld [vmem:[%s9 + $0x138] sm:$0xff]
        %v3723 = vld [vmem:[%s9 + $0x140] sm:$0xf]
        %v3724 = vld [vmem:[%s9 + $0x144] sm:$0xff]
        %v3725 = vld [vmem:[%s9 + $0x14c] sm:$0xf]
        %v3726 = vld [vmem:[%s9 + $0x150] sm:$0xff]
        %v3727 = vld [vmem:[%s9 + $0x158] sm:$0xf]
        %v3728 = vld [vmem:[%s9 + $0x15c] sm:$0xff]
        %v3729 = vld [vmem:[%s9 + $0x164] sm:$0xf]
        %v3730 = vld [vmem:[%s9 + $0x168] sm:$0xff]
        %v3731 = vld [vmem:[%s9 + $0x170] sm:$0xf]
        %v3732 = vld [vmem:[%s9 + $0x174] sm:$0xff]
        %v3733 = vld [vmem:[%s9 + $0x17c] sm:$0xf]
        %v3734 = vld [vmem:[%s9 + $0x180] sm:$0xff]
        %v3735 = vld [vmem:[%s9 + $0x188] sm:$0xf]
        %v3736 = vld [vmem:[%s9 + $0x18c] sm:$0xff]
        %v3737 = vld [vmem:[%s9 + $0x194] sm:$0xf]
        %v3738 = vld [vmem:[%s9 + $0x198] sm:$0xff]
        %v3739 = vld [vmem:[%s9 + $0x1a0] sm:$0xf]
        %v3740 = vld [vmem:[%s9 + $0x1a4] sm:$0xff]
        %v3741 = vld [vmem:[%s9 + $0x1ac] sm:$0xf]
        %v3742 = vld [vmem:[%s9 + $0x1b0] sm:$0xff]
        %v3743 = vld [vmem:[%s9 + $0x1b8] sm:$0xf]
        %v3744 = vld [vmem:[%s9 + $0x1bc] sm:$0xff]
        %v3745 = vld [vmem:[%s9 + $0x1c4] sm:$0xf]
        %v3746 = vld [vmem:[%s9 + $0x1c8] sm:$0xff]
        %v3747 = vld [vmem:[%s9 + $0x1d0] sm:$0xf]
        %v3748 = vld [vmem:[%s9 + $0x1d4] sm:$0xff]
        %v3749 = vld [vmem:[%s9 + $0x1dc] sm:$0xf]
        %v3750 = vld [vmem:[%s9 + $0x1e0] sm:$0xff]
        %v3751 = vld [vmem:[%s9 + $0x1e8] sm:$0xf]
        %v3752 = vld [vmem:[%s9 + $0x1ec] sm:$0xff]
        %v3753 = vld [vmem:[%s9 + $0x1f4] sm:$0xf]
        %v3754 = vld [vmem:[%s9 + $0x1f8] sm:$0xff]
        %v3755 = vld [vmem:[%s9 + $0x200] sm:$0xf]
        %v3756 = vld [vmem:[%s9 + $0x204] sm:$0xff]
        %v3757 = vld [vmem:[%s9 + $0x20c] sm:$0xf]
        %v3758 = vld [vmem:[%s9 + $0x210] sm:$0xff]
        %v3759 = vld [vmem:[%s9 + $0x218] sm:$0xf]
        %v3760 = vld [vmem:[%s9 + $0x21c] sm:$0xff]
        %v3761 = vld [vmem:[%s9 + $0x224] sm:$0xf]
        %v3762 = vld [vmem:[%s9 + $0x228] sm:$0xff]
        %v3763 = vld [vmem:[%s9 + $0x230] sm:$0xf]
        %v3764 = vld [vmem:[%s9 + $0x234] sm:$0xff]
        %v3765 = vld [vmem:[%s9 + $0x23c] sm:$0xf]
        %v3766 = vld [vmem:[%s9 + $0x240] sm:$0xff]
        %v3767 = vld [vmem:[%s9 + $0x248] sm:$0xf]
        %v3768 = vld [vmem:[%s9 + $0x24c] sm:$0xff]
        %v3769 = vld [vmem:[%s9 + $0x254] sm:$0xf]
        %v3770 = vld [vmem:[%s9 + $0x258] sm:$0xff]
        %v3771 = vld [vmem:[%s9 + $0x260] sm:$0xf]
        %v3772 = vld [vmem:[%s9 + $0x264] sm:$0xff]
        %v3773 = vld [vmem:[%s9 + $0x26c] sm:$0xf]
        %v3774 = vld [vmem:[%s9 + $0x270] sm:$0xff]
        %v3775 = vld [vmem:[%s9 + $0x278] sm:$0xf]
        %v3776 = vld [vmem:[%s9 + $0x27c] sm:$0xff]
        %v3777 = vld [vmem:[%s9 + $0x284] sm:$0xf]
        %v3778 = vld [vmem:[%s9 + $0x288] sm:$0xff]
        %v3779 = vld [vmem:[%s9 + $0x290] sm:$0xf]
        %v3780 = vld [vmem:[%s9 + $0x294] sm:$0xff]
        %v3781 = vld [vmem:[%s9 + $0x29c] sm:$0xf]
        %v3782 = vld [vmem:[%s9 + $0x2a0] sm:$0xff]
        %v3783 = vld [vmem:[%s9 + $0x2a8] sm:$0xf]
        %v3784 = vld [vmem:[%s9 + $0x2ac] sm:$0xff]
        %v3785 = vld [vmem:[%s9 + $0x2b4] sm:$0xf]
        %v3786 = vld [vmem:[%s9 + $0x2b8] sm:$0xff]
        %v3787 = vld [vmem:[%s9 + $0x2c0] sm:$0xf]
        %v3788 = vld [vmem:[%s9 + $0x2c4] sm:$0xff]
        %v3789 = vld [vmem:[%s9 + $0x2cc] sm:$0xf]
        %v3790 = vld [vmem:[%s9 + $0x2d0] sm:$0xff]
        %v3791 = vld [vmem:[%s9 + $0x2d8] sm:$0xf]
        %v3792 = vld [vmem:[%s9 + $0x2dc] sm:$0xff]
        %v3793 = vld [vmem:[%s9 + $0x2e4] sm:$0xf]
        %v3794 = vld [vmem:[%s9 + $0x2e8] sm:$0xff]
        %v3795 = vld [vmem:[%s9 + $0x2f0] sm:$0xf]
        %v3796 = vld [vmem:[%s9 + $0x2f4] sm:$0xff]
        %v3797 = vld [vmem:[%s9 + $0x2fc] sm:$0xf]
        %v3798 = vld [vmem:[%s10] sm:$0xff]
        %v3799 = vld [vmem:[%s10 + $0x8] sm:$0xff]
        %v3800 = vld [vmem:[%s10 + $0x10] sm:$0xff]
        %v3801 = vld [vmem:[%s10 + $0x18] sm:$0xff]
        %v3802 = vld [vmem:[%s10 + $0x20] sm:$0xff]
        %v3803 = vld [vmem:[%s10 + $0x28] sm:$0xff]
        %v3804 = vld [vmem:[%s10 + $0x30] sm:$0xff]
        %v3805 = vld [vmem:[%s10 + $0x38] sm:$0xff]
        %v3806 = vld [vmem:[%s10 + $0x40] sm:$0xff]
        %v3807 = vld [vmem:[%s10 + $0x48] sm:$0xff]
        %v3808 = vld [vmem:[%s10 + $0x50] sm:$0xff]
        %v3809 = vld [vmem:[%s10 + $0x58] sm:$0xff]
        %v3810 = vld [vmem:[%s10 + $0x60] sm:$0xff]
        %v3811 = vld [vmem:[%s10 + $0x68] sm:$0xff]
        %v3812 = vld [vmem:[%s10 + $0x70] sm:$0xff]
        %v3813 = vld [vmem:[%s10 + $0x78] sm:$0xff]
        %v3814 = vld [vmem:[%s10 + $0x80] sm:$0xff]
        %v3815 = vld [vmem:[%s10 + $0x88] sm:$0xff]
        %v3816 = vld [vmem:[%s10 + $0x90] sm:$0xff]
        %v3817 = vld [vmem:[%s10 + $0x98] sm:$0xff]
        %v3818 = vld [vmem:[%s10 + $0xa0] sm:$0xff]
        %v3819 = vld [vmem:[%s10 + $0xa8] sm:$0xff]
        %v3820 = vld [vmem:[%s10 + $0xb0] sm:$0xff]
        %v3821 = vld [vmem:[%s10 + $0xb8] sm:$0xff]
        %v3822 = vld [vmem:[%s10 + $0xc0] sm:$0xff]
        %v3823 = vld [vmem:[%s10 + $0xc8] sm:$0xff]
        %v3824 = vld [vmem:[%s10 + $0xd0] sm:$0xff]
        %v3825 = vld [vmem:[%s10 + $0xd8] sm:$0xff]
        %v3826 = vld [vmem:[%s10 + $0xe0] sm:$0xff]
        %v3827 = vld [vmem:[%s10 + $0xe8] sm:$0xff]
        %v3828 = vld [vmem:[%s10 + $0xf0] sm:$0xff]
        %v3829 = vld [vmem:[%s10 + $0xf8] sm:$0xff]
        %v3830 = vld [vmem:[%s10 + $0x100] sm:$0xff]
        %v3831 = vld [vmem:[%s10 + $0x108] sm:$0xff]
        %v3832 = vld [vmem:[%s10 + $0x110] sm:$0xff]
        %v3833 = vld [vmem:[%s10 + $0x118] sm:$0xff]
        %v3834 = vld [vmem:[%s10 + $0x120] sm:$0xff]
        %v3835 = vld [vmem:[%s10 + $0x128] sm:$0xff]
        %v3836 = vld [vmem:[%s10 + $0x130] sm:$0xff]
        %v3837 = vld [vmem:[%s10 + $0x138] sm:$0xff]
        %v3838 = vld [vmem:[%s10 + $0x140] sm:$0xff]
        %v3839 = vld [vmem:[%s10 + $0x148] sm:$0xff]
        %v3840 = vld [vmem:[%s10 + $0x150] sm:$0xff]
        %v3841 = vld [vmem:[%s10 + $0x158] sm:$0xff]
        %v3842 = vld [vmem:[%s10 + $0x160] sm:$0xff]
        %v3843 = vld [vmem:[%s10 + $0x168] sm:$0xff]
        %v3844 = vld [vmem:[%s10 + $0x170] sm:$0xff]
        %v3845 = vld [vmem:[%s10 + $0x178] sm:$0xff]
        %v3846 = vld [vmem:[%s10 + $0x180] sm:$0xff]
        %v3847 = vld [vmem:[%s10 + $0x188] sm:$0xff]
        %v3848 = vld [vmem:[%s10 + $0x190] sm:$0xff]
        %v3849 = vld [vmem:[%s10 + $0x198] sm:$0xff]
        %v3850 = vld [vmem:[%s10 + $0x1a0] sm:$0xff]
        %v3851 = vld [vmem:[%s10 + $0x1a8] sm:$0xff]
        %v3852 = vld [vmem:[%s10 + $0x1b0] sm:$0xff]
        %v3853 = vld [vmem:[%s10 + $0x1b8] sm:$0xff]
        %v3854 = vld [vmem:[%s10 + $0x1c0] sm:$0xff]
        %v3855 = vld [vmem:[%s10 + $0x1c8] sm:$0xff]
        %v3856 = vld [vmem:[%s10 + $0x1d0] sm:$0xff]
        %v3857 = vld [vmem:[%s10 + $0x1d8] sm:$0xff]
        %v3858 = vld [vmem:[%s10 + $0x1e0] sm:$0xff]
        %v3859 = vld [vmem:[%s10 + $0x1e8] sm:$0xff]
        %v3860 = vld [vmem:[%s10 + $0x1f0] sm:$0xff]
        %v3861 = vld [vmem:[%s10 + $0x1f8] sm:$0xff]
        %3863 = vset.pattern.permute.xlu0 0
        %3864 = vperm.xlu0 %3863, %v3798
        %v3865 = vpop.permute.xlu0 %3864
        %3868 = vset.pattern.permute.xlu0 0
        %3869 = vperm.xlu0 %3868, %v3799
        %v3870 = vpop.permute.xlu0 %3869
        %3873 = vset.pattern.permute.xlu0 0
        %3874 = vperm.xlu0 %3873, %v3800
        %v3875 = vpop.permute.xlu0 %3874
        %3878 = vset.pattern.permute.xlu0 0
        %3879 = vperm.xlu0 %3878, %v3801
        %v3880 = vpop.permute.xlu0 %3879
        %3883 = vset.pattern.permute.xlu0 0
        %3884 = vperm.xlu0 %3883, %v3802
        %v3885 = vpop.permute.xlu0 %3884
        %3888 = vset.pattern.permute.xlu0 0
        %3889 = vperm.xlu0 %3888, %v3803
        %v3890 = vpop.permute.xlu0 %3889
        %3893 = vset.pattern.permute.xlu0 0
        %3894 = vperm.xlu0 %3893, %v3804
        %v3895 = vpop.permute.xlu0 %3894
        %3898 = vset.pattern.permute.xlu0 0
        %3899 = vperm.xlu0 %3898, %v3805
        %v3900 = vpop.permute.xlu0 %3899
        %3903 = vset.pattern.permute.xlu0 0
        %3904 = vperm.xlu0 %3903, %v3806
        %v3905 = vpop.permute.xlu0 %3904
        %3908 = vset.pattern.permute.xlu0 0
        %3909 = vperm.xlu0 %3908, %v3807
        %v3910 = vpop.permute.xlu0 %3909
        %3913 = vset.pattern.permute.xlu0 0
        %3914 = vperm.xlu0 %3913, %v3808
        %v3915 = vpop.permute.xlu0 %3914
        %3918 = vset.pattern.permute.xlu0 0
        %3919 = vperm.xlu0 %3918, %v3809
        %v3920 = vpop.permute.xlu0 %3919
        %3923 = vset.pattern.permute.xlu0 0
        %3924 = vperm.xlu0 %3923, %v3810
        %v3925 = vpop.permute.xlu0 %3924
        %3928 = vset.pattern.permute.xlu0 0
        %3929 = vperm.xlu0 %3928, %v3811
        %v3930 = vpop.permute.xlu0 %3929
        %3933 = vset.pattern.permute.xlu0 0
        %3934 = vperm.xlu0 %3933, %v3812
        %v3935 = vpop.permute.xlu0 %3934
        %3938 = vset.pattern.permute.xlu0 0
        %3939 = vperm.xlu0 %3938, %v3813
        %v3940 = vpop.permute.xlu0 %3939
        %3943 = vset.pattern.permute.xlu0 0
        %3944 = vperm.xlu0 %3943, %v3814
        %v3945 = vpop.permute.xlu0 %3944
        %3948 = vset.pattern.permute.xlu0 0
        %3949 = vperm.xlu0 %3948, %v3815
        %v3950 = vpop.permute.xlu0 %3949
        %3953 = vset.pattern.permute.xlu0 0
        %3954 = vperm.xlu0 %3953, %v3816
        %v3955 = vpop.permute.xlu0 %3954
        %3958 = vset.pattern.permute.xlu0 0
        %3959 = vperm.xlu0 %3958, %v3817
        %v3960 = vpop.permute.xlu0 %3959
        %3963 = vset.pattern.permute.xlu0 0
        %3964 = vperm.xlu0 %3963, %v3818
        %v3965 = vpop.permute.xlu0 %3964
        %3968 = vset.pattern.permute.xlu0 0
        %3969 = vperm.xlu0 %3968, %v3819
        %v3970 = vpop.permute.xlu0 %3969
        %3973 = vset.pattern.permute.xlu0 0
        %3974 = vperm.xlu0 %3973, %v3820
        %v3975 = vpop.permute.xlu0 %3974
        %3978 = vset.pattern.permute.xlu0 0
        %3979 = vperm.xlu0 %3978, %v3821
        %v3980 = vpop.permute.xlu0 %3979
        %3983 = vset.pattern.permute.xlu0 0
        %3984 = vperm.xlu0 %3983, %v3822
        %v3985 = vpop.permute.xlu0 %3984
        %3988 = vset.pattern.permute.xlu0 0
        %3989 = vperm.xlu0 %3988, %v3823
        %v3990 = vpop.permute.xlu0 %3989
        %3993 = vset.pattern.permute.xlu0 0
        %3994 = vperm.xlu0 %3993, %v3824
        %v3995 = vpop.permute.xlu0 %3994
        %3998 = vset.pattern.permute.xlu0 0
        %3999 = vperm.xlu0 %3998, %v3825
        %v4000 = vpop.permute.xlu0 %3999
        %4003 = vset.pattern.permute.xlu0 0
        %4004 = vperm.xlu0 %4003, %v3826
        %v4005 = vpop.permute.xlu0 %4004
        %4008 = vset.pattern.permute.xlu0 0
        %4009 = vperm.xlu0 %4008, %v3827
        %v4010 = vpop.permute.xlu0 %4009
        %4013 = vset.pattern.permute.xlu0 0
        %4014 = vperm.xlu0 %4013, %v3828
        %v4015 = vpop.permute.xlu0 %4014
        %4018 = vset.pattern.permute.xlu0 0
        %4019 = vperm.xlu0 %4018, %v3829
        %v4020 = vpop.permute.xlu0 %4019
        %4023 = vset.pattern.permute.xlu0 0
        %4024 = vperm.xlu0 %4023, %v3830
        %v4025 = vpop.permute.xlu0 %4024
        %4028 = vset.pattern.permute.xlu0 0
        %4029 = vperm.xlu0 %4028, %v3831
        %v4030 = vpop.permute.xlu0 %4029
        %4033 = vset.pattern.permute.xlu0 0
        %4034 = vperm.xlu0 %4033, %v3832
        %v4035 = vpop.permute.xlu0 %4034
        %4038 = vset.pattern.permute.xlu0 0
        %4039 = vperm.xlu0 %4038, %v3833
        %v4040 = vpop.permute.xlu0 %4039
        %4043 = vset.pattern.permute.xlu0 0
        %4044 = vperm.xlu0 %4043, %v3834
        %v4045 = vpop.permute.xlu0 %4044
        %4048 = vset.pattern.permute.xlu0 0
        %4049 = vperm.xlu0 %4048, %v3835
        %v4050 = vpop.permute.xlu0 %4049
        %4053 = vset.pattern.permute.xlu0 0
        %4054 = vperm.xlu0 %4053, %v3836
        %v4055 = vpop.permute.xlu0 %4054
        %4058 = vset.pattern.permute.xlu0 0
        %4059 = vperm.xlu0 %4058, %v3837
        %v4060 = vpop.permute.xlu0 %4059
        %4063 = vset.pattern.permute.xlu0 0
        %4064 = vperm.xlu0 %4063, %v3838
        %v4065 = vpop.permute.xlu0 %4064
        %4068 = vset.pattern.permute.xlu0 0
        %4069 = vperm.xlu0 %4068, %v3839
        %v4070 = vpop.permute.xlu0 %4069
        %4073 = vset.pattern.permute.xlu0 0
        %4074 = vperm.xlu0 %4073, %v3840
        %v4075 = vpop.permute.xlu0 %4074
        %4078 = vset.pattern.permute.xlu0 0
        %4079 = vperm.xlu0 %4078, %v3841
        %v4080 = vpop.permute.xlu0 %4079
        %4083 = vset.pattern.permute.xlu0 0
        %4084 = vperm.xlu0 %4083, %v3842
        %v4085 = vpop.permute.xlu0 %4084
        %4088 = vset.pattern.permute.xlu0 0
        %4089 = vperm.xlu0 %4088, %v3843
        %v4090 = vpop.permute.xlu0 %4089
        %4093 = vset.pattern.permute.xlu0 0
        %4094 = vperm.xlu0 %4093, %v3844
        %v4095 = vpop.permute.xlu0 %4094
        %4098 = vset.pattern.permute.xlu0 0
        %4099 = vperm.xlu0 %4098, %v3845
        %v4100 = vpop.permute.xlu0 %4099
        %4103 = vset.pattern.permute.xlu0 0
        %4104 = vperm.xlu0 %4103, %v3846
        %v4105 = vpop.permute.xlu0 %4104
        %4108 = vset.pattern.permute.xlu0 0
        %4109 = vperm.xlu0 %4108, %v3847
        %v4110 = vpop.permute.xlu0 %4109
        %4113 = vset.pattern.permute.xlu0 0
        %4114 = vperm.xlu0 %4113, %v3848
        %v4115 = vpop.permute.xlu0 %4114
        %4118 = vset.pattern.permute.xlu0 0
        %4119 = vperm.xlu0 %4118, %v3849
        %v4120 = vpop.permute.xlu0 %4119
        %4123 = vset.pattern.permute.xlu0 0
        %4124 = vperm.xlu0 %4123, %v3850
        %v4125 = vpop.permute.xlu0 %4124
        %4128 = vset.pattern.permute.xlu0 0
        %4129 = vperm.xlu0 %4128, %v3851
        %v4130 = vpop.permute.xlu0 %4129
        %4133 = vset.pattern.permute.xlu0 0
        %4134 = vperm.xlu0 %4133, %v3852
        %v4135 = vpop.permute.xlu0 %4134
        %4138 = vset.pattern.permute.xlu0 0
        %4139 = vperm.xlu0 %4138, %v3853
        %v4140 = vpop.permute.xlu0 %4139
        %4143 = vset.pattern.permute.xlu0 0
        %4144 = vperm.xlu0 %4143, %v3854
        %v4145 = vpop.permute.xlu0 %4144
        %4148 = vset.pattern.permute.xlu0 0
        %4149 = vperm.xlu0 %4148, %v3855
        %v4150 = vpop.permute.xlu0 %4149
        %4153 = vset.pattern.permute.xlu0 0
        %4154 = vperm.xlu0 %4153, %v3856
        %v4155 = vpop.permute.xlu0 %4154
        %4158 = vset.pattern.permute.xlu0 0
        %4159 = vperm.xlu0 %4158, %v3857
        %v4160 = vpop.permute.xlu0 %4159
        %4163 = vset.pattern.permute.xlu0 0
        %4164 = vperm.xlu0 %4163, %v3858
        %v4165 = vpop.permute.xlu0 %4164
        %4168 = vset.pattern.permute.xlu0 0
        %4169 = vperm.xlu0 %4168, %v3859
        %v4170 = vpop.permute.xlu0 %4169
        %4173 = vset.pattern.permute.xlu0 0
        %4174 = vperm.xlu0 %4173, %v3860
        %v4175 = vpop.permute.xlu0 %4174
        %4178 = vset.pattern.permute.xlu0 0
        %4179 = vperm.xlu0 %4178, %v3861
        %v4180 = vpop.permute.xlu0 %4179
        %v4310 = vunpack.c.l.b16 %v3670
        %v4311 = vunpack.c.h.b16 %v3670
        %v4312 = vunpack.c.l.b16 %v3671
        %v4313 = vunpack.c.l.b16 %v3672
        %v4314 = vunpack.c.h.b16 %v3672
        %v4315 = vunpack.c.l.b16 %v3673
        %v4316 = vunpack.c.l.b16 %v3674
        %v4317 = vunpack.c.h.b16 %v3674
        %v4318 = vunpack.c.l.b16 %v3675
        %v4319 = vunpack.c.l.b16 %v3676
        %v4320 = vunpack.c.h.b16 %v3676
        %v4321 = vunpack.c.l.b16 %v3677
        %v4322 = vunpack.c.l.b16 %v3678
        %v4323 = vunpack.c.h.b16 %v3678
        %v4324 = vunpack.c.l.b16 %v3679
        %v4325 = vunpack.c.l.b16 %v3680
        %v4326 = vunpack.c.h.b16 %v3680
        %v4327 = vunpack.c.l.b16 %v3681
        %v4328 = vunpack.c.l.b16 %v3682
        %v4329 = vunpack.c.h.b16 %v3682
        %v4330 = vunpack.c.l.b16 %v3683
        %v4331 = vunpack.c.l.b16 %v3684
        %v4332 = vunpack.c.h.b16 %v3684
        %v4333 = vunpack.c.l.b16 %v3685
        %v4334 = vunpack.c.l.b16 %v3686
        %v4335 = vunpack.c.h.b16 %v3686
        %v4336 = vunpack.c.l.b16 %v3687
        %v4337 = vunpack.c.l.b16 %v3688
        %v4338 = vunpack.c.h.b16 %v3688
        %v4339 = vunpack.c.l.b16 %v3689
        %v4340 = vunpack.c.l.b16 %v3690
        %v4341 = vunpack.c.h.b16 %v3690
        %v4342 = vunpack.c.l.b16 %v3691
        %v4343 = vunpack.c.l.b16 %v3692
        %v4344 = vunpack.c.h.b16 %v3692
        %v4345 = vunpack.c.l.b16 %v3693
        %v4346 = vunpack.c.l.b16 %v3694
        %v4347 = vunpack.c.h.b16 %v3694
        %v4348 = vunpack.c.l.b16 %v3695
        %v4349 = vunpack.c.l.b16 %v3696
        %v4350 = vunpack.c.h.b16 %v3696
        %v4351 = vunpack.c.l.b16 %v3697
        %v4352 = vunpack.c.l.b16 %v3698
        %v4353 = vunpack.c.h.b16 %v3698
        %v4354 = vunpack.c.l.b16 %v3699
        %v4355 = vunpack.c.l.b16 %v3700
        %v4356 = vunpack.c.h.b16 %v3700
        %v4357 = vunpack.c.l.b16 %v3701
        %v4358 = vunpack.c.l.b16 %v3702
        %v4359 = vunpack.c.h.b16 %v3702
        %v4360 = vunpack.c.l.b16 %v3703
        %v4361 = vunpack.c.l.b16 %v3704
        %v4362 = vunpack.c.h.b16 %v3704
        %v4363 = vunpack.c.l.b16 %v3705
        %v4364 = vunpack.c.l.b16 %v3706
        %v4365 = vunpack.c.h.b16 %v3706
        %v4366 = vunpack.c.l.b16 %v3707
        %v4367 = vunpack.c.l.b16 %v3708
        %v4368 = vunpack.c.h.b16 %v3708
        %v4369 = vunpack.c.l.b16 %v3709
        %v4370 = vunpack.c.l.b16 %v3710
        %v4371 = vunpack.c.h.b16 %v3710
        %v4372 = vunpack.c.l.b16 %v3711
        %v4373 = vunpack.c.l.b16 %v3712
        %v4374 = vunpack.c.h.b16 %v3712
        %v4375 = vunpack.c.l.b16 %v3713
        %v4376 = vunpack.c.l.b16 %v3714
        %v4377 = vunpack.c.h.b16 %v3714
        %v4378 = vunpack.c.l.b16 %v3715
        %v4379 = vunpack.c.l.b16 %v3716
        %v4380 = vunpack.c.h.b16 %v3716
        %v4381 = vunpack.c.l.b16 %v3717
        %v4382 = vunpack.c.l.b16 %v3718
        %v4383 = vunpack.c.h.b16 %v3718
        %v4384 = vunpack.c.l.b16 %v3719
        %v4385 = vunpack.c.l.b16 %v3720
        %v4386 = vunpack.c.h.b16 %v3720
        %v4387 = vunpack.c.l.b16 %v3721
        %v4388 = vunpack.c.l.b16 %v3722
        %v4389 = vunpack.c.h.b16 %v3722
        %v4390 = vunpack.c.l.b16 %v3723
        %v4391 = vunpack.c.l.b16 %v3724
        %v4392 = vunpack.c.h.b16 %v3724
        %v4393 = vunpack.c.l.b16 %v3725
        %v4394 = vunpack.c.l.b16 %v3726
        %v4395 = vunpack.c.h.b16 %v3726
        %v4396 = vunpack.c.l.b16 %v3727
        %v4397 = vunpack.c.l.b16 %v3728
        %v4398 = vunpack.c.h.b16 %v3728
        %v4399 = vunpack.c.l.b16 %v3729
        %v4400 = vunpack.c.l.b16 %v3730
        %v4401 = vunpack.c.h.b16 %v3730
        %v4402 = vunpack.c.l.b16 %v3731
        %v4403 = vunpack.c.l.b16 %v3732
        %v4404 = vunpack.c.h.b16 %v3732
        %v4405 = vunpack.c.l.b16 %v3733
        %v4406 = vunpack.c.l.b16 %v3734
        %v4407 = vunpack.c.h.b16 %v3734
        %v4408 = vunpack.c.l.b16 %v3735
        %v4409 = vunpack.c.l.b16 %v3736
        %v4410 = vunpack.c.h.b16 %v3736
        %v4411 = vunpack.c.l.b16 %v3737
        %v4412 = vunpack.c.l.b16 %v3738
        %v4413 = vunpack.c.h.b16 %v3738
        %v4414 = vunpack.c.l.b16 %v3739
        %v4415 = vunpack.c.l.b16 %v3740
        %v4416 = vunpack.c.h.b16 %v3740
        %v4417 = vunpack.c.l.b16 %v3741
        %v4418 = vunpack.c.l.b16 %v3742
        %v4419 = vunpack.c.h.b16 %v3742
        %v4420 = vunpack.c.l.b16 %v3743
        %v4421 = vunpack.c.l.b16 %v3744
        %v4422 = vunpack.c.h.b16 %v3744
        %v4423 = vunpack.c.l.b16 %v3745
        %v4424 = vunpack.c.l.b16 %v3746
        %v4425 = vunpack.c.h.b16 %v3746
        %v4426 = vunpack.c.l.b16 %v3747
        %v4427 = vunpack.c.l.b16 %v3748
        %v4428 = vunpack.c.h.b16 %v3748
        %v4429 = vunpack.c.l.b16 %v3749
        %v4430 = vunpack.c.l.b16 %v3750
        %v4431 = vunpack.c.h.b16 %v3750
        %v4432 = vunpack.c.l.b16 %v3751
        %v4433 = vunpack.c.l.b16 %v3752
        %v4434 = vunpack.c.h.b16 %v3752
        %v4435 = vunpack.c.l.b16 %v3753
        %v4436 = vunpack.c.l.b16 %v3754
        %v4437 = vunpack.c.h.b16 %v3754
        %v4438 = vunpack.c.l.b16 %v3755
        %v4439 = vunpack.c.l.b16 %v3756
        %v4440 = vunpack.c.h.b16 %v3756
        %v4441 = vunpack.c.l.b16 %v3757
        %v4442 = vunpack.c.l.b16 %v3758
        %v4443 = vunpack.c.h.b16 %v3758
        %v4444 = vunpack.c.l.b16 %v3759
        %v4445 = vunpack.c.l.b16 %v3760
        %v4446 = vunpack.c.h.b16 %v3760
        %v4447 = vunpack.c.l.b16 %v3761
        %v4448 = vunpack.c.l.b16 %v3762
        %v4449 = vunpack.c.h.b16 %v3762
        %v4450 = vunpack.c.l.b16 %v3763
        %v4451 = vunpack.c.l.b16 %v3764
        %v4452 = vunpack.c.h.b16 %v3764
        %v4453 = vunpack.c.l.b16 %v3765
        %v4454 = vunpack.c.l.b16 %v3766
        %v4455 = vunpack.c.h.b16 %v3766
        %v4456 = vunpack.c.l.b16 %v3767
        %v4457 = vunpack.c.l.b16 %v3768
        %v4458 = vunpack.c.h.b16 %v3768
        %v4459 = vunpack.c.l.b16 %v3769
        %v4460 = vunpack.c.l.b16 %v3770
        %v4461 = vunpack.c.h.b16 %v3770
        %v4462 = vunpack.c.l.b16 %v3771
        %v4463 = vunpack.c.l.b16 %v3772
        %v4464 = vunpack.c.h.b16 %v3772
        %v4465 = vunpack.c.l.b16 %v3773
        %v4466 = vunpack.c.l.b16 %v3774
        %v4467 = vunpack.c.h.b16 %v3774
        %v4468 = vunpack.c.l.b16 %v3775
        %v4469 = vunpack.c.l.b16 %v3776
        %v4470 = vunpack.c.h.b16 %v3776
        %v4471 = vunpack.c.l.b16 %v3777
        %v4472 = vunpack.c.l.b16 %v3778
        %v4473 = vunpack.c.h.b16 %v3778
        %v4474 = vunpack.c.l.b16 %v3779
        %v4475 = vunpack.c.l.b16 %v3780
        %v4476 = vunpack.c.h.b16 %v3780
        %v4477 = vunpack.c.l.b16 %v3781
        %v4478 = vunpack.c.l.b16 %v3782
        %v4479 = vunpack.c.h.b16 %v3782
        %v4480 = vunpack.c.l.b16 %v3783
        %v4481 = vunpack.c.l.b16 %v3784
        %v4482 = vunpack.c.h.b16 %v3784
        %v4483 = vunpack.c.l.b16 %v3785
        %v4484 = vunpack.c.l.b16 %v3786
        %v4485 = vunpack.c.h.b16 %v3786
        %v4486 = vunpack.c.l.b16 %v3787
        %v4487 = vunpack.c.l.b16 %v3788
        %v4488 = vunpack.c.h.b16 %v3788
        %v4489 = vunpack.c.l.b16 %v3789
        %v4490 = vunpack.c.l.b16 %v3790
        %v4491 = vunpack.c.h.b16 %v3790
        %v4492 = vunpack.c.l.b16 %v3791
        %v4493 = vunpack.c.l.b16 %v3792
        %v4494 = vunpack.c.h.b16 %v3792
        %v4495 = vunpack.c.l.b16 %v3793
        %v4496 = vunpack.c.l.b16 %v3794
        %v4497 = vunpack.c.h.b16 %v3794
        %v4498 = vunpack.c.l.b16 %v3795
        %v4499 = vunpack.c.l.b16 %v3796
        %v4500 = vunpack.c.h.b16 %v3796
        %v4501 = vunpack.c.l.b16 %v3797
        %v4502 = vpack.c.b16 %v4313, %v4310
        %v4503 = vpack.c.b16 %v4314, %v4311
        %v4504 = vpack.c.b16 %v4315, %v4312
        %v4505 = vpack.c.b16 %v4319, %v4316
        %v4506 = vpack.c.b16 %v4320, %v4317
        %v4507 = vpack.c.b16 %v4321, %v4318
        %v4508 = vpack.c.b16 %v4325, %v4322
        %v4509 = vpack.c.b16 %v4326, %v4323
        %v4510 = vpack.c.b16 %v4327, %v4324
        %v4511 = vpack.c.b16 %v4331, %v4328
        %v4512 = vpack.c.b16 %v4332, %v4329
        %v4513 = vpack.c.b16 %v4333, %v4330
        %v4514 = vpack.c.b16 %v4337, %v4334
        %v4515 = vpack.c.b16 %v4338, %v4335
        %v4516 = vpack.c.b16 %v4339, %v4336
        %v4517 = vpack.c.b16 %v4343, %v4340
        %v4518 = vpack.c.b16 %v4344, %v4341
        %v4519 = vpack.c.b16 %v4345, %v4342
        %v4520 = vpack.c.b16 %v4349, %v4346
        %v4521 = vpack.c.b16 %v4350, %v4347
        %v4522 = vpack.c.b16 %v4351, %v4348
        %v4523 = vpack.c.b16 %v4355, %v4352
        %v4524 = vpack.c.b16 %v4356, %v4353
        %v4525 = vpack.c.b16 %v4357, %v4354
        %v4526 = vpack.c.b16 %v4361, %v4358
        %v4527 = vpack.c.b16 %v4362, %v4359
        %v4528 = vpack.c.b16 %v4363, %v4360
        %v4529 = vpack.c.b16 %v4367, %v4364
        %v4530 = vpack.c.b16 %v4368, %v4365
        %v4531 = vpack.c.b16 %v4369, %v4366
        %v4532 = vpack.c.b16 %v4373, %v4370
        %v4533 = vpack.c.b16 %v4374, %v4371
        %v4534 = vpack.c.b16 %v4375, %v4372
        %v4535 = vpack.c.b16 %v4379, %v4376
        %v4536 = vpack.c.b16 %v4380, %v4377
        %v4537 = vpack.c.b16 %v4381, %v4378
        %v4538 = vpack.c.b16 %v4385, %v4382
        %v4539 = vpack.c.b16 %v4386, %v4383
        %v4540 = vpack.c.b16 %v4387, %v4384
        %v4541 = vpack.c.b16 %v4391, %v4388
        %v4542 = vpack.c.b16 %v4392, %v4389
        %v4543 = vpack.c.b16 %v4393, %v4390
        %v4544 = vpack.c.b16 %v4397, %v4394
        %v4545 = vpack.c.b16 %v4398, %v4395
        %v4546 = vpack.c.b16 %v4399, %v4396
        %v4547 = vpack.c.b16 %v4403, %v4400
        %v4548 = vpack.c.b16 %v4404, %v4401
        %v4549 = vpack.c.b16 %v4405, %v4402
        %v4550 = vpack.c.b16 %v4409, %v4406
        %v4551 = vpack.c.b16 %v4410, %v4407
        %v4552 = vpack.c.b16 %v4411, %v4408
        %v4553 = vpack.c.b16 %v4415, %v4412
        %v4554 = vpack.c.b16 %v4416, %v4413
        %v4555 = vpack.c.b16 %v4417, %v4414
        %v4556 = vpack.c.b16 %v4421, %v4418
        %v4557 = vpack.c.b16 %v4422, %v4419
        %v4558 = vpack.c.b16 %v4423, %v4420
        %v4559 = vpack.c.b16 %v4427, %v4424
        %v4560 = vpack.c.b16 %v4428, %v4425
        %v4561 = vpack.c.b16 %v4429, %v4426
        %v4562 = vpack.c.b16 %v4433, %v4430
        %v4563 = vpack.c.b16 %v4434, %v4431
        %v4564 = vpack.c.b16 %v4435, %v4432
        %v4565 = vpack.c.b16 %v4439, %v4436
        %v4566 = vpack.c.b16 %v4440, %v4437
        %v4567 = vpack.c.b16 %v4441, %v4438
        %v4568 = vpack.c.b16 %v4445, %v4442
        %v4569 = vpack.c.b16 %v4446, %v4443
        %v4570 = vpack.c.b16 %v4447, %v4444
        %v4571 = vpack.c.b16 %v4451, %v4448
        %v4572 = vpack.c.b16 %v4452, %v4449
        %v4573 = vpack.c.b16 %v4453, %v4450
        %v4574 = vpack.c.b16 %v4457, %v4454
        %v4575 = vpack.c.b16 %v4458, %v4455
        %v4576 = vpack.c.b16 %v4459, %v4456
        %v4577 = vpack.c.b16 %v4463, %v4460
        %v4578 = vpack.c.b16 %v4464, %v4461
        %v4579 = vpack.c.b16 %v4465, %v4462
        %v4580 = vpack.c.b16 %v4469, %v4466
        %v4581 = vpack.c.b16 %v4470, %v4467
        %v4582 = vpack.c.b16 %v4471, %v4468
        %v4583 = vpack.c.b16 %v4475, %v4472
        %v4584 = vpack.c.b16 %v4476, %v4473
        %v4585 = vpack.c.b16 %v4477, %v4474
        %v4586 = vpack.c.b16 %v4481, %v4478
        %v4587 = vpack.c.b16 %v4482, %v4479
        %v4588 = vpack.c.b16 %v4483, %v4480
        %v4589 = vpack.c.b16 %v4487, %v4484
        %v4590 = vpack.c.b16 %v4488, %v4485
        %v4591 = vpack.c.b16 %v4489, %v4486
        %v4592 = vpack.c.b16 %v4493, %v4490
        %v4593 = vpack.c.b16 %v4494, %v4491
        %v4594 = vpack.c.b16 %v4495, %v4492
        %v4595 = vpack.c.b16 %v4499, %v4496
        %v4596 = vpack.c.b16 %v4500, %v4497
        %v4597 = vpack.c.b16 %v4501, %v4498
        %v4663 = vsel %vm660, %v4504, 0
        %v4666 = vsel %vm660, %v4507, 0
        %v4669 = vsel %vm660, %v4510, 0
        %v4672 = vsel %vm660, %v4513, 0
        %v4675 = vsel %vm660, %v4516, 0
        %v4678 = vsel %vm660, %v4519, 0
        %v4681 = vsel %vm660, %v4522, 0
        %v4684 = vsel %vm660, %v4525, 0
        %v4687 = vsel %vm660, %v4528, 0
        %v4690 = vsel %vm660, %v4531, 0
        %v4693 = vsel %vm660, %v4534, 0
        %v4696 = vsel %vm660, %v4537, 0
        %v4699 = vsel %vm660, %v4540, 0
        %v4702 = vsel %vm660, %v4543, 0
        %v4705 = vsel %vm660, %v4546, 0
        %v4708 = vsel %vm660, %v4549, 0
        %v4711 = vsel %vm660, %v4552, 0
        %v4714 = vsel %vm660, %v4555, 0
        %v4717 = vsel %vm660, %v4558, 0
        %v4720 = vsel %vm660, %v4561, 0
        %v4723 = vsel %vm660, %v4564, 0
        %v4726 = vsel %vm660, %v4567, 0
        %v4729 = vsel %vm660, %v4570, 0
        %v4732 = vsel %vm660, %v4573, 0
        %v4735 = vsel %vm660, %v4576, 0
        %v4738 = vsel %vm660, %v4579, 0
        %v4741 = vsel %vm660, %v4582, 0
        %v4744 = vsel %vm660, %v4585, 0
        %v4747 = vsel %vm660, %v4588, 0
        %v4750 = vsel %vm660, %v4591, 0
        %v4753 = vsel %vm660, %v4594, 0
        %v4756 = vsel %vm660, %v4597, 0
        %4758 = vmatprep.subr.bf16.mxu0 0
        %4759 = vmatpush1.bf16.msra.mxu0 %v3652
        %4760 = vmatprep.subr.bf16.mxu0 0
        %4761 = vmatpush1.bf16.msra.mxu0 %v3653
        %4762 = vmatprep.subr.bf16.mxu0 0
        %4763 = vmatpush1.bf16.msra.mxu0 %v3654
        %4764 = vmatprep.subr.bf16.mxu0 0
        %4765 = vmatpush1.bf16.msra.mxu0 %v3655
        %4766 = vmatprep.subr.bf16.mxu0 0
        %4767 = vmatpush1.bf16.msra.mxu0 %v3656
        %4768 = vmatprep.subr.bf16.mxu0 0
        %4769 = vmatpush1.bf16.msra.mxu0 %v3657
        %4770 = vmatprep.subr.bf16.mxu0 0
        %4771 = vmatpush1.bf16.msra.mxu0 %v3658
        %4772 = vmatprep.subr.bf16.mxu0 0
        %4773 = vmatpush1.bf16.msra.mxu0 %v3659
        %4774 = vmatprep.subr.bf16.mxu0 0
        %4775 = vmatpush1.bf16.msra.mxu0 %v3660
        %4776 = vmatprep.subr.bf16.mxu0 0
        %4777 = vmatpush1.bf16.msra.mxu0 %v3661
        %4778 = vmatprep.subr.bf16.mxu0 0
        %4779 = vmatpush1.bf16.msra.mxu0 %v3662
        %4780 = vmatprep.subr.bf16.mxu0 0
        %4781 = vmatpush1.bf16.msra.mxu0 %v3663
        %4782 = vmatprep.subr.bf16.mxu0 0
        %4783 = vmatpush1.bf16.msra.mxu0 %v3664
        %4784 = vmatprep.subr.bf16.mxu0 0
        %4785 = vmatpush1.bf16.msra.mxu0 %v3665
        %4786 = vmatprep.subr.bf16.mxu0 0
        %4787 = vmatpush1.bf16.msra.mxu0 %v3666
        %4788 = vmatprep.subr.bf16.mxu0 0
        %4789 = vmatpush1.bf16.msra.mxu0 %v3667
        %4790 = vmatprep.mubr.bf16.mxu0 %v4503
        %4791 = vmatmul.mubr.bf16.gmra.mrb[0].mxu0 %v4502
        %v4792 = vpop.f32.mrb[0].mxu0
        %v4793 = vadd.f32 %v3865, %v4792
        %v4794 = vpop.f32.mrb[0].mxu0
        %v4795 = vpop.f32.mrb[0].mxu0
        %v4796 = vadd.f32 %v3870, %v4795
        %v4797 = vpop.f32.mrb[0].mxu0
        %4798 = vmatprep.mubr.bf16.mxu0 %v4506
        %4799 = vmatmul.mubr.bf16.gmra.mrb[0].mxu0 %v4505
        %v4800 = vpop.f32.mrb[0].mxu0
        %v4801 = vadd.f32 %v3875, %v4800
        %v4802 = vpop.f32.mrb[0].mxu0
        %v4803 = vpop.f32.mrb[0].mxu0
        %v4804 = vadd.f32 %v3880, %v4803
        %v4805 = vpop.f32.mrb[0].mxu0
        %4806 = vmatprep.mubr.bf16.mxu0 %v4509
        %4807 = vmatmul.mubr.bf16.gmra.mrb[0].mxu0 %v4508
        %v4808 = vpop.f32.mrb[0].mxu0
        %v4809 = vadd.f32 %v3885, %v4808
        %v4810 = vpop.f32.mrb[0].mxu0
        %v4811 = vpop.f32.mrb[0].mxu0
        %v4812 = vadd.f32 %v3890, %v4811
        %v4813 = vpop.f32.mrb[0].mxu0
        %4814 = vmatprep.mubr.bf16.mxu0 %v4512
        %4815 = vmatmul.mubr.bf16.gmra.mrb[0].mxu0 %v4511
        %v4816 = vpop.f32.mrb[0].mxu0
        %v4817 = vadd.f32 %v3895, %v4816
        %v4818 = vpop.f32.mrb[0].mxu0
        %v4819 = vpop.f32.mrb[0].mxu0
        %v4820 = vadd.f32 %v3900, %v4819
        %v4821 = vpop.f32.mrb[0].mxu0
        %4822 = vmatprep.mubr.bf16.mxu0 %v4515
        %4823 = vmatmul.mubr.bf16.gmra.mrb[0].mxu0 %v4514
        %v4824 = vpop.f32.mrb[0].mxu0
        %v4825 = vadd.f32 %v3905, %v4824
        %v4826 = vpop.f32.mrb[0].mxu0
        %v4827 = vpop.f32.mrb[0].mxu0
        %v4828 = vadd.f32 %v3910, %v4827
        %v4829 = vpop.f32.mrb[0].mxu0
        %4830 = vmatprep.mubr.bf16.mxu0 %v4518
        %4831 = vmatmul.mubr.bf16.gmra.mrb[0].mxu0 %v4517
        %v4832 = vpop.f32.mrb[0].mxu0
        %v4833 = vadd.f32 %v3915, %v4832
        %v4834 = vpop.f32.mrb[0].mxu0
        %v4835 = vpop.f32.mrb[0].mxu0
        %v4836 = vadd.f32 %v3920, %v4835
        %v4837 = vpop.f32.mrb[0].mxu0
        %4838 = vmatprep.mubr.bf16.mxu0 %v4521
        %4839 = vmatmul.mubr.bf16.gmra.mrb[0].mxu0 %v4520
        %v4840 = vpop.f32.mrb[0].mxu0
        %v4841 = vadd.f32 %v3925, %v4840
        %v4842 = vpop.f32.mrb[0].mxu0
        %v4843 = vpop.f32.mrb[0].mxu0
        %v4844 = vadd.f32 %v3930, %v4843
        %v4845 = vpop.f32.mrb[0].mxu0
        %4846 = vmatprep.mubr.bf16.mxu0 %v4524
        %4847 = vmatmul.mubr.bf16.gmra.mrb[0].mxu0 %v4523
        %v4848 = vpop.f32.mrb[0].mxu0
        %v4849 = vadd.f32 %v3935, %v4848
        %v4850 = vpop.f32.mrb[0].mxu0
        %v4851 = vpop.f32.mrb[0].mxu0
        %v4852 = vadd.f32 %v3940, %v4851
        %v4853 = vpop.f32.mrb[0].mxu0
        %4854 = vmatprep.mubr.bf16.mxu0 %v4527
        %4855 = vmatmul.mubr.bf16.gmra.mrb[0].mxu0 %v4526
        %v4856 = vpop.f32.mrb[0].mxu0
        %v4857 = vadd.f32 %v3945, %v4856
        %v4858 = vpop.f32.mrb[0].mxu0
        %v4859 = vpop.f32.mrb[0].mxu0
        %v4860 = vadd.f32 %v3950, %v4859
        %v4861 = vpop.f32.mrb[0].mxu0
        %4862 = vmatprep.mubr.bf16.mxu0 %v4530
        %4863 = vmatmul.mubr.bf16.gmra.mrb[0].mxu0 %v4529
        %v4864 = vpop.f32.mrb[0].mxu0
        %v4865 = vadd.f32 %v3955, %v4864
        %v4866 = vpop.f32.mrb[0].mxu0
        %v4867 = vpop.f32.mrb[0].mxu0
        %v4868 = vadd.f32 %v3960, %v4867
        %v4869 = vpop.f32.mrb[0].mxu0
        %4870 = vmatprep.mubr.bf16.mxu0 %v4533
        %4871 = vmatmul.mubr.bf16.gmra.mrb[0].mxu0 %v4532
        %v4872 = vpop.f32.mrb[0].mxu0
        %v4873 = vadd.f32 %v3965, %v4872
        %v4874 = vpop.f32.mrb[0].mxu0
        %v4875 = vpop.f32.mrb[0].mxu0
        %v4876 = vadd.f32 %v3970, %v4875
        %v4877 = vpop.f32.mrb[0].mxu0
        %4878 = vmatprep.mubr.bf16.mxu0 %v4536
        %4879 = vmatmul.mubr.bf16.gmra.mrb[0].mxu0 %v4535
        %v4880 = vpop.f32.mrb[0].mxu0
        %v4881 = vadd.f32 %v3975, %v4880
        %v4882 = vpop.f32.mrb[0].mxu0
        %v4883 = vpop.f32.mrb[0].mxu0
        %v4884 = vadd.f32 %v3980, %v4883
        %v4885 = vpop.f32.mrb[0].mxu0
        %4886 = vmatprep.mubr.bf16.mxu0 %v4539
        %4887 = vmatmul.mubr.bf16.gmra.mrb[0].mxu0 %v4538
        %v4888 = vpop.f32.mrb[0].mxu0
        %v4889 = vadd.f32 %v3985, %v4888
        %v4890 = vpop.f32.mrb[0].mxu0
        %v4891 = vpop.f32.mrb[0].mxu0
        %v4892 = vadd.f32 %v3990, %v4891
        %v4893 = vpop.f32.mrb[0].mxu0
        %4894 = vmatprep.mubr.bf16.mxu0 %v4542
        %4895 = vmatmul.mubr.bf16.gmra.mrb[0].mxu0 %v4541
        %v4896 = vpop.f32.mrb[0].mxu0
        %v4897 = vadd.f32 %v3995, %v4896
        %v4898 = vpop.f32.mrb[0].mxu0
        %v4899 = vpop.f32.mrb[0].mxu0
        %v4900 = vadd.f32 %v4000, %v4899
        %v4901 = vpop.f32.mrb[0].mxu0
        %4902 = vmatprep.mubr.bf16.mxu0 %v4545
        %4903 = vmatmul.mubr.bf16.gmra.mrb[0].mxu0 %v4544
        %v4904 = vpop.f32.mrb[0].mxu0
        %v4905 = vadd.f32 %v4005, %v4904
        %v4906 = vpop.f32.mrb[0].mxu0
        %v4907 = vpop.f32.mrb[0].mxu0
        %v4908 = vadd.f32 %v4010, %v4907
        %v4909 = vpop.f32.mrb[0].mxu0
        %4910 = vmatprep.mubr.bf16.mxu0 %v4548
        %4911 = vmatmul.mubr.bf16.gmra.mrb[0].mxu0 %v4547
        %v4912 = vpop.f32.mrb[0].mxu0
        %v4913 = vadd.f32 %v4015, %v4912
        %v4914 = vpop.f32.mrb[0].mxu0
        %v4915 = vpop.f32.mrb[0].mxu0
        %v4916 = vadd.f32 %v4020, %v4915
        %v4917 = vpop.f32.mrb[0].mxu0
        %4918 = vmatprep.mubr.bf16.mxu0 %v4551
        %4919 = vmatmul.mubr.bf16.gmra.mrb[0].mxu0 %v4550
        %v4920 = vpop.f32.mrb[0].mxu0
        %v4921 = vadd.f32 %v4025, %v4920
        %v4922 = vpop.f32.mrb[0].mxu0
        %v4923 = vpop.f32.mrb[0].mxu0
        %v4924 = vadd.f32 %v4030, %v4923
        %v4925 = vpop.f32.mrb[0].mxu0
        %4926 = vmatprep.mubr.bf16.mxu0 %v4554
        %4927 = vmatmul.mubr.bf16.gmra.mrb[0].mxu0 %v4553
        %v4928 = vpop.f32.mrb[0].mxu0
        %v4929 = vadd.f32 %v4035, %v4928
        %v4930 = vpop.f32.mrb[0].mxu0
        %v4931 = vpop.f32.mrb[0].mxu0
        %v4932 = vadd.f32 %v4040, %v4931
        %v4933 = vpop.f32.mrb[0].mxu0
        %4934 = vmatprep.mubr.bf16.mxu0 %v4557
        %4935 = vmatmul.mubr.bf16.gmra.mrb[0].mxu0 %v4556
        %v4936 = vpop.f32.mrb[0].mxu0
        %v4937 = vadd.f32 %v4045, %v4936
        %v4938 = vpop.f32.mrb[0].mxu0
        %v4939 = vpop.f32.mrb[0].mxu0
        %v4940 = vadd.f32 %v4050, %v4939
        %v4941 = vpop.f32.mrb[0].mxu0
        %4942 = vmatprep.mubr.bf16.mxu0 %v4560
        %4943 = vmatmul.mubr.bf16.gmra.mrb[0].mxu0 %v4559
        %v4944 = vpop.f32.mrb[0].mxu0
        %v4945 = vadd.f32 %v4055, %v4944
        %v4946 = vpop.f32.mrb[0].mxu0
        %v4947 = vpop.f32.mrb[0].mxu0
        %v4948 = vadd.f32 %v4060, %v4947
        %v4949 = vpop.f32.mrb[0].mxu0
        %4950 = vmatprep.mubr.bf16.mxu0 %v4563
        %4951 = vmatmul.mubr.bf16.gmra.mrb[0].mxu0 %v4562
        %v4952 = vpop.f32.mrb[0].mxu0
        %v4953 = vadd.f32 %v4065, %v4952
        %v4954 = vpop.f32.mrb[0].mxu0
        %v4955 = vpop.f32.mrb[0].mxu0
        %v4956 = vadd.f32 %v4070, %v4955
        %v4957 = vpop.f32.mrb[0].mxu0
        %4958 = vmatprep.mubr.bf16.mxu0 %v4566
        %4959 = vmatmul.mubr.bf16.gmra.mrb[0].mxu0 %v4565
        %v4960 = vpop.f32.mrb[0].mxu0
        %v4961 = vadd.f32 %v4075, %v4960
        %v4962 = vpop.f32.mrb[0].mxu0
        %v4963 = vpop.f32.mrb[0].mxu0
        %v4964 = vadd.f32 %v4080, %v4963
        %v4965 = vpop.f32.mrb[0].mxu0
        %4966 = vmatprep.mubr.bf16.mxu0 %v4569
        %4967 = vmatmul.mubr.bf16.gmra.mrb[0].mxu0 %v4568
        %v4968 = vpop.f32.mrb[0].mxu0
        %v4969 = vadd.f32 %v4085, %v4968
        %v4970 = vpop.f32.mrb[0].mxu0
        %v4971 = vpop.f32.mrb[0].mxu0
        %v4972 = vadd.f32 %v4090, %v4971
        %v4973 = vpop.f32.mrb[0].mxu0
        %4974 = vmatprep.mubr.bf16.mxu0 %v4572
        %4975 = vmatmul.mubr.bf16.gmra.mrb[0].mxu0 %v4571
        %v4976 = vpop.f32.mrb[0].mxu0
        %v4977 = vadd.f32 %v4095, %v4976
        %v4978 = vpop.f32.mrb[0].mxu0
        %v4979 = vpop.f32.mrb[0].mxu0
        %v4980 = vadd.f32 %v4100, %v4979
        %v4981 = vpop.f32.mrb[0].mxu0
        %4982 = vmatprep.mubr.bf16.mxu0 %v4575
        %4983 = vmatmul.mubr.bf16.gmra.mrb[0].mxu0 %v4574
        %v4984 = vpop.f32.mrb[0].mxu0
        %v4985 = vadd.f32 %v4105, %v4984
        %v4986 = vpop.f32.mrb[0].mxu0
        %v4987 = vpop.f32.mrb[0].mxu0
        %v4988 = vadd.f32 %v4110, %v4987
        %v4989 = vpop.f32.mrb[0].mxu0
        %4990 = vmatprep.mubr.bf16.mxu0 %v4578
        %4991 = vmatmul.mubr.bf16.gmra.mrb[0].mxu0 %v4577
        %v4992 = vpop.f32.mrb[0].mxu0
        %v4993 = vadd.f32 %v4115, %v4992
        %v4994 = vpop.f32.mrb[0].mxu0
        %v4995 = vpop.f32.mrb[0].mxu0
        %v4996 = vadd.f32 %v4120, %v4995
        %v4997 = vpop.f32.mrb[0].mxu0
        %4998 = vmatprep.mubr.bf16.mxu0 %v4581
        %4999 = vmatmul.mubr.bf16.gmra.mrb[0].mxu0 %v4580
        %v5000 = vpop.f32.mrb[0].mxu0
        %v5001 = vadd.f32 %v4125, %v5000
        %v5002 = vpop.f32.mrb[0].mxu0
        %v5003 = vpop.f32.mrb[0].mxu0
        %v5004 = vadd.f32 %v4130, %v5003
        %v5005 = vpop.f32.mrb[0].mxu0
        %5006 = vmatprep.mubr.bf16.mxu0 %v4584
        %5007 = vmatmul.mubr.bf16.gmra.mrb[0].mxu0 %v4583
        %v5008 = vpop.f32.mrb[0].mxu0
        %v5009 = vadd.f32 %v4135, %v5008
        %v5010 = vpop.f32.mrb[0].mxu0
        %v5011 = vpop.f32.mrb[0].mxu0
        %v5012 = vadd.f32 %v4140, %v5011
        %v5013 = vpop.f32.mrb[0].mxu0
        %5014 = vmatprep.mubr.bf16.mxu0 %v4587
        %5015 = vmatmul.mubr.bf16.gmra.mrb[0].mxu0 %v4586
        %v5016 = vpop.f32.mrb[0].mxu0
        %v5017 = vadd.f32 %v4145, %v5016
        %v5018 = vpop.f32.mrb[0].mxu0
        %v5019 = vpop.f32.mrb[0].mxu0
        %v5020 = vadd.f32 %v4150, %v5019
        %v5021 = vpop.f32.mrb[0].mxu0
        %5022 = vmatprep.mubr.bf16.mxu0 %v4590
        %5023 = vmatmul.mubr.bf16.gmra.mrb[0].mxu0 %v4589
        %v5024 = vpop.f32.mrb[0].mxu0
        %v5025 = vadd.f32 %v4155, %v5024
        %v5026 = vpop.f32.mrb[0].mxu0
        %v5027 = vpop.f32.mrb[0].mxu0
        %v5028 = vadd.f32 %v4160, %v5027
        %v5029 = vpop.f32.mrb[0].mxu0
        %5030 = vmatprep.mubr.bf16.mxu0 %v4593
        %5031 = vmatmul.mubr.bf16.gmra.mrb[0].mxu0 %v4592
        %v5032 = vpop.f32.mrb[0].mxu0
        %v5033 = vadd.f32 %v4165, %v5032
        %v5034 = vpop.f32.mrb[0].mxu0
        %v5035 = vpop.f32.mrb[0].mxu0
        %v5036 = vadd.f32 %v4170, %v5035
        %v5037 = vpop.f32.mrb[0].mxu0
        %5038 = vmatprep.mubr.bf16.mxu0 %v4596
        %5039 = vmatmul.mubr.bf16.gmra.mrb[0].mxu0 %v4595
        %v5040 = vpop.f32.mrb[0].mxu0
        %v5041 = vadd.f32 %v4175, %v5040
        %v5042 = vpop.f32.mrb[0].mxu0
        %v5043 = vpop.f32.mrb[0].mxu0
        %v5044 = vadd.f32 %v4180, %v5043
        %v5045 = vpop.f32.mrb[0].mxu0
        %5046 = vdwg.mxu0
        %5047 = vmatprep.subr.bf16.mxu0 0
        %5048 = vmatpush1.bf16.msra.mxu0 %v3668
        %5049 = vmatprep.subr.bf16.mxu0 0
        %5050 = vmatpush1.bf16.msra.mxu0 %v3669
        %5051 = vmatprep.subr.bf16.mxu0 0
        %5052 = vmatpush1.bf16.msra.mxu0 0
        %5053 = vmatprep.subr.bf16.mxu0 0
        %5054 = vmatpush1.bf16.msra.mxu0 0
        %5055 = vmatprep.subr.bf16.mxu0 0
        %5056 = vmatpush1.bf16.msra.mxu0 0
        %5057 = vmatprep.subr.bf16.mxu0 0
        %5058 = vmatpush1.bf16.msra.mxu0 0
        %5059 = vmatprep.subr.bf16.mxu0 0
        %5060 = vmatpush1.bf16.msra.mxu0 0
        %5061 = vmatprep.subr.bf16.mxu0 0
        %5062 = vmatpush1.bf16.msra.mxu0 0
        %5063 = vmatprep.subr.bf16.mxu0 0
        %5064 = vmatpush1.bf16.msra.mxu0 0
        %5065 = vmatprep.subr.bf16.mxu0 0
        %5066 = vmatpush1.bf16.msra.mxu0 0
        %5067 = vmatprep.subr.bf16.mxu0 0
        %5068 = vmatpush1.bf16.msra.mxu0 0
        %5069 = vmatprep.subr.bf16.mxu0 0
        %5070 = vmatpush1.bf16.msra.mxu0 0
        %5071 = vmatprep.subr.bf16.mxu0 0
        %5072 = vmatpush1.bf16.msra.mxu0 0
        %5073 = vmatprep.subr.bf16.mxu0 0
        %5074 = vmatpush1.bf16.msra.mxu0 0
        %5075 = vmatprep.subr.bf16.mxu0 0
        %5076 = vmatpush1.bf16.msra.mxu0 0
        %5077 = vmatprep.subr.bf16.mxu0 0
        %5078 = vmatpush1.bf16.msra.mxu0 0
        %5079 = vmatprep.mubr.bf16.mxu0 0
        %5080 = vmatmul.mubr.bf16.gmra.mrb[0].mxu0 %v4663
        %v5081 = vpop.f32.mrb[0].mxu0
        %v5082 = vadd.f32 %v4793, %v5081
        %v5083 = vpop.f32.mrb[0].mxu0
        %v5084 = vpop.f32.mrb[0].mxu0
        %v5085 = vadd.f32 %v4796, %v5084
        %v5086 = vpop.f32.mrb[0].mxu0
        %5087 = vmatprep.mubr.bf16.mxu0 0
        %5088 = vmatmul.mubr.bf16.gmra.mrb[0].mxu0 %v4666
        %v5089 = vpop.f32.mrb[0].mxu0
        %v5090 = vadd.f32 %v4801, %v5089
        %v5091 = vpop.f32.mrb[0].mxu0
        %v5092 = vpop.f32.mrb[0].mxu0
        %v5093 = vadd.f32 %v4804, %v5092
        %v5094 = vpop.f32.mrb[0].mxu0
        %5095 = vmatprep.mubr.bf16.mxu0 0
        %5096 = vmatmul.mubr.bf16.gmra.mrb[0].mxu0 %v4669
        %v5097 = vpop.f32.mrb[0].mxu0
        %v5098 = vadd.f32 %v4809, %v5097
        %v5099 = vpop.f32.mrb[0].mxu0
        %v5100 = vpop.f32.mrb[0].mxu0
        %v5101 = vadd.f32 %v4812, %v5100
        %v5102 = vpop.f32.mrb[0].mxu0
        %5103 = vmatprep.mubr.bf16.mxu0 0
        %5104 = vmatmul.mubr.bf16.gmra.mrb[0].mxu0 %v4672
        %v5105 = vpop.f32.mrb[0].mxu0
        %v5106 = vadd.f32 %v4817, %v5105
        %v5107 = vpop.f32.mrb[0].mxu0
        %v5108 = vpop.f32.mrb[0].mxu0
        %v5109 = vadd.f32 %v4820, %v5108
        %v5110 = vpop.f32.mrb[0].mxu0
        %5111 = vmatprep.mubr.bf16.mxu0 0
        %5112 = vmatmul.mubr.bf16.gmra.mrb[0].mxu0 %v4675
        %v5113 = vpop.f32.mrb[0].mxu0
        %v5114 = vadd.f32 %v4825, %v5113
        %v5115 = vpop.f32.mrb[0].mxu0
        %v5116 = vpop.f32.mrb[0].mxu0
        %v5117 = vadd.f32 %v4828, %v5116
        %v5118 = vpop.f32.mrb[0].mxu0
        %5119 = vmatprep.mubr.bf16.mxu0 0
        %5120 = vmatmul.mubr.bf16.gmra.mrb[0].mxu0 %v4678
        %v5121 = vpop.f32.mrb[0].mxu0
        %v5122 = vadd.f32 %v4833, %v5121
        %v5123 = vpop.f32.mrb[0].mxu0
        %v5124 = vpop.f32.mrb[0].mxu0
        %v5125 = vadd.f32 %v4836, %v5124
        %v5126 = vpop.f32.mrb[0].mxu0
        %5127 = vmatprep.mubr.bf16.mxu0 0
        %5128 = vmatmul.mubr.bf16.gmra.mrb[0].mxu0 %v4681
        %v5129 = vpop.f32.mrb[0].mxu0
        %v5130 = vadd.f32 %v4841, %v5129
        %v5131 = vpop.f32.mrb[0].mxu0
        %v5132 = vpop.f32.mrb[0].mxu0
        %v5133 = vadd.f32 %v4844, %v5132
        %v5134 = vpop.f32.mrb[0].mxu0
        %5135 = vmatprep.mubr.bf16.mxu0 0
        %5136 = vmatmul.mubr.bf16.gmra.mrb[0].mxu0 %v4684
        %v5137 = vpop.f32.mrb[0].mxu0
        %v5138 = vadd.f32 %v4849, %v5137
        %v5139 = vpop.f32.mrb[0].mxu0
        %v5140 = vpop.f32.mrb[0].mxu0
        %v5141 = vadd.f32 %v4852, %v5140
        %v5142 = vpop.f32.mrb[0].mxu0
        %5143 = vmatprep.mubr.bf16.mxu0 0
        %5144 = vmatmul.mubr.bf16.gmra.mrb[0].mxu0 %v4687
        %v5145 = vpop.f32.mrb[0].mxu0
        %v5146 = vadd.f32 %v4857, %v5145
        %v5147 = vpop.f32.mrb[0].mxu0
        %v5148 = vpop.f32.mrb[0].mxu0
        %v5149 = vadd.f32 %v4860, %v5148
        %v5150 = vpop.f32.mrb[0].mxu0
        %5151 = vmatprep.mubr.bf16.mxu0 0
        %5152 = vmatmul.mubr.bf16.gmra.mrb[0].mxu0 %v4690
        %v5153 = vpop.f32.mrb[0].mxu0
        %v5154 = vadd.f32 %v4865, %v5153
        %v5155 = vpop.f32.mrb[0].mxu0
        %v5156 = vpop.f32.mrb[0].mxu0
        %v5157 = vadd.f32 %v4868, %v5156
        %v5158 = vpop.f32.mrb[0].mxu0
        %5159 = vmatprep.mubr.bf16.mxu0 0
        %5160 = vmatmul.mubr.bf16.gmra.mrb[0].mxu0 %v4693
        %v5161 = vpop.f32.mrb[0].mxu0
        %v5162 = vadd.f32 %v4873, %v5161
        %v5163 = vpop.f32.mrb[0].mxu0
        %v5164 = vpop.f32.mrb[0].mxu0
        %v5165 = vadd.f32 %v4876, %v5164
        %v5166 = vpop.f32.mrb[0].mxu0
        %5167 = vmatprep.mubr.bf16.mxu0 0
        %5168 = vmatmul.mubr.bf16.gmra.mrb[0].mxu0 %v4696
        %v5169 = vpop.f32.mrb[0].mxu0
        %v5170 = vadd.f32 %v4881, %v5169
        %v5171 = vpop.f32.mrb[0].mxu0
        %v5172 = vpop.f32.mrb[0].mxu0
        %v5173 = vadd.f32 %v4884, %v5172
        %v5174 = vpop.f32.mrb[0].mxu0
        %5175 = vmatprep.mubr.bf16.mxu0 0
        %5176 = vmatmul.mubr.bf16.gmra.mrb[0].mxu0 %v4699
        %v5177 = vpop.f32.mrb[0].mxu0
        %v5178 = vadd.f32 %v4889, %v5177
        %v5179 = vpop.f32.mrb[0].mxu0
        %v5180 = vpop.f32.mrb[0].mxu0
        %v5181 = vadd.f32 %v4892, %v5180
        %v5182 = vpop.f32.mrb[0].mxu0
        %5183 = vmatprep.mubr.bf16.mxu0 0
        %5184 = vmatmul.mubr.bf16.gmra.mrb[0].mxu0 %v4702
        %v5185 = vpop.f32.mrb[0].mxu0
        %v5186 = vadd.f32 %v4897, %v5185
        %v5187 = vpop.f32.mrb[0].mxu0
        %v5188 = vpop.f32.mrb[0].mxu0
        %v5189 = vadd.f32 %v4900, %v5188
        %v5190 = vpop.f32.mrb[0].mxu0
        %5191 = vmatprep.mubr.bf16.mxu0 0
        %5192 = vmatmul.mubr.bf16.gmra.mrb[0].mxu0 %v4705
        %v5193 = vpop.f32.mrb[0].mxu0
        %v5194 = vadd.f32 %v4905, %v5193
        %v5195 = vpop.f32.mrb[0].mxu0
        %v5196 = vpop.f32.mrb[0].mxu0
        %v5197 = vadd.f32 %v4908, %v5196
        %v5198 = vpop.f32.mrb[0].mxu0
        %5199 = vmatprep.mubr.bf16.mxu0 0
        %5200 = vmatmul.mubr.bf16.gmra.mrb[0].mxu0 %v4708
        %v5201 = vpop.f32.mrb[0].mxu0
        %v5202 = vadd.f32 %v4913, %v5201
        %v5203 = vpop.f32.mrb[0].mxu0
        %v5204 = vpop.f32.mrb[0].mxu0
        %v5205 = vadd.f32 %v4916, %v5204
        %v5206 = vpop.f32.mrb[0].mxu0
        %5207 = vmatprep.mubr.bf16.mxu0 0
        %5208 = vmatmul.mubr.bf16.gmra.mrb[0].mxu0 %v4711
        %v5209 = vpop.f32.mrb[0].mxu0
        %v5210 = vadd.f32 %v4921, %v5209
        %v5211 = vpop.f32.mrb[0].mxu0
        %v5212 = vpop.f32.mrb[0].mxu0
        %v5213 = vadd.f32 %v4924, %v5212
        %v5214 = vpop.f32.mrb[0].mxu0
        %5215 = vmatprep.mubr.bf16.mxu0 0
        %5216 = vmatmul.mubr.bf16.gmra.mrb[0].mxu0 %v4714
        %v5217 = vpop.f32.mrb[0].mxu0
        %v5218 = vadd.f32 %v4929, %v5217
        %v5219 = vpop.f32.mrb[0].mxu0
        %v5220 = vpop.f32.mrb[0].mxu0
        %v5221 = vadd.f32 %v4932, %v5220
        %v5222 = vpop.f32.mrb[0].mxu0
        %5223 = vmatprep.mubr.bf16.mxu0 0
        %5224 = vmatmul.mubr.bf16.gmra.mrb[0].mxu0 %v4717
        %v5225 = vpop.f32.mrb[0].mxu0
        %v5226 = vadd.f32 %v4937, %v5225
        %v5227 = vpop.f32.mrb[0].mxu0
        %v5228 = vpop.f32.mrb[0].mxu0
        %v5229 = vadd.f32 %v4940, %v5228
        %v5230 = vpop.f32.mrb[0].mxu0
        %5231 = vmatprep.mubr.bf16.mxu0 0
        %5232 = vmatmul.mubr.bf16.gmra.mrb[0].mxu0 %v4720
        %v5233 = vpop.f32.mrb[0].mxu0
        %v5234 = vadd.f32 %v4945, %v5233
        %v5235 = vpop.f32.mrb[0].mxu0
        %v5236 = vpop.f32.mrb[0].mxu0
        %v5237 = vadd.f32 %v4948, %v5236
        %v5238 = vpop.f32.mrb[0].mxu0
        %5239 = vmatprep.mubr.bf16.mxu0 0
        %5240 = vmatmul.mubr.bf16.gmra.mrb[0].mxu0 %v4723
        %v5241 = vpop.f32.mrb[0].mxu0
        %v5242 = vadd.f32 %v4953, %v5241
        %v5243 = vpop.f32.mrb[0].mxu0
        %v5244 = vpop.f32.mrb[0].mxu0
        %v5245 = vadd.f32 %v4956, %v5244
        %v5246 = vpop.f32.mrb[0].mxu0
        %5247 = vmatprep.mubr.bf16.mxu0 0
        %5248 = vmatmul.mubr.bf16.gmra.mrb[0].mxu0 %v4726
        %v5249 = vpop.f32.mrb[0].mxu0
        %v5250 = vadd.f32 %v4961, %v5249
        %v5251 = vpop.f32.mrb[0].mxu0
        %v5252 = vpop.f32.mrb[0].mxu0
        %v5253 = vadd.f32 %v4964, %v5252
        %v5254 = vpop.f32.mrb[0].mxu0
        %5255 = vmatprep.mubr.bf16.mxu0 0
        %5256 = vmatmul.mubr.bf16.gmra.mrb[0].mxu0 %v4729
        %v5257 = vpop.f32.mrb[0].mxu0
        %v5258 = vadd.f32 %v4969, %v5257
        %v5259 = vpop.f32.mrb[0].mxu0
        %v5260 = vpop.f32.mrb[0].mxu0
        %v5261 = vadd.f32 %v4972, %v5260
        %v5262 = vpop.f32.mrb[0].mxu0
        %5263 = vmatprep.mubr.bf16.mxu0 0
        %5264 = vmatmul.mubr.bf16.gmra.mrb[0].mxu0 %v4732
        %v5265 = vpop.f32.mrb[0].mxu0
        %v5266 = vadd.f32 %v4977, %v5265
        %v5267 = vpop.f32.mrb[0].mxu0
        %v5268 = vpop.f32.mrb[0].mxu0
        %v5269 = vadd.f32 %v4980, %v5268
        %v5270 = vpop.f32.mrb[0].mxu0
        %5271 = vmatprep.mubr.bf16.mxu0 0
        %5272 = vmatmul.mubr.bf16.gmra.mrb[0].mxu0 %v4735
        %v5273 = vpop.f32.mrb[0].mxu0
        %v5274 = vadd.f32 %v4985, %v5273
        %v5275 = vpop.f32.mrb[0].mxu0
        %v5276 = vpop.f32.mrb[0].mxu0
        %v5277 = vadd.f32 %v4988, %v5276
        %v5278 = vpop.f32.mrb[0].mxu0
        %5279 = vmatprep.mubr.bf16.mxu0 0
        %5280 = vmatmul.mubr.bf16.gmra.mrb[0].mxu0 %v4738
        %v5281 = vpop.f32.mrb[0].mxu0
        %v5282 = vadd.f32 %v4993, %v5281
        %v5283 = vpop.f32.mrb[0].mxu0
        %v5284 = vpop.f32.mrb[0].mxu0
        %v5285 = vadd.f32 %v4996, %v5284
        %v5286 = vpop.f32.mrb[0].mxu0
        %5287 = vmatprep.mubr.bf16.mxu0 0
        %5288 = vmatmul.mubr.bf16.gmra.mrb[0].mxu0 %v4741
        %v5289 = vpop.f32.mrb[0].mxu0
        %v5290 = vadd.f32 %v5001, %v5289
        %v5291 = vpop.f32.mrb[0].mxu0
        %v5292 = vpop.f32.mrb[0].mxu0
        %v5293 = vadd.f32 %v5004, %v5292
        %v5294 = vpop.f32.mrb[0].mxu0
        %5295 = vmatprep.mubr.bf16.mxu0 0
        %5296 = vmatmul.mubr.bf16.gmra.mrb[0].mxu0 %v4744
        %v5297 = vpop.f32.mrb[0].mxu0
        %v5298 = vadd.f32 %v5009, %v5297
        %v5299 = vpop.f32.mrb[0].mxu0
        %v5300 = vpop.f32.mrb[0].mxu0
        %v5301 = vadd.f32 %v5012, %v5300
        %v5302 = vpop.f32.mrb[0].mxu0
        %5303 = vmatprep.mubr.bf16.mxu0 0
        %5304 = vmatmul.mubr.bf16.gmra.mrb[0].mxu0 %v4747
        %v5305 = vpop.f32.mrb[0].mxu0
        %v5306 = vadd.f32 %v5017, %v5305
        %v5307 = vpop.f32.mrb[0].mxu0
        %v5308 = vpop.f32.mrb[0].mxu0
        %v5309 = vadd.f32 %v5020, %v5308
        %v5310 = vpop.f32.mrb[0].mxu0
        %5311 = vmatprep.mubr.bf16.mxu0 0
        %5312 = vmatmul.mubr.bf16.gmra.mrb[0].mxu0 %v4750
        %v5313 = vpop.f32.mrb[0].mxu0
        %v5314 = vadd.f32 %v5025, %v5313
        %v5315 = vpop.f32.mrb[0].mxu0
        %v5316 = vpop.f32.mrb[0].mxu0
        %v5317 = vadd.f32 %v5028, %v5316
        %v5318 = vpop.f32.mrb[0].mxu0
        %5319 = vmatprep.mubr.bf16.mxu0 0
        %5320 = vmatmul.mubr.bf16.gmra.mrb[0].mxu0 %v4753
        %v5321 = vpop.f32.mrb[0].mxu0
        %v5322 = vadd.f32 %v5033, %v5321
        %v5323 = vpop.f32.mrb[0].mxu0
        %v5324 = vpop.f32.mrb[0].mxu0
        %v5325 = vadd.f32 %v5036, %v5324
        %v5326 = vpop.f32.mrb[0].mxu0
        %5327 = vmatprep.mubr.bf16.mxu0 0
        %5328 = vmatmul.mubr.bf16.gmra.mrb[0].mxu0 %v4756
        %v5329 = vpop.f32.mrb[0].mxu0
        %v5330 = vadd.f32 %v5041, %v5329
        %v5331 = vpop.f32.mrb[0].mxu0
        %v5332 = vpop.f32.mrb[0].mxu0
        %v5333 = vadd.f32 %v5044, %v5332
        %v5334 = vpop.f32.mrb[0].mxu0
        %5335 = vdwg.mxu0
        %v5336 = vmax.f32 %v5082, 0.0
        %v5337 = vmax.f32 %v5085, 0.0
        %v5338 = vmax.f32 %v5090, 0.0
        %v5339 = vmax.f32 %v5093, 0.0
        %v5340 = vmax.f32 %v5098, 0.0
        %v5341 = vmax.f32 %v5101, 0.0
        %v5342 = vmax.f32 %v5106, 0.0
        %v5343 = vmax.f32 %v5109, 0.0
        %v5344 = vmax.f32 %v5114, 0.0
        %v5345 = vmax.f32 %v5117, 0.0
        %v5346 = vmax.f32 %v5122, 0.0
        %v5347 = vmax.f32 %v5125, 0.0
        %v5348 = vmax.f32 %v5130, 0.0
        %v5349 = vmax.f32 %v5133, 0.0
        %v5350 = vmax.f32 %v5138, 0.0
        %v5351 = vmax.f32 %v5141, 0.0
        %v5352 = vmax.f32 %v5146, 0.0
        %v5353 = vmax.f32 %v5149, 0.0
        %v5354 = vmax.f32 %v5154, 0.0
        %v5355 = vmax.f32 %v5157, 0.0
        %v5356 = vmax.f32 %v5162, 0.0
        %v5357 = vmax.f32 %v5165, 0.0
        %v5358 = vmax.f32 %v5170, 0.0
        %v5359 = vmax.f32 %v5173, 0.0
        %v5360 = vmax.f32 %v5178, 0.0
        %v5361 = vmax.f32 %v5181, 0.0
        %v5362 = vmax.f32 %v5186, 0.0
        %v5363 = vmax.f32 %v5189, 0.0
        %v5364 = vmax.f32 %v5194, 0.0
        %v5365 = vmax.f32 %v5197, 0.0
        %v5366 = vmax.f32 %v5202, 0.0
        %v5367 = vmax.f32 %v5205, 0.0
        %v5368 = vmax.f32 %v5210, 0.0
        %v5369 = vmax.f32 %v5213, 0.0
        %v5370 = vmax.f32 %v5218, 0.0
        %v5371 = vmax.f32 %v5221, 0.0
        %v5372 = vmax.f32 %v5226, 0.0
        %v5373 = vmax.f32 %v5229, 0.0
        %v5374 = vmax.f32 %v5234, 0.0
        %v5375 = vmax.f32 %v5237, 0.0
        %v5376 = vmax.f32 %v5242, 0.0
        %v5377 = vmax.f32 %v5245, 0.0
        %v5378 = vmax.f32 %v5250, 0.0
        %v5379 = vmax.f32 %v5253, 0.0
        %v5380 = vmax.f32 %v5258, 0.0
        %v5381 = vmax.f32 %v5261, 0.0
        %v5382 = vmax.f32 %v5266, 0.0
        %v5383 = vmax.f32 %v5269, 0.0
        %v5384 = vmax.f32 %v5274, 0.0
        %v5385 = vmax.f32 %v5277, 0.0
        %v5386 = vmax.f32 %v5282, 0.0
        %v5387 = vmax.f32 %v5285, 0.0
        %v5388 = vmax.f32 %v5290, 0.0
        %v5389 = vmax.f32 %v5293, 0.0
        %v5390 = vmax.f32 %v5298, 0.0
        %v5391 = vmax.f32 %v5301, 0.0
        %v5392 = vmax.f32 %v5306, 0.0
        %v5393 = vmax.f32 %v5309, 0.0
        %v5394 = vmax.f32 %v5314, 0.0
        %v5395 = vmax.f32 %v5317, 0.0
        %v5396 = vmax.f32 %v5322, 0.0
        %v5397 = vmax.f32 %v5325, 0.0
        %v5398 = vmax.f32 %v5330, 0.0
        %v5399 = vmax.f32 %v5333, 0.0
        %5400 = vst [vmem:[%s453] sm:$0xff] %v5336
        %5401 = vst [vmem:[%s453 + $0x8] sm:$0xff] %v5337
        %5402 = vst [vmem:[%s453 + $0x10] sm:$0xff] %v5338
        %5403 = vst [vmem:[%s453 + $0x18] sm:$0xff] %v5339
        %5404 = vst [vmem:[%s453 + $0x20] sm:$0xff] %v5340
        %5405 = vst [vmem:[%s453 + $0x28] sm:$0xff] %v5341
        %5406 = vst [vmem:[%s453 + $0x30] sm:$0xff] %v5342
        %5407 = vst [vmem:[%s453 + $0x38] sm:$0xff] %v5343
        %5408 = vst [vmem:[%s453 + $0x40] sm:$0xff] %v5344
        %5409 = vst [vmem:[%s453 + $0x48] sm:$0xff] %v5345
        %5410 = vst [vmem:[%s453 + $0x50] sm:$0xff] %v5346
        %5411 = vst [vmem:[%s453 + $0x58] sm:$0xff] %v5347
        %5412 = vst [vmem:[%s453 + $0x60] sm:$0xff] %v5348
        %5413 = vst [vmem:[%s453 + $0x68] sm:$0xff] %v5349
        %5414 = vst [vmem:[%s453 + $0x70] sm:$0xff] %v5350
        %5415 = vst [vmem:[%s453 + $0x78] sm:$0xff] %v5351
        %5416 = vst [vmem:[%s453 + $0x80] sm:$0xff] %v5352
        %5417 = vst [vmem:[%s453 + $0x88] sm:$0xff] %v5353
        %5418 = vst [vmem:[%s453 + $0x90] sm:$0xff] %v5354
        %5419 = vst [vmem:[%s453 + $0x98] sm:$0xff] %v5355
        %5420 = vst [vmem:[%s453 + $0xa0] sm:$0xff] %v5356
        %5421 = vst [vmem:[%s453 + $0xa8] sm:$0xff] %v5357
        %5422 = vst [vmem:[%s453 + $0xb0] sm:$0xff] %v5358
        %5423 = vst [vmem:[%s453 + $0xb8] sm:$0xff] %v5359
        %5424 = vst [vmem:[%s453 + $0xc0] sm:$0xff] %v5360
        %5425 = vst [vmem:[%s453 + $0xc8] sm:$0xff] %v5361
        %5426 = vst [vmem:[%s453 + $0xd0] sm:$0xff] %v5362
        %5427 = vst [vmem:[%s453 + $0xd8] sm:$0xff] %v5363
        %5428 = vst [vmem:[%s453 + $0xe0] sm:$0xff] %v5364
        %5429 = vst [vmem:[%s453 + $0xe8] sm:$0xff] %v5365
        %5430 = vst [vmem:[%s453 + $0xf0] sm:$0xff] %v5366
        %5431 = vst [vmem:[%s453 + $0xf8] sm:$0xff] %v5367
        %5432 = vst [vmem:[%s453 + $0x100] sm:$0xff] %v5368
        %5433 = vst [vmem:[%s453 + $0x108] sm:$0xff] %v5369
        %5434 = vst [vmem:[%s453 + $0x110] sm:$0xff] %v5370
        %5435 = vst [vmem:[%s453 + $0x118] sm:$0xff] %v5371
        %5436 = vst [vmem:[%s453 + $0x120] sm:$0xff] %v5372
        %5437 = vst [vmem:[%s453 + $0x128] sm:$0xff] %v5373
        %5438 = vst [vmem:[%s453 + $0x130] sm:$0xff] %v5374
        %5439 = vst [vmem:[%s453 + $0x138] sm:$0xff] %v5375
        %5440 = vst [vmem:[%s453 + $0x140] sm:$0xff] %v5376
        %5441 = vst [vmem:[%s453 + $0x148] sm:$0xff] %v5377
        %5442 = vst [vmem:[%s453 + $0x150] sm:$0xff] %v5378
        %5443 = vst [vmem:[%s453 + $0x158] sm:$0xff] %v5379
        %5444 = vst [vmem:[%s453 + $0x160] sm:$0xff] %v5380
        %5445 = vst [vmem:[%s453 + $0x168] sm:$0xff] %v5381
        %5446 = vst [vmem:[%s453 + $0x170] sm:$0xff] %v5382
        %5447 = vst [vmem:[%s453 + $0x178] sm:$0xff] %v5383
        %5448 = vst [vmem:[%s453 + $0x180] sm:$0xff] %v5384
        %5449 = vst [vmem:[%s453 + $0x188] sm:$0xff] %v5385
        %5450 = vst [vmem:[%s453 + $0x190] sm:$0xff] %v5386
        %5451 = vst [vmem:[%s453 + $0x198] sm:$0xff] %v5387
        %5452 = vst [vmem:[%s453 + $0x1a0] sm:$0xff] %v5388
        %5453 = vst [vmem:[%s453 + $0x1a8] sm:$0xff] %v5389
        %5454 = vst [vmem:[%s453 + $0x1b0] sm:$0xff] %v5390
        %5455 = vst [vmem:[%s453 + $0x1b8] sm:$0xff] %v5391
        %5456 = vst [vmem:[%s453 + $0x1c0] sm:$0xff] %v5392
        %5457 = vst [vmem:[%s453 + $0x1c8] sm:$0xff] %v5393
        %5458 = vst [vmem:[%s453 + $0x1d0] sm:$0xff] %v5394
        %5459 = vst [vmem:[%s453 + $0x1d8] sm:$0xff] %v5395
        %5460 = vst [vmem:[%s453 + $0x1e0] sm:$0xff] %v5396
        %5461 = vst [vmem:[%s453 + $0x1e8] sm:$0xff] %v5397
        %5462 = vst [vmem:[%s453 + $0x1f0] sm:$0xff] %v5398
        %5463 = vst [vmem:[%s453 + $0x1f8] sm:$0xff] %v5399
        %s5464 = sand.u32 %s269, 1
        %s5465 = scalar_lea.sflag [#allocation4], %s5464
        %s5466 = sand.u32 %s269, 1
        %s5467 = smul.addr %s5466, 512
        %s5468 = scalar_lea.vmem [#allocation3], %s5467
        // Predicated region
        $region106: #{tpu_custom_call.1} parent=100 // pred_check
          %p5469 = pneg %p279
        $region107: #{tpu_custom_call.1} parent=100 // pred_check_branch
          %5471 = sbr.rel (%p5469) target = $region109
        $region108: #{tpu_custom_call.1} parent=100 // pred_region
          %s5473 = ssub.s32 8192, 8192
          %5474 = vsyncadd %s5465, %s5473
          %s5475 = smul.addr %s25, 128
          %s5476 = scalar_lea.hbm %s11, %s5475
          %s5477 = sshll.u32 %s5468, 4
          %s5478 = int_to_ptr.vmem [resolvable:$true] %s5477
          %5483 = dma.vmem_to_hbm [thread:$0]  %s5478, 8192, %s5476, %s5465, 128, 256, 8
        $region109: #{tpu_custom_call.1} parent=100 // pred_fallthru
          _
      $region101: #{tpu_custom_call.1} parent=5 // pred_fallthru
        _
      %p5484 = scmp.le.s32.totalorder 2, %s20
      // Predicated region
      $region110: #{tpu_custom_call.1} parent=5 // pred_check
        %p5485 = pneg %p5484
      $region111: #{tpu_custom_call.1} parent=5 // pred_check_branch
        %5487 = sbr.rel (%p5485) target = $region113
      $region112: #{tpu_custom_call.1} parent=5 // pred_region
        %s5488 = ssub.s32 %s20, 2
        // Predicated region
        $region114: #{tpu_custom_call.1} parent=112 // pred_check
          %p5489 = pneg %p285
        $region115: #{tpu_custom_call.1} parent=112 // pred_check_branch
          %5491 = sbr.rel (%p5489) target = $region117
        $region116: #{tpu_custom_call.1} parent=112 // pred_region
          %s5492 = sand.u32 %s270, 1
          %s5493 = scalar_lea.sflag [#allocation4], %s5492
          %s5494 = sand.u32 %s270, 1
          %s5495 = smul.addr %s5494, 512
          %s5496 = scalar_lea.vmem [#allocation3], %s5495
          %5497 = dma.done %s5493, 8192
        $region117: #{tpu_custom_call.1} parent=112 // pred_fallthru
          _
      $region113: #{tpu_custom_call.1} parent=5 // pred_fallthru
        _
    $region6: #{tpu_custom_call.1} parent=1 // loop_footer
      %s24 = sadd.s32 1, %s20
    $region7: #{tpu_custom_call.1} parent=1 // loop_footer_branch
      %19 = sbr.rel target = $region3
    $region8: #{tpu_custom_call.1} parent=1 // loop_exit
      _
    %5498 = vsyncpa [#allocation4], 1
    %s5499 = scalar_lea.sflag [#allocation4], 1
    %5500 = vsyncpa %s5499, 1

</llo_original>
